<compile_context>
chip_gen: v7x
topology: tpu7x:2x2x1
jax: 0.10.0
libtpu: 0.0.40
codegen_flags: <defaults>
</compile_context>

<pallas_src>
import jax
import jax.numpy as jnp
from jax import lax
from jax.experimental import pallas as pl
from jax.experimental.pallas import tpu as pltpu

# ----------------------------- configuration --------------------------------
HIDDEN = 32
FEATURE_CHANNELS = (4, 8)       # channels of multi_scale_features[::-1]
TOKEN_FEATURE_DIM = 16
ATOM_CHANNELS = 48              # ligand_encoder.atom_channels  (!= HIDDEN -> Linear)
GRAPH_CHANNELS = 24             # ligand_encoder.graph_channels (!= HIDDEN -> Linear)
N_IMAGES = 2                    # N
NBOX = 8                        # tokens (boxes) per image
NUM_ATOMS = 16                  # ligand atoms per image (PyG Batch)
NUM_LIGANDS = 4                 # graphs per image (Ngraph)
LEAKY_SLOPE = 0.01              # nn.LeakyReLU default


def _align8(x):
    return (x + 7) // 8 * 8


# weight-slab row offsets (all multiples of 8 -> aligned sublane slices in the kernel)
CM_COLS = sum(c * 27 for c in FEATURE_CHANNELS)        # 324
OFF_CONV = 0
OFF_POCK = _align8(CM_COLS)                            # 328
OFF_TOK = OFF_POCK + _align8(2 * HIDDEN)               # 392
OFF_CG = OFF_TOK + _align8(TOKEN_FEATURE_DIM)          # 408
OFF_ATOM = OFF_CG + _align8(2 * HIDDEN)                # 472
OFF_GRAPH = OFF_ATOM + _align8(ATOM_CHANNELS)          # 520
OFF_B1 = OFF_GRAPH + _align8(GRAPH_CHANNELS)           # 544
OFF_INT = OFF_B1 + _align8(2 * HIDDEN)                 # 608
OFF_HEAD = OFF_INT + _align8(HIDDEN)                   # 640
W_ROWS = OFF_HEAD + _align8(HIDDEN)                    # 672


def _silu(x):
    return x * jax.nn.sigmoid(x)


def _leaky_relu(x):
    return jnp.where(x > 0, x, LEAKY_SLOPE * x)


# ----------------------------- fused Pallas kernel ---------------------------
def _affinity_kernel(cm_ref, tok_ref, x_ref, z_ref, s_ref,
                     w_ref, b_ref, seg_ref, ea_ref, et_ref, st_ref, epg_ref,
                     o_ref):
    f32 = jnp.float32
    H = HIDDEN
    W = w_ref
    bb = b_ref[...]                                        # [16, 64] bias slab, one load

    # ---- pocket branch: block-diag fused conv-means + pocket_mlp -----------
    cm = cm_ref[...]                                                              # [N, 324]
    pocket_in = (jnp.dot(cm, W[OFF_CONV:OFF_CONV + CM_COLS, 0:2 * H],
                         preferred_element_type=f32) + bb[0:1, 0:2 * H])          # [N, 2H]
    pocket = (jnp.dot(_silu(pocket_in), W[OFF_POCK:OFF_POCK + 2 * H, 0:H],
                      preferred_element_type=f32) + bb[1:2, 0:H])                 # [N, H]

    # ---- token branch (per-image sum via constant one-hot matmul) ----------
    tok_h = (jnp.dot(_silu(tok_ref[...]), W[OFF_TOK:OFF_TOK + TOKEN_FEATURE_DIM, 0:H],
                     preferred_element_type=f32) + bb[2:3, 0:H])                  # [N*NB, H]
    tok_sum = jnp.dot(seg_ref[...], tok_h, preferred_element_type=f32)            # [N, H]

    # ---- fused concat_layer / concat_gate (tok_mean folded into tok_sum weight) ----
    cg = (jnp.dot(pocket, W[OFF_CG:OFF_CG + H, 0:2 * H], preferred_element_type=f32)
          + jnp.dot(tok_sum, W[OFF_CG + H:OFF_CG + 2 * H, 0:2 * H], preferred_element_type=f32)
          + bb[3:4, 0:2 * H])                                                     # [N, 2H]
    pocket_final = cg[:, 0:H] * jax.nn.sigmoid(cg[:, H:2 * H])                    # [N, H]

    # ---- ligand projections -------------------------------------------------
    atom = (jnp.dot(x_ref[...], W[OFF_ATOM:OFF_ATOM + ATOM_CHANNELS, 0:H],
                    preferred_element_type=f32) + bb[4:5, 0:H])                   # [N*A, H]
    graph = (jnp.dot(z_ref[...], W[OFF_GRAPH:OFF_GRAPH + GRAPH_CHANNELS, 0:H],
                     preferred_element_type=f32) + bb[5:6, 0:H])                  # [N*G, H]

    # ---- pair energy: explicit row-expansion via one-hot matmuls (no relayout) ----
    atom_x = jnp.dot(ea_ref[...], atom, preferred_element_type=f32)               # [N*A*NB, H]
    tok_x = jnp.dot(et_ref[...], tok_h, preferred_element_type=f32)               # [N*A*NB, H]
    inter = atom_x * tok_x
    m = _leaky_relu(jnp.dot(inter, W[OFF_INT:OFF_INT + H, 0:H],
                            preferred_element_type=f32) + bb[7:8, 0:H])           # [N*A*NB, H]
    vg = (jnp.dot(m, W[OFF_HEAD:OFF_HEAD + H, 0:2], preferred_element_type=f32)
          + bb[8:9, 0:2])                                                         # [N*A*NB, 2]
    e = vg[:, 0:1] * jax.nn.sigmoid(vg[:, 1:2])                                   # [N*A*NB, 1]
    per_atom = jnp.dot(st_ref[...], e, preferred_element_type=f32)                # [N*A, 1]
    pe = jnp.dot(s_ref[...], per_atom, preferred_element_type=f32)                # [N*G, 1]

    # ---- energy bias MLP -----------------------------------------------------
    pocket_rep = jnp.dot(epg_ref[...], pocket_final, preferred_element_type=f32)  # [N*G, H]
    h = _leaky_relu(jnp.dot(pocket_rep, W[OFF_B1:OFF_B1 + H, 0:H], preferred_element_type=f32)
                    + jnp.dot(graph, W[OFF_B1 + H:OFF_B1 + 2 * H, 0:H], preferred_element_type=f32)
                    + bb[6:7, 0:H])                                               # [N*G, H]
    bias = (jnp.dot(h, W[OFF_HEAD:OFF_HEAD + H, 2:3], preferred_element_type=f32)
            + bb[9:10, 0:1])                                                      # [N*G, 1]

    o_ref[...] = pe + bias                                                        # [N*G, 1]


# ----------------------------- one-time weight packing ------------------------
def prepare_params(params, *, nbox=NBOX, n=N_IMAGES, na=NUM_ATOMS, ng=NUM_LIGANDS):
    """Runs ONCE at init: packs weights into 2 slabs and builds the constant index
    matrices.  None of this re-executes per forward call."""
    f32 = jnp.float32
    H = HIDDEN
    c0 = FEATURE_CHANNELS[0] * 27

    w = jnp.zeros((W_ROWS, 2 * H), f32)
    w = w.at[OFF_CONV:OFF_CONV + c0, 0:H].set(params["conv_w"][0])
    w = w.at[OFF_CONV + c0:OFF_CONV + CM_COLS, H:2 * H].set(params["conv_w"][1])
    w = w.at[OFF_POCK:OFF_POCK + 2 * H, 0:H].set(params["pocket_w"])
    w = w.at[OFF_TOK:OFF_TOK + TOKEN_FEATURE_DIM, 0:H].set(params["token_w"])
    cat_w, gate_w = params["cat_w"], params["gate_w"]
    cg_p = jnp.concatenate([cat_w[0:H], gate_w[0:H]], axis=1)                         # pocket rows
    cg_t = jnp.concatenate([cat_w[H:2 * H] + cat_w[2 * H:3 * H] / nbox,               # tok_sum rows
                            gate_w[H:2 * H] + gate_w[2 * H:3 * H] / nbox], axis=1)    # (mean folded)
    w = w.at[OFF_CG:OFF_CG + H, 0:2 * H].set(cg_p)
    w = w.at[OFF_CG + H:OFF_CG + 2 * H, 0:2 * H].set(cg_t)
    w = w.at[OFF_ATOM:OFF_ATOM + ATOM_CHANNELS, 0:H].set(params["atom_w"])
    w = w.at[OFF_GRAPH:OFF_GRAPH + GRAPH_CHANNELS, 0:H].set(params["graph_w"])
    w = w.at[OFF_B1:OFF_B1 + 2 * H, 0:H].set(params["bias_w1"])
    w = w.at[OFF_INT:OFF_INT + H, 0:H].set(params["inter_w"])
    head = jnp.concatenate([params["pe_w"].T, params["pg_w"].T, params["bias_w2"].T], axis=1)  # [H,3]
    w = w.at[OFF_HEAD:OFF_HEAD + H, 0:3].set(head)

    b = jnp.zeros((16, 2 * H), f32)
    b = b.at[0, 0:2 * H].set(jnp.concatenate([params["conv_b"][0][0], params["conv_b"][1][0]]))
    b = b.at[1, 0:H].set(params["pocket_b"][0])
    b = b.at[2, 0:H].set(params["token_b"][0])
    b = b.at[3, 0:2 * H].set(jnp.concatenate([params["cat_b"][0], params["gate_b"][0]]))
    b = b.at[4, 0:H].set(params["atom_b"][0])
    b = b.at[5, 0:H].set(params["graph_b"][0])
    b = b.at[6, 0:H].set(params["bias_b1"][0])
    b = b.at[7, 0:H].set(params["inter_b"][0])
    b = b.at[8, 0:2].set(jnp.concatenate([params["pe_b"][0], params["pg_b"][0]]))
    b = b.at[9, 0:1].set(params["bias_b2"][0])

    # constant index matrices (one-hot expansions / segment sums), row order (image, atom, token)
    rows = n * na * nbox
    seg_tok = jnp.kron(jnp.eye(n, dtype=f32), jnp.ones((1, nbox), f32))         # [n, n*nb]
    e_atom = jax.nn.one_hot(jnp.arange(rows) // nbox, n * na, dtype=f32)        # [rows, n*na]
    img = jnp.arange(rows) // (na * nbox)
    jidx = jnp.arange(rows) % nbox
    e_tok = jax.nn.one_hot(img * nbox + jidx, n * nbox, dtype=f32)              # [rows, n*nb]
    scat_tok = e_atom.T                                                         # [n*na, rows]
    e_pg = jax.nn.one_hot(jnp.arange(n * ng) // ng, n, dtype=f32)               # [n*ng, n]

    return dict(wslab=w, bslab=b, seg_tok=seg_tok, e_atom=e_atom, e_tok=e_tok,
                scat_tok=scat_tok, e_pg=e_pg)


# ----------------------------- per-call forward --------------------------------
def _silu_window_mean(x):
    # SiLU(im2col(x)) == im2col(SiLU(x)); the spatial mean commutes with the linear conv,
    # so one stride-1 average pool with window (D-2,H-2,W-2) yields all 27 window means.
    s = _silu(x)
    n, c, d, h, w = x.shape
    do, ho, wo = d - 2, h - 2, w - 2
    pooled = lax.reduce_window(s, 0.0, lax.add,
                               window_dimensions=(1, 1, do, ho, wo),
                               window_strides=(1, 1, 1, 1, 1),
                               padding="VALID") * (1.0 / (do * ho * wo))   # [N, C, 3, 3, 3]
    return pooled.reshape(n, c * 27)


def affinity_head_forward(prep, multi_scale_features, token_features,
                          ligand_X, ligand_Z, batch_onehot):
    # TODO(synk): the Nbox == 0 (empty token list -> zeros(2*hidden)) branch is not handled.
    rev = multi_scale_features[::-1]
    cm = jnp.concatenate([_silu_window_mean(f) for f in rev], axis=-1)        # [N, 324]

    n, nbox, ft = token_features.shape
    _, na, ac = ligand_X.shape
    _, g, gc = ligand_Z.shape

    tok = token_features.reshape(n * nbox, ft)
    x_flat = ligand_X.reshape(n * na, ac)
    z_flat = ligand_Z.reshape(n * g, gc)

    # data-dependent block-diagonal scatter matrix [N*G, N*A] (PyG scatter_sum).
    # TODO(synk): padded atoms must carry all-zero one-hot rows or they leak into the sum.
    bo_t = jnp.transpose(batch_onehot, (0, 2, 1))                             # [N, G, A]
    eye = jnp.eye(n, dtype=batch_onehot.dtype)
    s_mat = (bo_t[:, :, None, :] * eye[:, None, :, None]).reshape(n * g, n * na)

    ops = (cm, tok, x_flat, z_flat, s_mat,
           prep["wslab"], prep["bslab"], prep["seg_tok"],
           prep["e_atom"], prep["e_tok"], prep["scat_tok"], prep["e_pg"])

    in_specs = [pl.BlockSpec(op.shape, lambda i: (0, 0)) for op in ops]
    out = pl.pallas_call(
        _affinity_kernel,
        out_shape=jax.ShapeDtypeStruct((n * g, 1), jnp.float32),
        grid=(1,),                                   # single batched step (images folded into rows)
        in_specs=in_specs,
        out_specs=pl.BlockSpec((n * g, 1), lambda i: (0, 0)),
        compiler_params=pltpu.CompilerParams(dimension_semantics=("arbitrary",)),
    )(*ops)
    return out.reshape(n, g)                                                   # [N, Ngraph]


# ----------------------------- params init -------------------------------------
def init_params(key):
    ks = jax.random.split(key, 26)

    def w(k, shape):
        return 0.01 * jax.random.normal(k, shape, jnp.float32)

    p = {}
    p["token_w"] = w(ks[0], (TOKEN_FEATURE_DIM, HIDDEN)); p["token_b"] = w(ks[1], (1, HIDDEN))
    p["conv_w"] = [w(ks[2 + i], (c * 27, HIDDEN)) for i, c in enumerate(FEATURE_CHANNELS)]
    p["conv_b"] = [w(ks[4 + i], (1, HIDDEN)) for i in range(len(FEATURE_CHANNELS))]
    p["pocket_w"] = w(ks[6], (HIDDEN * len(FEATURE_CHANNELS), HIDDEN)); p["pocket_b"] = w(ks[7], (1, HIDDEN))
    p["cat_w"] = w(ks[8], (3 * HIDDEN, HIDDEN)); p["cat_b"] = w(ks[9], (1, HIDDEN))
    p["gate_w"] = w(ks[10], (3 * HIDDEN, HIDDEN)); p["gate_b"] = w(ks[11], (1, HIDDEN))
    p["atom_w"] = w(ks[12], (ATOM_CHANNELS, HIDDEN)); p["atom_b"] = w(ks[13], (1, HIDDEN))
    p["graph_w"] = w(ks[14], (GRAPH_CHANNELS, HIDDEN)); p["graph_b"] = w(ks[15], (1, HIDDEN))
    p["bias_w1"] = w(ks[16], (2 * HIDDEN, HIDDEN)); p["bias_b1"] = w(ks[17], (1, HIDDEN))
    p["bias_w2"] = w(ks[18], (1, HIDDEN)); p["bias_b2"] = w(ks[19], (1, 1))
    p["inter_w"] = w(ks[20], (HIDDEN, HIDDEN)); p["inter_b"] = w(ks[21], (1, HIDDEN))
    p["pe_w"] = w(ks[22], (1, HIDDEN)); p["pe_b"] = w(ks[23], (1, 1))
    p["pg_w"] = w(ks[24], (1, HIDDEN)); p["pg_b"] = w(ks[25], (1, 1))
    return p


# ----------------------------- pure-JAX reference -------------------------------
def im2col3d(x):
    n, c, d, h, w = x.shape
    do, ho, wo = d - 2, h - 2, w - 2
    cols = []
    for kd in range(3):
        for kh in range(3):
            for kw in range(3):
                cols.append(x[:, :, kd:kd + do, kh:kh + ho, kw:kw + wo])
    p = jnp.stack(cols, axis=2)                     # [N, C, 27, Do, Ho, Wo]
    p = p.transpose(0, 3, 4, 5, 1, 2)               # [N, Do, Ho, Wo, C, 27]
    return p.reshape(n, do * ho * wo, c * 27)


def reference_forward(params, multi_scale_features, token_features,
                      ligand_X, ligand_Z, batch_onehot):
    with jax.default_matmul_precision("float32"):
        rev = multi_scale_features[::-1]
        means = []
        for i, feat in enumerate(rev):
            patches = im2col3d(feat)
            y = _silu(patches) @ params["conv_w"][i] + params["conv_b"][i]
            means.append(y.mean(axis=1))
        pocket = _silu(jnp.concatenate(means, -1)) @ params["pocket_w"] + params["pocket_b"]
        tok_h = _silu(token_features) @ params["token_w"] + params["token_b"]
        tok_agg = jnp.concatenate([tok_h.sum(1), tok_h.mean(1)], -1)
        pc = jnp.concatenate([pocket, tok_agg], -1)
        pocket_final = (pc @ params["cat_w"] + params["cat_b"]) * \
            jax.nn.sigmoid(pc @ params["gate_w"] + params["gate_b"])
        atom_feats = ligand_X @ params["atom_w"] + params["atom_b"]
        graph_feats = ligand_Z @ params["graph_w"] + params["graph_b"]
        inter = jnp.einsum('nik,njk->nijk', atom_feats, tok_h)
        m = _leaky_relu(inter @ params["inter_w"] + params["inter_b"])
        e = (jnp.sum(m * params["pe_w"], -1, keepdims=True) + params["pe_b"]) * \
            jax.nn.sigmoid(jnp.sum(m * params["pg_w"], -1, keepdims=True) + params["pg_b"])
        per_atom = e.sum((2, 3))
        pe_g = jnp.einsum('na,nag->ng', per_atom, batch_onehot)
        pocket_rep = jnp.broadcast_to(pocket_final[:, None, :], graph_feats.shape)
        bi = jnp.concatenate([pocket_rep, graph_feats], -1)
        h = _leaky_relu(bi @ params["bias_w1"] + params["bias_b1"])
        bias = jnp.sum(h * params["bias_w2"], -1) + params["bias_b2"][0, 0]
        return pe_g + bias


if __name__ == "__main__":
    key = jax.random.PRNGKey(0)
    kp, k1, k2, k3, k4, k5, k6 = jax.random.split(key, 7)
    params = init_params(kp)
    prep = prepare_params(params)          # one-time packing, hoisted out of the forward

    # multi_scale_features is top-down and reversed in forward, so reversed channels
    # must match FEATURE_CHANNELS = (4, 8).
    msf = [jax.random.normal(k1, (N_IMAGES, FEATURE_CHANNELS[1], 6, 6, 6), jnp.float32),
           jax.random.normal(k2, (N_IMAGES, FEATURE_CHANNELS[0], 8, 8, 8), jnp.float32)]
    token_features = jax.random.normal(k3, (N_IMAGES, NBOX, TOKEN_FEATURE_DIM), jnp.float32)
    # stubbed ligand_encoder outputs (external module): X atom feats, Z graph feats
    ligand_X = jax.random.normal(k4, (N_IMAGES, NUM_ATOMS, ATOM_CHANNELS), jnp.float32)
    ligand_Z = jax.random.normal(k5, (N_IMAGES, NUM_LIGANDS, GRAPH_CHANNELS), jnp.float32)
    # PyG Batch.batch vector -> dense one-hot [N, A, G] used for scatter_sum
    batch_idx = jax.random.randint(k6, (N_IMAGES, NUM_ATOMS), 0, NUM_LIGANDS)
    batch_onehot = jax.nn.one_hot(batch_idx, NUM_LIGANDS, dtype=jnp.float32)

    fwd = jax.jit(affinity_head_forward)
    out = jax.block_until_ready(fwd(prep, msf, token_features, ligand_X, ligand_Z, batch_onehot))
    ref = reference_forward(params, msf, token_features, ligand_X, ligand_Z, batch_onehot)
    assert out.shape == (N_IMAGES, NUM_LIGANDS)
    assert jnp.allclose(out, ref, atol=1e-3, rtol=1e-2), (out, ref)
    print("KERNEL_OK")
</pallas_src>

<mosaic_0001>
module attributes {stable_mosaic.version = 11 : i64} {
  func.func @_affinity_kernel(%arg0: i32, %arg1: memref<2x324xf32, #tpu.memory_space<vmem>>, %arg2: memref<16x16xf32, #tpu.memory_space<vmem>>, %arg3: memref<32x48xf32, #tpu.memory_space<vmem>>, %arg4: memref<8x24xf32, #tpu.memory_space<vmem>>, %arg5: memref<8x32xf32, #tpu.memory_space<vmem>>, %arg6: memref<672x64xf32, #tpu.memory_space<vmem>>, %arg7: memref<16x64xf32, #tpu.memory_space<vmem>>, %arg8: memref<2x16xf32, #tpu.memory_space<vmem>>, %arg9: memref<256x32xf32, #tpu.memory_space<vmem>>, %arg10: memref<256x16xf32, #tpu.memory_space<vmem>>, %arg11: memref<32x256xf32, #tpu.memory_space<vmem>>, %arg12: memref<8x2xf32, #tpu.memory_space<vmem>>, %arg13: memref<8x1xf32, #tpu.memory_space<vmem>>) attributes {dimension_semantics = [#tpu.dimension_semantics<arbitrary>], iteration_bounds = array<i64: 1>, scalar_prefetch = 0 : i64, scratch_operands = 0 : i64, tpu.core_type = #tpu.core_type<tc>, window_params = [{pipeline_mode = #tpu.pipeline_mode<synchronous>, transform_indices = @transform_0, window_bounds = array<i64: 2, 324>}, {pipeline_mode = #tpu.pipeline_mode<synchronous>, transform_indices = @transform_1, window_bounds = array<i64: 16, 16>}, {pipeline_mode = #tpu.pipeline_mode<synchronous>, transform_indices = @transform_2, window_bounds = array<i64: 32, 48>}, {pipeline_mode = #tpu.pipeline_mode<synchronous>, transform_indices = @transform_3, window_bounds = array<i64: 8, 24>}, {pipeline_mode = #tpu.pipeline_mode<synchronous>, transform_indices = @transform_4, window_bounds = array<i64: 8, 32>}, {pipeline_mode = #tpu.pipeline_mode<synchronous>, transform_indices = @transform_5, window_bounds = array<i64: 672, 64>}, {pipeline_mode = #tpu.pipeline_mode<synchronous>, transform_indices = @transform_6, window_bounds = array<i64: 16, 64>}, {pipeline_mode = #tpu.pipeline_mode<synchronous>, transform_indices = @transform_7, window_bounds = array<i64: 2, 16>}, {pipeline_mode = #tpu.pipeline_mode<synchronous>, transform_indices = @transform_8, window_bounds = array<i64: 256, 32>}, {pipeline_mode = #tpu.pipeline_mode<synchronous>, transform_indices = @transform_9, window_bounds = array<i64: 256, 16>}, {pipeline_mode = #tpu.pipeline_mode<synchronous>, transform_indices = @transform_10, window_bounds = array<i64: 32, 256>}, {pipeline_mode = #tpu.pipeline_mode<synchronous>, transform_indices = @transform_11, window_bounds = array<i64: 8, 2>}, {pipeline_mode = #tpu.pipeline_mode<synchronous>, transform_indices = @transform_12, window_bounds = array<i64: 8, 1>}]} {
    %c0 = arith.constant 0 : index
    %c0_0 = arith.constant 0 : index
    %0 = vector.load %arg7[%c0, %c0_0] : memref<16x64xf32, #tpu.memory_space<vmem>>, vector<16x64xf32>
    %c0_1 = arith.constant 0 : index
    %c0_2 = arith.constant 0 : index
    %1 = vector.load %arg1[%c0_1, %c0_2] : memref<2x324xf32, #tpu.memory_space<vmem>>, vector<2x324xf32>
    %c0_3 = arith.constant 0 : index
    %c0_4 = arith.constant 0 : index
    %2 = vector.load %arg6[%c0_3, %c0_4] : memref<672x64xf32, #tpu.memory_space<vmem>>, vector<324x64xf32>
    %cst = arith.constant dense<0.000000e+00> : vector<2x64xf32>
    %3 = tpu.matmul %1, %2, %cst {dimension_numbers = #tpu.dot_dimension_numbers<[1], [0], [0], [1], [0, 0, 1, 1], [], []>} : vector<2x324xf32>, vector<324x64xf32>, vector<2x64xf32> -> vector<2x64xf32>
    %4 = vector.extract_strided_slice %0 {offsets = [0, 0], sizes = [1, 64], strides = [1, 1]} : vector<16x64xf32> to vector<1x64xf32>
    %5 = vector.broadcast %4 : vector<1x64xf32> to vector<2x64xf32>
    %6 = arith.addf %3, %5 : vector<2x64xf32>
    %7 = arith.negf %6 : vector<2x64xf32>
    %8 = math.exp %7 : vector<2x64xf32>
    %cst_5 = arith.constant 1.000000e+00 : f32
    %9 = vector.broadcast %cst_5 : f32 to vector<2x64xf32>
    %10 = arith.addf %9, %8 : vector<2x64xf32>
    %11 = arith.divf %9, %10 : vector<2x64xf32>
    %12 = arith.mulf %6, %11 : vector<2x64xf32>
    %c328 = arith.constant 328 : index
    %c0_6 = arith.constant 0 : index
    %13 = vector.load %arg6[%c328, %c0_6] : memref<672x64xf32, #tpu.memory_space<vmem>>, vector<64x32xf32>
    %cst_7 = arith.constant dense<0.000000e+00> : vector<2x32xf32>
    %14 = tpu.matmul %12, %13, %cst_7 {dimension_numbers = #tpu.dot_dimension_numbers<[1], [0], [0], [1], [0, 0, 1, 1], [], []>} : vector<2x64xf32>, vector<64x32xf32>, vector<2x32xf32> -> vector<2x32xf32>
    %15 = vector.extract_strided_slice %0 {offsets = [1, 0], sizes = [1, 32], strides = [1, 1]} : vector<16x64xf32> to vector<1x32xf32>
    %16 = vector.broadcast %15 : vector<1x32xf32> to vector<2x32xf32>
    %17 = arith.addf %14, %16 : vector<2x32xf32>
    %c0_8 = arith.constant 0 : index
    %c0_9 = arith.constant 0 : index
    %18 = vector.load %arg2[%c0_8, %c0_9] : memref<16x16xf32, #tpu.memory_space<vmem>>, vector<16x16xf32>
    %19 = arith.negf %18 : vector<16x16xf32>
    %20 = math.exp %19 : vector<16x16xf32>
    %cst_10 = arith.constant 1.000000e+00 : f32
    %21 = vector.broadcast %cst_10 : f32 to vector<16x16xf32>
    %22 = arith.addf %21, %20 : vector<16x16xf32>
    %23 = arith.divf %21, %22 : vector<16x16xf32>
    %24 = arith.mulf %18, %23 : vector<16x16xf32>
    %c392 = arith.constant 392 : index
    %c0_11 = arith.constant 0 : index
    %25 = vector.load %arg6[%c392, %c0_11] : memref<672x64xf32, #tpu.memory_space<vmem>>, vector<16x32xf32>
    %cst_12 = arith.constant dense<0.000000e+00> : vector<16x32xf32>
    %26 = tpu.matmul %24, %25, %cst_12 {dimension_numbers = #tpu.dot_dimension_numbers<[1], [0], [0], [1], [0, 0, 1, 1], [], []>} : vector<16x16xf32>, vector<16x32xf32>, vector<16x32xf32> -> vector<16x32xf32>
    %27 = vector.extract_strided_slice %0 {offsets = [2, 0], sizes = [1, 32], strides = [1, 1]} : vector<16x64xf32> to vector<1x32xf32>
    %28 = vector.broadcast %27 : vector<1x32xf32> to vector<16x32xf32>
    %29 = arith.addf %26, %28 : vector<16x32xf32>
    %c0_13 = arith.constant 0 : index
    %c0_14 = arith.constant 0 : index
    %30 = vector.load %arg8[%c0_13, %c0_14] : memref<2x16xf32, #tpu.memory_space<vmem>>, vector<2x16xf32>
    %cst_15 = arith.constant dense<0.000000e+00> : vector<2x32xf32>
    %31 = tpu.matmul %30, %29, %cst_15 {dimension_numbers = #tpu.dot_dimension_numbers<[1], [0], [0], [1], [0, 0, 1, 1], [], []>} : vector<2x16xf32>, vector<16x32xf32>, vector<2x32xf32> -> vector<2x32xf32>
    %c408 = arith.constant 408 : index
    %c0_16 = arith.constant 0 : index
    %32 = vector.load %arg6[%c408, %c0_16] : memref<672x64xf32, #tpu.memory_space<vmem>>, vector<32x64xf32>
    %cst_17 = arith.constant dense<0.000000e+00> : vector<2x64xf32>
    %33 = tpu.matmul %17, %32, %cst_17 {dimension_numbers = #tpu.dot_dimension_numbers<[1], [0], [0], [1], [0, 0, 1, 1], [], []>} : vector<2x32xf32>, vector<32x64xf32>, vector<2x64xf32> -> vector<2x64xf32>
    %c440 = arith.constant 440 : index
    %c0_18 = arith.constant 0 : index
    %34 = vector.load %arg6[%c440, %c0_18] : memref<672x64xf32, #tpu.memory_space<vmem>>, vector<32x64xf32>
    %cst_19 = arith.constant dense<0.000000e+00> : vector<2x64xf32>
    %35 = tpu.matmul %31, %34, %cst_19 {dimension_numbers = #tpu.dot_dimension_numbers<[1], [0], [0], [1], [0, 0, 1, 1], [], []>} : vector<2x32xf32>, vector<32x64xf32>, vector<2x64xf32> -> vector<2x64xf32>
    %36 = arith.addf %33, %35 : vector<2x64xf32>
    %37 = vector.extract_strided_slice %0 {offsets = [3, 0], sizes = [1, 64], strides = [1, 1]} : vector<16x64xf32> to vector<1x64xf32>
    %38 = vector.broadcast %37 : vector<1x64xf32> to vector<2x64xf32>
    %39 = arith.addf %36, %38 : vector<2x64xf32>
    %40 = vector.extract_strided_slice %39 {offsets = [0, 0], sizes = [2, 32], strides = [1, 1]} : vector<2x64xf32> to vector<2x32xf32>
    %41 = vector.extract_strided_slice %39 {offsets = [0, 32], sizes = [2, 32], strides = [1, 1]} : vector<2x64xf32> to vector<2x32xf32>
    %42 = arith.negf %41 : vector<2x32xf32>
    %43 = math.exp %42 : vector<2x32xf32>
    %cst_20 = arith.constant 1.000000e+00 : f32
    %44 = vector.broadcast %cst_20 : f32 to vector<2x32xf32>
    %45 = arith.addf %44, %43 : vector<2x32xf32>
    %46 = arith.divf %44, %45 : vector<2x32xf32>
    %47 = arith.mulf %40, %46 : vector<2x32xf32>
    %c0_21 = arith.constant 0 : index
    %c0_22 = arith.constant 0 : index
    %48 = vector.load %arg3[%c0_21, %c0_22] : memref<32x48xf32, #tpu.memory_space<vmem>>, vector<32x48xf32>
    %c472 = arith.constant 472 : index
    %c0_23 = arith.constant 0 : index
    %49 = vector.load %arg6[%c472, %c0_23] : memref<672x64xf32, #tpu.memory_space<vmem>>, vector<48x32xf32>
    %cst_24 = arith.constant dense<0.000000e+00> : vector<32x32xf32>
    %50 = tpu.matmul %48, %49, %cst_24 {dimension_numbers = #tpu.dot_dimension_numbers<[1], [0], [0], [1], [0, 0, 1, 1], [], []>} : vector<32x48xf32>, vector<48x32xf32>, vector<32x32xf32> -> vector<32x32xf32>
    %51 = vector.extract_strided_slice %0 {offsets = [4, 0], sizes = [1, 32], strides = [1, 1]} : vector<16x64xf32> to vector<1x32xf32>
    %52 = vector.broadcast %51 : vector<1x32xf32> to vector<32x32xf32>
    %53 = arith.addf %50, %52 : vector<32x32xf32>
    %c0_25 = arith.constant 0 : index
    %c0_26 = arith.constant 0 : index
    %54 = vector.load %arg4[%c0_25, %c0_26] : memref<8x24xf32, #tpu.memory_space<vmem>>, vector<8x24xf32>
    %c520 = arith.constant 520 : index
    %c0_27 = arith.constant 0 : index
    %55 = vector.load %arg6[%c520, %c0_27] : memref<672x64xf32, #tpu.memory_space<vmem>>, vector<24x32xf32>
    %cst_28 = arith.constant dense<0.000000e+00> : vector<8x32xf32>
    %56 = tpu.matmul %54, %55, %cst_28 {dimension_numbers = #tpu.dot_dimension_numbers<[1], [0], [0], [1], [0, 0, 1, 1], [], []>} : vector<8x24xf32>, vector<24x32xf32>, vector<8x32xf32> -> vector<8x32xf32>
    %57 = vector.extract_strided_slice %0 {offsets = [5, 0], sizes = [1, 32], strides = [1, 1]} : vector<16x64xf32> to vector<1x32xf32>
    %58 = vector.broadcast %57 : vector<1x32xf32> to vector<8x32xf32>
    %59 = arith.addf %56, %58 : vector<8x32xf32>
    %c0_29 = arith.constant 0 : index
    %c0_30 = arith.constant 0 : index
    %60 = vector.load %arg9[%c0_29, %c0_30] : memref<256x32xf32, #tpu.memory_space<vmem>>, vector<256x32xf32>
    %cst_31 = arith.constant dense<0.000000e+00> : vector<256x32xf32>
    %61 = tpu.matmul %60, %53, %cst_31 {dimension_numbers = #tpu.dot_dimension_numbers<[1], [0], [0], [1], [0, 0, 1, 1], [], []>} : vector<256x32xf32>, vector<32x32xf32>, vector<256x32xf32> -> vector<256x32xf32>
    %c0_32 = arith.constant 0 : index
    %c0_33 = arith.constant 0 : index
    %62 = vector.load %arg10[%c0_32, %c0_33] : memref<256x16xf32, #tpu.memory_space<vmem>>, vector<256x16xf32>
    %cst_34 = arith.constant dense<0.000000e+00> : vector<256x32xf32>
    %63 = tpu.matmul %62, %29, %cst_34 {dimension_numbers = #tpu.dot_dimension_numbers<[1], [0], [0], [1], [0, 0, 1, 1], [], []>} : vector<256x16xf32>, vector<16x32xf32>, vector<256x32xf32> -> vector<256x32xf32>
    %64 = arith.mulf %61, %63 : vector<256x32xf32>
    %c608 = arith.constant 608 : index
    %c0_35 = arith.constant 0 : index
    %65 = vector.load %arg6[%c608, %c0_35] : memref<672x64xf32, #tpu.memory_space<vmem>>, vector<32x32xf32>
    %cst_36 = arith.constant dense<0.000000e+00> : vector<256x32xf32>
    %66 = tpu.matmul %64, %65, %cst_36 {dimension_numbers = #tpu.dot_dimension_numbers<[1], [0], [0], [1], [0, 0, 1, 1], [], []>} : vector<256x32xf32>, vector<32x32xf32>, vector<256x32xf32> -> vector<256x32xf32>
    %67 = vector.extract_strided_slice %0 {offsets = [7, 0], sizes = [1, 32], strides = [1, 1]} : vector<16x64xf32> to vector<1x32xf32>
    %68 = vector.broadcast %67 : vector<1x32xf32> to vector<256x32xf32>
    %69 = arith.addf %66, %68 : vector<256x32xf32>
    %cst_37 = arith.constant 0.000000e+00 : f32
    %70 = vector.broadcast %cst_37 : f32 to vector<256x32xf32>
    %71 = arith.cmpf ogt, %69, %70 : vector<256x32xf32>
    %cst_38 = arith.constant 0.00999999977 : f32
    %72 = vector.broadcast %cst_38 : f32 to vector<256x32xf32>
    %73 = arith.mulf %72, %69 : vector<256x32xf32>
    %74 = arith.select %71, %69, %73 : vector<256x32xi1>, vector<256x32xf32>
    %c640 = arith.constant 640 : index
    %c0_39 = arith.constant 0 : index
    %75 = vector.load %arg6[%c640, %c0_39] : memref<672x64xf32, #tpu.memory_space<vmem>>, vector<32x2xf32>
    %cst_40 = arith.constant dense<0.000000e+00> : vector<256x2xf32>
    %76 = tpu.matmul %74, %75, %cst_40 {dimension_numbers = #tpu.dot_dimension_numbers<[1], [0], [0], [1], [0, 0, 1, 1], [], []>} : vector<256x32xf32>, vector<32x2xf32>, vector<256x2xf32> -> vector<256x2xf32>
    %77 = vector.extract_strided_slice %0 {offsets = [8, 0], sizes = [1, 2], strides = [1, 1]} : vector<16x64xf32> to vector<1x2xf32>
    %78 = vector.broadcast %77 : vector<1x2xf32> to vector<256x2xf32>
    %79 = arith.addf %76, %78 : vector<256x2xf32>
    %80 = vector.extract_strided_slice %79 {offsets = [0, 0], sizes = [256, 1], strides = [1, 1]} : vector<256x2xf32> to vector<256x1xf32>
    %81 = vector.extract_strided_slice %79 {offsets = [0, 1], sizes = [256, 1], strides = [1, 1]} : vector<256x2xf32> to vector<256x1xf32>
    %82 = arith.negf %81 : vector<256x1xf32>
    %83 = math.exp %82 : vector<256x1xf32>
    %cst_41 = arith.constant 1.000000e+00 : f32
    %84 = vector.broadcast %cst_41 : f32 to vector<256x1xf32>
    %85 = arith.addf %84, %83 : vector<256x1xf32>
    %86 = arith.divf %84, %85 : vector<256x1xf32>
    %87 = arith.mulf %80, %86 : vector<256x1xf32>
    %c0_42 = arith.constant 0 : index
    %c0_43 = arith.constant 0 : index
    %88 = vector.load %arg11[%c0_42, %c0_43] : memref<32x256xf32, #tpu.memory_space<vmem>>, vector<32x256xf32>
    %cst_44 = arith.constant dense<0.000000e+00> : vector<32x1xf32>
    %89 = tpu.matmul %88, %87, %cst_44 {dimension_numbers = #tpu.dot_dimension_numbers<[1], [0], [0], [1], [0, 0, 1, 1], [], []>} : vector<32x256xf32>, vector<256x1xf32>, vector<32x1xf32> -> vector<32x1xf32>
    %c0_45 = arith.constant 0 : index
    %c0_46 = arith.constant 0 : index
    %90 = vector.load %arg5[%c0_45, %c0_46] : memref<8x32xf32, #tpu.memory_space<vmem>>, vector<8x32xf32>
    %cst_47 = arith.constant dense<0.000000e+00> : vector<8x1xf32>
    %91 = tpu.matmul %90, %89, %cst_47 {dimension_numbers = #tpu.dot_dimension_numbers<[1], [0], [0], [1], [0, 0, 1, 1], [], []>} : vector<8x32xf32>, vector<32x1xf32>, vector<8x1xf32> -> vector<8x1xf32>
    %c0_48 = arith.constant 0 : index
    %c0_49 = arith.constant 0 : index
    %92 = vector.load %arg12[%c0_48, %c0_49] : memref<8x2xf32, #tpu.memory_space<vmem>>, vector<8x2xf32>
    %cst_50 = arith.constant dense<0.000000e+00> : vector<8x32xf32>
    %93 = tpu.matmul %92, %47, %cst_50 {dimension_numbers = #tpu.dot_dimension_numbers<[1], [0], [0], [1], [0, 0, 1, 1], [], []>} : vector<8x2xf32>, vector<2x32xf32>, vector<8x32xf32> -> vector<8x32xf32>
    %c544 = arith.constant 544 : index
    %c0_51 = arith.constant 0 : index
    %94 = vector.load %arg6[%c544, %c0_51] : memref<672x64xf32, #tpu.memory_space<vmem>>, vector<32x32xf32>
    %cst_52 = arith.constant dense<0.000000e+00> : vector<8x32xf32>
    %95 = tpu.matmul %93, %94, %cst_52 {dimension_numbers = #tpu.dot_dimension_numbers<[1], [0], [0], [1], [0, 0, 1, 1], [], []>} : vector<8x32xf32>, vector<32x32xf32>, vector<8x32xf32> -> vector<8x32xf32>
    %c576 = arith.constant 576 : index
    %c0_53 = arith.constant 0 : index
    %96 = vector.load %arg6[%c576, %c0_53] : memref<672x64xf32, #tpu.memory_space<vmem>>, vector<32x32xf32>
    %cst_54 = arith.constant dense<0.000000e+00> : vector<8x32xf32>
    %97 = tpu.matmul %59, %96, %cst_54 {dimension_numbers = #tpu.dot_dimension_numbers<[1], [0], [0], [1], [0, 0, 1, 1], [], []>} : vector<8x32xf32>, vector<32x32xf32>, vector<8x32xf32> -> vector<8x32xf32>
    %98 = arith.addf %95, %97 : vector<8x32xf32>
    %99 = vector.extract_strided_slice %0 {offsets = [6, 0], sizes = [1, 32], strides = [1, 1]} : vector<16x64xf32> to vector<1x32xf32>
    %100 = vector.broadcast %99 : vector<1x32xf32> to vector<8x32xf32>
    %101 = arith.addf %98, %100 : vector<8x32xf32>
    %cst_55 = arith.constant 0.000000e+00 : f32
    %102 = vector.broadcast %cst_55 : f32 to vector<8x32xf32>
    %103 = arith.cmpf ogt, %101, %102 : vector<8x32xf32>
    %cst_56 = arith.constant 0.00999999977 : f32
    %104 = vector.broadcast %cst_56 : f32 to vector<8x32xf32>
    %105 = arith.mulf %104, %101 : vector<8x32xf32>
    %106 = arith.select %103, %101, %105 : vector<8x32xi1>, vector<8x32xf32>
    %c640_57 = arith.constant 640 : index
    %c2 = arith.constant 2 : index
    %107 = vector.load %arg6[%c640_57, %c2] : memref<672x64xf32, #tpu.memory_space<vmem>>, vector<32x1xf32>
    %cst_58 = arith.constant dense<0.000000e+00> : vector<8x1xf32>
    %108 = tpu.matmul %106, %107, %cst_58 {dimension_numbers = #tpu.dot_dimension_numbers<[1], [0], [0], [1], [0, 0, 1, 1], [], []>} : vector<8x32xf32>, vector<32x1xf32>, vector<8x1xf32> -> vector<8x1xf32>
    %109 = vector.extract_strided_slice %0 {offsets = [9, 0], sizes = [1, 1], strides = [1, 1]} : vector<16x64xf32> to vector<1x1xf32>
    %110 = vector.broadcast %109 : vector<1x1xf32> to vector<8x1xf32>
    %111 = arith.addf %108, %110 : vector<8x1xf32>
    %112 = arith.addf %91, %111 : vector<8x1xf32>
    %c0_59 = arith.constant 0 : index
    %c0_60 = arith.constant 0 : index
    %113 = vector.load %arg13[%c0_59, %c0_60] : memref<8x1xf32, #tpu.memory_space<vmem>>, vector<8x1xf32>
    tpu.vector_store %arg13[%c0_59, %c0_60], %112 {strides = array<i32>} : memref<8x1xf32, #tpu.memory_space<vmem>>, vector<8x1xf32>,
    return
  }
  func.func @transform_0(%arg0: i32) -> (i32, i32) {
    %c0_i32 = arith.constant 0 : i32
    %c0_i32_0 = arith.constant 0 : i32
    %c0_i32_1 = arith.constant 0 : i32
    return %c0_i32, %c0_i32_0 : i32, i32
  }
  func.func @transform_1(%arg0: i32) -> (i32, i32) {
    %c0_i32 = arith.constant 0 : i32
    %c0_i32_0 = arith.constant 0 : i32
    %c0_i32_1 = arith.constant 0 : i32
    return %c0_i32, %c0_i32_0 : i32, i32
  }
  func.func @transform_2(%arg0: i32) -> (i32, i32) {
    %c0_i32 = arith.constant 0 : i32
    %c0_i32_0 = arith.constant 0 : i32
    %c0_i32_1 = arith.constant 0 : i32
    return %c0_i32, %c0_i32_0 : i32, i32
  }
  func.func @transform_3(%arg0: i32) -> (i32, i32) {
    %c0_i32 = arith.constant 0 : i32
    %c0_i32_0 = arith.constant 0 : i32
    %c0_i32_1 = arith.constant 0 : i32
    return %c0_i32, %c0_i32_0 : i32, i32
  }
  func.func @transform_4(%arg0: i32) -> (i32, i32) {
    %c0_i32 = arith.constant 0 : i32
    %c0_i32_0 = arith.constant 0 : i32
    %c0_i32_1 = arith.constant 0 : i32
    return %c0_i32, %c0_i32_0 : i32, i32
  }
  func.func @transform_5(%arg0: i32) -> (i32, i32) {
    %c0_i32 = arith.constant 0 : i32
    %c0_i32_0 = arith.constant 0 : i32
    %c0_i32_1 = arith.constant 0 : i32
    return %c0_i32, %c0_i32_0 : i32, i32
  }
  func.func @transform_6(%arg0: i32) -> (i32, i32) {
    %c0_i32 = arith.constant 0 : i32
    %c0_i32_0 = arith.constant 0 : i32
    %c0_i32_1 = arith.constant 0 : i32
    return %c0_i32, %c0_i32_0 : i32, i32
  }
  func.func @transform_7(%arg0: i32) -> (i32, i32) {
    %c0_i32 = arith.constant 0 : i32
    %c0_i32_0 = arith.constant 0 : i32
    %c0_i32_1 = arith.constant 0 : i32
    return %c0_i32, %c0_i32_0 : i32, i32
  }
  func.func @transform_8(%arg0: i32) -> (i32, i32) {
    %c0_i32 = arith.constant 0 : i32
    %c0_i32_0 = arith.constant 0 : i32
    %c0_i32_1 = arith.constant 0 : i32
    return %c0_i32, %c0_i32_0 : i32, i32
  }
  func.func @transform_9(%arg0: i32) -> (i32, i32) {
    %c0_i32 = arith.constant 0 : i32
    %c0_i32_0 = arith.constant 0 : i32
    %c0_i32_1 = arith.constant 0 : i32
    return %c0_i32, %c0_i32_0 : i32, i32
  }
  func.func @transform_10(%arg0: i32) -> (i32, i32) {
    %c0_i32 = arith.constant 0 : i32
    %c0_i32_0 = arith.constant 0 : i32
    %c0_i32_1 = arith.constant 0 : i32
    return %c0_i32, %c0_i32_0 : i32, i32
  }
  func.func @transform_11(%arg0: i32) -> (i32, i32) {
    %c0_i32 = arith.constant 0 : i32
    %c0_i32_0 = arith.constant 0 : i32
    %c0_i32_1 = arith.constant 0 : i32
    return %c0_i32, %c0_i32_0 : i32, i32
  }
  func.func @transform_12(%arg0: i32) -> (i32, i32) {
    %c0_i32 = arith.constant 0 : i32
    %c0_i32_0 = arith.constant 0 : i32
    %c0_i32_1 = arith.constant 0 : i32
    return %c0_i32, %c0_i32_0 : i32, i32
  }
}

</mosaic_0001>

<llo_original>
// kernel: affinity_head_forward.1
$region0: #{affinity_head_forward.1}
  #allocation0 [shape = 'u32[]', space=smem, size = 0x4, offset = 0x4, fixed_abs, tag = 'smem constant byte address 0x4 - core index']
  #allocation1 [shape = 'u32[144,128]{1,0:T(1,128)}', space=vmem, size = 0x12000, scoped, tag = 'internal scratch']
  %s0 = inlined_call_operand.vmem [shape: f32[2,324], index: 0, kind: input, shape index: {}]
  %s1 = inlined_call_operand.vmem [shape: f32[16,16], index: 1, kind: input, shape index: {}]
  %s2 = inlined_call_operand.vmem [shape: f32[32,48], index: 2, kind: input, shape index: {}]
  %s3 = inlined_call_operand.vmem [shape: f32[8,24], index: 3, kind: input, shape index: {}]
  %s4 = inlined_call_operand.vmem [shape: f32[8,32], index: 4, kind: input, shape index: {}]
  %s5 = inlined_call_operand.vmem [shape: f32[672,64], index: 5, kind: input, shape index: {}]
  %s6 = inlined_call_operand.vmem [shape: f32[16,64], index: 6, kind: input, shape index: {}]
  %s7 = inlined_call_operand.vmem [shape: f32[2,16], index: 7, kind: input, shape index: {}]
  %s8 = inlined_call_operand.vmem [shape: f32[256,32], index: 8, kind: input, shape index: {}]
  %s9 = inlined_call_operand.vmem [shape: f32[256,16], index: 9, kind: input, shape index: {}]
  %s10 = inlined_call_operand.vmem [shape: f32[32,256], index: 10, kind: input, shape index: {}]
  %s11 = inlined_call_operand.vmem [shape: f32[8,2], index: 11, kind: input, shape index: {}]
  %s12 = inlined_call_operand.vmem [shape: f32[8,1], index: 12, kind: output, shape index: {}]
  %s13 = sld [smem:[#allocation0]]
  $region58: #{affinity_head_forward.1} parent=0
    _
  %s15 = ssub.s32 1, %s13
  %s16 = scalar_select 0, %s15, %s13
  // Predicated region
  $region2: #{affinity_head_forward.1} parent=0 // pred_check
    _
  $region3: #{affinity_head_forward.1} parent=0 // pred_check_branch
    %18 = sbr.rel (0) target = $region5
  $region4: #{affinity_head_forward.1} parent=0 // pred_region
    _
  $region5: #{affinity_head_forward.1} parent=0 // pred_fallthru
    _
  // Predicated region
  $region6: #{affinity_head_forward.1} parent=0 // pred_check
    _
  $region7: #{affinity_head_forward.1} parent=0 // pred_check_branch
    %20 = sbr.rel (0) target = $region9
  $region8: #{affinity_head_forward.1} parent=0 // pred_region
    _
  $region9: #{affinity_head_forward.1} parent=0 // pred_fallthru
    _
  // Predicated region
  $region10: #{affinity_head_forward.1} parent=0 // pred_check
    _
  $region11: #{affinity_head_forward.1} parent=0 // pred_check_branch
    %22 = sbr.rel (0) target = $region13
  $region12: #{affinity_head_forward.1} parent=0 // pred_region
    _
  $region13: #{affinity_head_forward.1} parent=0 // pred_fallthru
    _
  // Predicated region
  $region14: #{affinity_head_forward.1} parent=0 // pred_check
    _
  $region15: #{affinity_head_forward.1} parent=0 // pred_check_branch
    %24 = sbr.rel (0) target = $region17
  $region16: #{affinity_head_forward.1} parent=0 // pred_region
    _
  $region17: #{affinity_head_forward.1} parent=0 // pred_fallthru
    _
  // Predicated region
  $region18: #{affinity_head_forward.1} parent=0 // pred_check
    _
  $region19: #{affinity_head_forward.1} parent=0 // pred_check_branch
    %26 = sbr.rel (0) target = $region21
  $region20: #{affinity_head_forward.1} parent=0 // pred_region
    _
  $region21: #{affinity_head_forward.1} parent=0 // pred_fallthru
    _
  // Predicated region
  $region22: #{affinity_head_forward.1} parent=0 // pred_check
    _
  $region23: #{affinity_head_forward.1} parent=0 // pred_check_branch
    %28 = sbr.rel (0) target = $region25
  $region24: #{affinity_head_forward.1} parent=0 // pred_region
    _
  $region25: #{affinity_head_forward.1} parent=0 // pred_fallthru
    _
  // Predicated region
  $region26: #{affinity_head_forward.1} parent=0 // pred_check
    _
  $region27: #{affinity_head_forward.1} parent=0 // pred_check_branch
    %30 = sbr.rel (0) target = $region29
  $region28: #{affinity_head_forward.1} parent=0 // pred_region
    _
  $region29: #{affinity_head_forward.1} parent=0 // pred_fallthru
    _
  // Predicated region
  $region30: #{affinity_head_forward.1} parent=0 // pred_check
    _
  $region31: #{affinity_head_forward.1} parent=0 // pred_check_branch
    %32 = sbr.rel (0) target = $region33
  $region32: #{affinity_head_forward.1} parent=0 // pred_region
    _
  $region33: #{affinity_head_forward.1} parent=0 // pred_fallthru
    _
  // Predicated region
  $region34: #{affinity_head_forward.1} parent=0 // pred_check
    _
  $region35: #{affinity_head_forward.1} parent=0 // pred_check_branch
    %34 = sbr.rel (0) target = $region37
  $region36: #{affinity_head_forward.1} parent=0 // pred_region
    _
  $region37: #{affinity_head_forward.1} parent=0 // pred_fallthru
    _
  // Predicated region
  $region38: #{affinity_head_forward.1} parent=0 // pred_check
    _
  $region39: #{affinity_head_forward.1} parent=0 // pred_check_branch
    %36 = sbr.rel (0) target = $region41
  $region40: #{affinity_head_forward.1} parent=0 // pred_region
    _
  $region41: #{affinity_head_forward.1} parent=0 // pred_fallthru
    _
  // Predicated region
  $region42: #{affinity_head_forward.1} parent=0 // pred_check
    _
  $region43: #{affinity_head_forward.1} parent=0 // pred_check_branch
    %38 = sbr.rel (0) target = $region45
  $region44: #{affinity_head_forward.1} parent=0 // pred_region
    _
  $region45: #{affinity_head_forward.1} parent=0 // pred_fallthru
    _
  // Predicated region
  $region46: #{affinity_head_forward.1} parent=0 // pred_check
    _
  $region47: #{affinity_head_forward.1} parent=0 // pred_check_branch
    %40 = sbr.rel (0) target = $region49
  $region48: #{affinity_head_forward.1} parent=0 // pred_region
    _
  $region49: #{affinity_head_forward.1} parent=0 // pred_fallthru
    _
  %v41 = vld [vmem:[%s6] sm:$0xff]
  %v42 = vld [vmem:[%s6 + $0x8] sm:$0xff]
  %v43 = vld [vmem:[%s0] sm:$0x3f]
  %v44 = vld [vmem:[%s5] sm:$0xff]
  %v45 = vld [vmem:[%s5 + $0x8] sm:$0xff]
  %v46 = vld [vmem:[%s5 + $0x10] sm:$0xff]
  %v47 = vld [vmem:[%s5 + $0x18] sm:$0xff]
  %v48 = vld [vmem:[%s5 + $0x20] sm:$0xff]
  %v49 = vld [vmem:[%s5 + $0x28] sm:$0xff]
  %v50 = vld [vmem:[%s5 + $0x30] sm:$0xff]
  %v51 = vld [vmem:[%s5 + $0x38] sm:$0xff]
  %v52 = vld [vmem:[%s5 + $0x40] sm:$0xff]
  %v53 = vld [vmem:[%s5 + $0x48] sm:$0xff]
  %v54 = vld [vmem:[%s5 + $0x50] sm:$0xff]
  %v55 = vld [vmem:[%s5 + $0x58] sm:$0xff]
  %v56 = vld [vmem:[%s5 + $0x60] sm:$0xff]
  %v57 = vld [vmem:[%s5 + $0x68] sm:$0xff]
  %v58 = vld [vmem:[%s5 + $0x70] sm:$0xff]
  %v59 = vld [vmem:[%s5 + $0x78] sm:$0xff]
  %v60 = vld [vmem:[%s5 + $0x80] sm:$0xff]
  %v61 = vld [vmem:[%s5 + $0x88] sm:$0xff]
  %v62 = vld [vmem:[%s5 + $0x90] sm:$0xff]
  %v63 = vld [vmem:[%s5 + $0x98] sm:$0xff]
  %v64 = vld [vmem:[%s5 + $0xa0] sm:$0xff]
  %v65 = vld [vmem:[%s5 + $0xa8] sm:$0xff]
  %v66 = vld [vmem:[%s5 + $0xb0] sm:$0xff]
  %v67 = vld [vmem:[%s5 + $0xb8] sm:$0xff]
  %v68 = vld [vmem:[%s5 + $0xc0] sm:$0xff]
  %v69 = vld [vmem:[%s5 + $0xc8] sm:$0xff]
  %v70 = vld [vmem:[%s5 + $0xd0] sm:$0xff]
  %v71 = vld [vmem:[%s5 + $0xd8] sm:$0xff]
  %v72 = vld [vmem:[%s5 + $0xe0] sm:$0xff]
  %v73 = vld [vmem:[%s5 + $0xe8] sm:$0xff]
  %v74 = vld [vmem:[%s5 + $0xf0] sm:$0xff]
  %v75 = vld [vmem:[%s5 + $0xf8] sm:$0xff]
  %v76 = vld [vmem:[%s5 + $0x100] sm:$0xff]
  %v77 = vld [vmem:[%s5 + $0x108] sm:$0xff]
  %v78 = vld [vmem:[%s5 + $0x110] sm:$0xff]
  %v79 = vld [vmem:[%s5 + $0x118] sm:$0xff]
  %v80 = vld [vmem:[%s5 + $0x120] sm:$0xff]
  %v81 = vld [vmem:[%s5 + $0x128] sm:$0xff]
  %v82 = vld [vmem:[%s5 + $0x130] sm:$0xff]
  %v83 = vld [vmem:[%s5 + $0x138] sm:$0xff]
  %v84 = vld [vmem:[%s5 + $0x140] sm:$0xf]
  %v85 = vlaneseq
  %v86 = vshrl.u32 %v85, 7
  %v87 = vsub.s32 0, %v86
  %v88 = vrot.slane %v41, %v87
  %v90 = vcombine.high %v43, %v43
  %v92 = vunpack.c.l.s4 1983009808
  %v93 = vunpack.c.0.s8 %v92
  %v94 = vlaneseq
  %v95 = vshrl.u32 %v94, 7
  %v96 = vsub.s32 %v93, %v95
  %v97 = vrot.slane %v43, %v96
  %v99 = vunpack.c.l.s4 1983009808
  %v100 = vunpack.c.0.s8 %v99
  %v101 = vlaneseq
  %v102 = vshrl.u32 %v101, 7
  %v103 = vsub.s32 %v100, %v102
  %v104 = vrot.slane %v90, %v103
  %v105 = vcombine.high %v97, %v97
  %vm108 = vcmask 556032
  %v109 = vsel %vm108, %v104, 0
  %vm111 = vcmask 1043456
  %v113 = vsel %vm111, %v84, 0
  %115 = vmatprep.subr.mxu0 0.0
  %116 = vmatpush1.msra.mxu0 %v44
  %117 = vmatprep.subr.mxu0 0.0
  %118 = vmatpush1.msra.mxu0 %v45
  %119 = vmatprep.subr.mxu0 0.0
  %120 = vmatpush1.msra.mxu0 %v46
  %121 = vmatprep.subr.mxu0 0.0
  %122 = vmatpush1.msra.mxu0 %v47
  %123 = vmatprep.subr.mxu0 0.0
  %124 = vmatpush1.msra.mxu0 %v48
  %125 = vmatprep.subr.mxu0 0.0
  %126 = vmatpush1.msra.mxu0 %v49
  %127 = vmatprep.subr.mxu0 0.0
  %128 = vmatpush1.msra.mxu0 %v50
  %129 = vmatprep.subr.mxu0 0.0
  %130 = vmatpush1.msra.mxu0 %v51
  %131 = vmatprep.subr.mxu0 0.0
  %132 = vmatpush1.msra.mxu0 %v52
  %133 = vmatprep.subr.mxu0 0.0
  %134 = vmatpush1.msra.mxu0 %v53
  %135 = vmatprep.subr.mxu0 0.0
  %136 = vmatpush1.msra.mxu0 %v54
  %137 = vmatprep.subr.mxu0 0.0
  %138 = vmatpush1.msra.mxu0 %v55
  %139 = vmatprep.subr.mxu0 0.0
  %140 = vmatpush1.msra.mxu0 %v56
  %141 = vmatprep.subr.mxu0 0.0
  %142 = vmatpush1.msra.mxu0 %v57
  %143 = vmatprep.subr.mxu0 0.0
  %144 = vmatpush1.msra.mxu0 %v58
  %145 = vmatprep.subr.mxu0 0.0
  %146 = vmatpush1.msra.mxu0 %v59
  %147 = vmatprep.subr.mxu0 0.0
  %148 = vmatpush1.msra.mxu0 %v60
  %149 = vmatprep.subr.mxu0 0.0
  %150 = vmatpush1.msra.mxu0 %v61
  %151 = vmatprep.subr.mxu0 0.0
  %152 = vmatpush1.msra.mxu0 %v62
  %153 = vmatprep.subr.mxu0 0.0
  %154 = vmatpush1.msra.mxu0 %v63
  %155 = vmatprep.subr.mxu0 0.0
  %156 = vmatpush1.msra.mxu0 %v64
  %157 = vmatprep.subr.mxu0 0.0
  %158 = vmatpush1.msra.mxu0 %v65
  %159 = vmatprep.subr.mxu0 0.0
  %160 = vmatpush1.msra.mxu0 %v66
  %161 = vmatprep.subr.mxu0 0.0
  %162 = vmatpush1.msra.mxu0 %v67
  %163 = vmatprep.subr.mxu0 0.0
  %164 = vmatpush1.msra.mxu0 %v68
  %165 = vmatprep.subr.mxu0 0.0
  %166 = vmatpush1.msra.mxu0 %v69
  %167 = vmatprep.subr.mxu0 0.0
  %168 = vmatpush1.msra.mxu0 %v70
  %169 = vmatprep.subr.mxu0 0.0
  %170 = vmatpush1.msra.mxu0 %v71
  %171 = vmatprep.subr.mxu0 0.0
  %172 = vmatpush1.msra.mxu0 %v72
  %173 = vmatprep.subr.mxu0 0.0
  %174 = vmatpush1.msra.mxu0 %v73
  %175 = vmatprep.subr.mxu0 0.0
  %176 = vmatpush1.msra.mxu0 %v74
  %177 = vmatprep.subr.mxu0 0.0
  %178 = vmatpush1.msra.mxu0 %v75
  %179 = vmatprep.mubr.f32.mxu0 %v105
  %180 = vmatmul.mubr.f32.gmra.mrb[0].mxu0 %v97
  %v181 = vpop.f32.mrb[0].mxu0
  %v182 = vadd.f32 %v88, %v181
  %v183 = vpop.f32.mrb[0].mxu0
  %184 = vdwg.mxu0
  %185 = vmatprep.subr.mxu0 0.0
  %186 = vmatpush1.msra.mxu0 %v76
  %187 = vmatprep.subr.mxu0 0.0
  %188 = vmatpush1.msra.mxu0 %v77
  %189 = vmatprep.subr.mxu0 0.0
  %190 = vmatpush1.msra.mxu0 %v78
  %191 = vmatprep.subr.mxu0 0.0
  %192 = vmatpush1.msra.mxu0 %v79
  %193 = vmatprep.subr.mxu0 0.0
  %194 = vmatpush1.msra.mxu0 %v80
  %195 = vmatprep.subr.mxu0 0.0
  %196 = vmatpush1.msra.mxu0 %v81
  %197 = vmatprep.subr.mxu0 0.0
  %198 = vmatpush1.msra.mxu0 %v82
  %199 = vmatprep.subr.mxu0 0.0
  %200 = vmatpush1.msra.mxu0 %v83
  %201 = vmatprep.subr.mxu0 0.0
  %202 = vmatpush1.msra.mxu0 %v113
  %203 = vmatprep.subr.mxu0 0.0
  %204 = vmatpush1.msra.mxu0 0.0
  %205 = vmatprep.subr.mxu0 0.0
  %206 = vmatpush1.msra.mxu0 0.0
  %207 = vmatprep.subr.mxu0 0.0
  %208 = vmatpush1.msra.mxu0 0.0
  %209 = vmatprep.subr.mxu0 0.0
  %210 = vmatpush1.msra.mxu0 0.0
  %211 = vmatprep.subr.mxu0 0.0
  %212 = vmatpush1.msra.mxu0 0.0
  %213 = vmatprep.subr.mxu0 0.0
  %214 = vmatpush1.msra.mxu0 0.0
  %215 = vmatprep.subr.mxu0 0.0
  %216 = vmatpush1.msra.mxu0 0.0
  %217 = vmatprep.subr.mxu0 0.0
  %218 = vmatpush1.msra.mxu0 0.0
  %219 = vmatprep.subr.mxu0 0.0
  %220 = vmatpush1.msra.mxu0 0.0
  %221 = vmatprep.subr.mxu0 0.0
  %222 = vmatpush1.msra.mxu0 0.0
  %223 = vmatprep.subr.mxu0 0.0
  %224 = vmatpush1.msra.mxu0 0.0
  %225 = vmatprep.subr.mxu0 0.0
  %226 = vmatpush1.msra.mxu0 0.0
  %227 = vmatprep.subr.mxu0 0.0
  %228 = vmatpush1.msra.mxu0 0.0
  %229 = vmatprep.subr.mxu0 0.0
  %230 = vmatpush1.msra.mxu0 0.0
  %231 = vmatprep.subr.mxu0 0.0
  %232 = vmatpush1.msra.mxu0 0.0
  %233 = vmatprep.subr.mxu0 0.0
  %234 = vmatpush1.msra.mxu0 0.0
  %235 = vmatprep.subr.mxu0 0.0
  %236 = vmatpush1.msra.mxu0 0.0
  %237 = vmatprep.subr.mxu0 0.0
  %238 = vmatpush1.msra.mxu0 0.0
  %239 = vmatprep.subr.mxu0 0.0
  %240 = vmatpush1.msra.mxu0 0.0
  %241 = vmatprep.subr.mxu0 0.0
  %242 = vmatpush1.msra.mxu0 0.0
  %243 = vmatprep.subr.mxu0 0.0
  %244 = vmatpush1.msra.mxu0 0.0
  %245 = vmatprep.subr.mxu0 0.0
  %246 = vmatpush1.msra.mxu0 0.0
  %247 = vmatprep.subr.mxu0 0.0
  %248 = vmatpush1.msra.mxu0 0.0
  %249 = vmatprep.mubr.f32.mxu0 0.0
  %250 = vmatmul.mubr.f32.gmra.mrb[0].mxu0 %v109
  %v251 = vpop.f32.mrb[0].mxu0
  %v252 = vadd.f32 %v182, %v251
  %v253 = vpop.f32.mrb[0].mxu0
  %254 = vdwg.mxu0
  %v255 = vxor.u32 %v252, 2147483648
  %v256 = vmul.f32 %v255, 1.442695
  %v257 = vpow.pop %v256
  %v258 = vadd.f32 %v257, 1.0
  %v259 = vrcp.pop %v258
  %v260 = vmul.f32 1.0, %v259
  %v261 = vmul.f32 %v252, %v260
  %v262 = vld [vmem:[%s5 + $0x148] sm:$0xff]
  %v263 = vld [vmem:[%s5 + $0x150] sm:$0xff]
  %v264 = vld [vmem:[%s5 + $0x158] sm:$0xff]
  %v265 = vld [vmem:[%s5 + $0x160] sm:$0xff]
  %v266 = vld [vmem:[%s5 + $0x168] sm:$0xff]
  %v267 = vld [vmem:[%s5 + $0x170] sm:$0xff]
  %v268 = vld [vmem:[%s5 + $0x178] sm:$0xff]
  %v269 = vld [vmem:[%s5 + $0x180] sm:$0xff]
  %v270 = vlaneseq
  %v271 = vshrl.u32 %v270, 7
  %v272 = vsub.s32 1, %v271
  %v273 = vrot.slane %v41, %v272
  %vm274 = vcmask 523264
  %v276 = vsel %vm274, %v261, 0
  %278 = vmatprep.subr.mxu0 0.0
  %279 = vmatpush1.msra.mxu0 %v262
  %280 = vmatprep.subr.mxu0 0.0
  %281 = vmatpush1.msra.mxu0 %v263
  %282 = vmatprep.subr.mxu0 0.0
  %283 = vmatpush1.msra.mxu0 %v264
  %284 = vmatprep.subr.mxu0 0.0
  %285 = vmatpush1.msra.mxu0 %v265
  %286 = vmatprep.subr.mxu0 0.0
  %287 = vmatpush1.msra.mxu0 %v266
  %288 = vmatprep.subr.mxu0 0.0
  %289 = vmatpush1.msra.mxu0 %v267
  %290 = vmatprep.subr.mxu0 0.0
  %291 = vmatpush1.msra.mxu0 %v268
  %292 = vmatprep.subr.mxu0 0.0
  %293 = vmatpush1.msra.mxu0 %v269
  %294 = vmatprep.subr.mxu0 0.0
  %295 = vmatpush1.msra.mxu0 0.0
  %296 = vmatprep.subr.mxu0 0.0
  %297 = vmatpush1.msra.mxu0 0.0
  %298 = vmatprep.subr.mxu0 0.0
  %299 = vmatpush1.msra.mxu0 0.0
  %300 = vmatprep.subr.mxu0 0.0
  %301 = vmatpush1.msra.mxu0 0.0
  %302 = vmatprep.subr.mxu0 0.0
  %303 = vmatpush1.msra.mxu0 0.0
  %304 = vmatprep.subr.mxu0 0.0
  %305 = vmatpush1.msra.mxu0 0.0
  %306 = vmatprep.subr.mxu0 0.0
  %307 = vmatpush1.msra.mxu0 0.0
  %308 = vmatprep.subr.mxu0 0.0
  %309 = vmatpush1.msra.mxu0 0.0
  %310 = vmatprep.subr.mxu0 0.0
  %311 = vmatpush1.msra.mxu0 0.0
  %312 = vmatprep.subr.mxu0 0.0
  %313 = vmatpush1.msra.mxu0 0.0
  %314 = vmatprep.subr.mxu0 0.0
  %315 = vmatpush1.msra.mxu0 0.0
  %316 = vmatprep.subr.mxu0 0.0
  %317 = vmatpush1.msra.mxu0 0.0
  %318 = vmatprep.subr.mxu0 0.0
  %319 = vmatpush1.msra.mxu0 0.0
  %320 = vmatprep.subr.mxu0 0.0
  %321 = vmatpush1.msra.mxu0 0.0
  %322 = vmatprep.subr.mxu0 0.0
  %323 = vmatpush1.msra.mxu0 0.0
  %324 = vmatprep.subr.mxu0 0.0
  %325 = vmatpush1.msra.mxu0 0.0
  %326 = vmatprep.subr.mxu0 0.0
  %327 = vmatpush1.msra.mxu0 0.0
  %328 = vmatprep.subr.mxu0 0.0
  %329 = vmatpush1.msra.mxu0 0.0
  %330 = vmatprep.subr.mxu0 0.0
  %331 = vmatpush1.msra.mxu0 0.0
  %332 = vmatprep.subr.mxu0 0.0
  %333 = vmatpush1.msra.mxu0 0.0
  %334 = vmatprep.subr.mxu0 0.0
  %335 = vmatpush1.msra.mxu0 0.0
  %336 = vmatprep.subr.mxu0 0.0
  %337 = vmatpush1.msra.mxu0 0.0
  %338 = vmatprep.subr.mxu0 0.0
  %339 = vmatpush1.msra.mxu0 0.0
  %340 = vmatprep.subr.mxu0 0.0
  %341 = vmatpush1.msra.mxu0 0.0
  %342 = vmatprep.mubr.f32.mxu0 0.0
  %343 = vmatmul.mubr.f32.gmra.mrb[0].mxu0 %v276
  %v344 = vpop.f32.mrb[0].mxu0
  %v345 = vadd.f32 %v273, %v344
  %v346 = vpop.f32.mrb[0].mxu0
  %347 = vdwg.mxu0
  %v348 = vld [vmem:[%s1] sm:$0xff]
  %v349 = vld [vmem:[%s1 + $0x8] sm:$0xff]
  %v350 = vxor.u32 %v348, 2147483648
  %v351 = vxor.u32 %v349, 2147483648
  %v352 = vmul.f32 %v350, 1.442695
  %v353 = vpow.pop %v352
  %v354 = vmul.f32 %v351, 1.442695
  %v355 = vpow.pop %v354
  %v356 = vadd.f32 %v353, 1.0
  %v357 = vadd.f32 %v355, 1.0
  %v358 = vrcp.pop %v356
  %v359 = vmul.f32 1.0, %v358
  %v360 = vrcp.pop %v357
  %v361 = vmul.f32 1.0, %v360
  %v362 = vmul.f32 %v348, %v359
  %v363 = vmul.f32 %v349, %v361
  %v364 = vld [vmem:[%s5 + $0x188] sm:$0xff]
  %v365 = vld [vmem:[%s5 + $0x190] sm:$0xff]
  %v366 = vlaneseq
  %v367 = vshrl.u32 %v366, 7
  %v368 = vsub.s32 2, %v367
  %v369 = vrot.slane %v41, %v368
  %vm370 = vcmask 130048
  %v372 = vsel %vm370, %v362, 0
  %v375 = vsel %vm370, %v363, 0
  %377 = vmatprep.subr.mxu0 0.0
  %378 = vmatpush1.msra.mxu0 %v364
  %379 = vmatprep.subr.mxu0 0.0
  %380 = vmatpush1.msra.mxu0 %v365
  %381 = vmatprep.subr.mxu0 0.0
  %382 = vmatpush1.msra.mxu0 0.0
  %383 = vmatprep.subr.mxu0 0.0
  %384 = vmatpush1.msra.mxu0 0.0
  %385 = vmatprep.subr.mxu0 0.0
  %386 = vmatpush1.msra.mxu0 0.0
  %387 = vmatprep.subr.mxu0 0.0
  %388 = vmatpush1.msra.mxu0 0.0
  %389 = vmatprep.subr.mxu0 0.0
  %390 = vmatpush1.msra.mxu0 0.0
  %391 = vmatprep.subr.mxu0 0.0
  %392 = vmatpush1.msra.mxu0 0.0
  %393 = vmatprep.subr.mxu0 0.0
  %394 = vmatpush1.msra.mxu0 0.0
  %395 = vmatprep.subr.mxu0 0.0
  %396 = vmatpush1.msra.mxu0 0.0
  %397 = vmatprep.subr.mxu0 0.0
  %398 = vmatpush1.msra.mxu0 0.0
  %399 = vmatprep.subr.mxu0 0.0
  %400 = vmatpush1.msra.mxu0 0.0
  %401 = vmatprep.subr.mxu0 0.0
  %402 = vmatpush1.msra.mxu0 0.0
  %403 = vmatprep.subr.mxu0 0.0
  %404 = vmatpush1.msra.mxu0 0.0
  %405 = vmatprep.subr.mxu0 0.0
  %406 = vmatpush1.msra.mxu0 0.0
  %407 = vmatprep.subr.mxu0 0.0
  %408 = vmatpush1.msra.mxu0 0.0
  %409 = vmatprep.subr.mxu0 0.0
  %410 = vmatpush1.msra.mxu0 0.0
  %411 = vmatprep.subr.mxu0 0.0
  %412 = vmatpush1.msra.mxu0 0.0
  %413 = vmatprep.subr.mxu0 0.0
  %414 = vmatpush1.msra.mxu0 0.0
  %415 = vmatprep.subr.mxu0 0.0
  %416 = vmatpush1.msra.mxu0 0.0
  %417 = vmatprep.subr.mxu0 0.0
  %418 = vmatpush1.msra.mxu0 0.0
  %419 = vmatprep.subr.mxu0 0.0
  %420 = vmatpush1.msra.mxu0 0.0
  %421 = vmatprep.subr.mxu0 0.0
  %422 = vmatpush1.msra.mxu0 0.0
  %423 = vmatprep.subr.mxu0 0.0
  %424 = vmatpush1.msra.mxu0 0.0
  %425 = vmatprep.subr.mxu0 0.0
  %426 = vmatpush1.msra.mxu0 0.0
  %427 = vmatprep.subr.mxu0 0.0
  %428 = vmatpush1.msra.mxu0 0.0
  %429 = vmatprep.subr.mxu0 0.0
  %430 = vmatpush1.msra.mxu0 0.0
  %431 = vmatprep.subr.mxu0 0.0
  %432 = vmatpush1.msra.mxu0 0.0
  %433 = vmatprep.subr.mxu0 0.0
  %434 = vmatpush1.msra.mxu0 0.0
  %435 = vmatprep.subr.mxu0 0.0
  %436 = vmatpush1.msra.mxu0 0.0
  %437 = vmatprep.subr.mxu0 0.0
  %438 = vmatpush1.msra.mxu0 0.0
  %439 = vmatprep.subr.mxu0 0.0
  %440 = vmatpush1.msra.mxu0 0.0
  %441 = vmatprep.mubr.f32.mxu0 0.0
  %442 = vmatmul.mubr.f32.gmra.mrb[0].mxu0 %v372
  %v443 = vpop.f32.mrb[0].mxu0
  %v444 = vadd.f32 %v369, %v443
  %v445 = vpop.f32.mrb[0].mxu0
  %446 = vmatprep.mubr.f32.mxu0 0.0
  %447 = vmatmul.mubr.f32.gmra.mrb[0].mxu0 %v375
  %v448 = vpop.f32.mrb[0].mxu0
  %v449 = vadd.f32 %v369, %v448
  %v450 = vpop.f32.mrb[0].mxu0
  %451 = vdwg.mxu0
  %v452 = vld [vmem:[%s7] sm:$0x3]
  %v454 = vsel %vm370, %v452, 0
  %456 = vmatprep.subr.mxu0 0.0
  %457 = vmatpush1.msra.mxu0 %v444
  %458 = vmatprep.subr.mxu0 0.0
  %459 = vmatpush1.msra.mxu0 %v449
  %460 = vmatprep.subr.mxu0 0.0
  %461 = vmatpush1.msra.mxu0 0.0
  %462 = vmatprep.subr.mxu0 0.0
  %463 = vmatpush1.msra.mxu0 0.0
  %464 = vmatprep.subr.mxu0 0.0
  %465 = vmatpush1.msra.mxu0 0.0
  %466 = vmatprep.subr.mxu0 0.0
  %467 = vmatpush1.msra.mxu0 0.0
  %468 = vmatprep.subr.mxu0 0.0
  %469 = vmatpush1.msra.mxu0 0.0
  %470 = vmatprep.subr.mxu0 0.0
  %471 = vmatpush1.msra.mxu0 0.0
  %472 = vmatprep.subr.mxu0 0.0
  %473 = vmatpush1.msra.mxu0 0.0
  %474 = vmatprep.subr.mxu0 0.0
  %475 = vmatpush1.msra.mxu0 0.0
  %476 = vmatprep.subr.mxu0 0.0
  %477 = vmatpush1.msra.mxu0 0.0
  %478 = vmatprep.subr.mxu0 0.0
  %479 = vmatpush1.msra.mxu0 0.0
  %480 = vmatprep.subr.mxu0 0.0
  %481 = vmatpush1.msra.mxu0 0.0
  %482 = vmatprep.subr.mxu0 0.0
  %483 = vmatpush1.msra.mxu0 0.0
  %484 = vmatprep.subr.mxu0 0.0
  %485 = vmatpush1.msra.mxu0 0.0
  %486 = vmatprep.subr.mxu0 0.0
  %487 = vmatpush1.msra.mxu0 0.0
  %488 = vmatprep.subr.mxu0 0.0
  %489 = vmatpush1.msra.mxu0 0.0
  %490 = vmatprep.subr.mxu0 0.0
  %491 = vmatpush1.msra.mxu0 0.0
  %492 = vmatprep.subr.mxu0 0.0
  %493 = vmatpush1.msra.mxu0 0.0
  %494 = vmatprep.subr.mxu0 0.0
  %495 = vmatpush1.msra.mxu0 0.0
  %496 = vmatprep.subr.mxu0 0.0
  %497 = vmatpush1.msra.mxu0 0.0
  %498 = vmatprep.subr.mxu0 0.0
  %499 = vmatpush1.msra.mxu0 0.0
  %500 = vmatprep.subr.mxu0 0.0
  %501 = vmatpush1.msra.mxu0 0.0
  %502 = vmatprep.subr.mxu0 0.0
  %503 = vmatpush1.msra.mxu0 0.0
  %504 = vmatprep.subr.mxu0 0.0
  %505 = vmatpush1.msra.mxu0 0.0
  %506 = vmatprep.subr.mxu0 0.0
  %507 = vmatpush1.msra.mxu0 0.0
  %508 = vmatprep.subr.mxu0 0.0
  %509 = vmatpush1.msra.mxu0 0.0
  %510 = vmatprep.subr.mxu0 0.0
  %511 = vmatpush1.msra.mxu0 0.0
  %512 = vmatprep.subr.mxu0 0.0
  %513 = vmatpush1.msra.mxu0 0.0
  %514 = vmatprep.subr.mxu0 0.0
  %515 = vmatpush1.msra.mxu0 0.0
  %516 = vmatprep.subr.mxu0 0.0
  %517 = vmatpush1.msra.mxu0 0.0
  %518 = vmatprep.subr.mxu0 0.0
  %519 = vmatpush1.msra.mxu0 0.0
  %520 = vmatprep.mubr.f32.mxu0 0.0
  %521 = vmatmul.mubr.f32.gmra.mrb[0].mxu0 %v454
  %v522 = vpop.f32.mrb[0].mxu0
  %v523 = vadd.f32 0.0, %v522
  %v524 = vpop.f32.mrb[0].mxu0
  %525 = vdwg.mxu0
  %v526 = vld [vmem:[%s5 + $0x198] sm:$0xff]
  %v527 = vld [vmem:[%s5 + $0x1a0] sm:$0xff]
  %v528 = vld [vmem:[%s5 + $0x1a8] sm:$0xff]
  %v529 = vld [vmem:[%s5 + $0x1b0] sm:$0xff]
  %v530 = vld [vmem:[%s5 + $0x1b8] sm:$0xff]
  %v531 = vld [vmem:[%s5 + $0x1c0] sm:$0xff]
  %v532 = vld [vmem:[%s5 + $0x1c8] sm:$0xff]
  %v533 = vld [vmem:[%s5 + $0x1d0] sm:$0xff]
  %vm534 = vcmask 261120
  %v536 = vsel %vm534, %v523, 0
  %538 = vmatprep.subr.mxu0 0.0
  %539 = vmatpush1.msra.mxu0 %v530
  %540 = vmatprep.subr.mxu0 0.0
  %541 = vmatpush1.msra.mxu0 %v531
  %542 = vmatprep.subr.mxu0 0.0
  %543 = vmatpush1.msra.mxu0 %v532
  %544 = vmatprep.subr.mxu0 0.0
  %545 = vmatpush1.msra.mxu0 %v533
  %546 = vmatprep.subr.mxu0 0.0
  %547 = vmatpush1.msra.mxu0 0.0
  %548 = vmatprep.subr.mxu0 0.0
  %549 = vmatpush1.msra.mxu0 0.0
  %550 = vmatprep.subr.mxu0 0.0
  %551 = vmatpush1.msra.mxu0 0.0
  %552 = vmatprep.subr.mxu0 0.0
  %553 = vmatpush1.msra.mxu0 0.0
  %554 = vmatprep.subr.mxu0 0.0
  %555 = vmatpush1.msra.mxu0 0.0
  %556 = vmatprep.subr.mxu0 0.0
  %557 = vmatpush1.msra.mxu0 0.0
  %558 = vmatprep.subr.mxu0 0.0
  %559 = vmatpush1.msra.mxu0 0.0
  %560 = vmatprep.subr.mxu0 0.0
  %561 = vmatpush1.msra.mxu0 0.0
  %562 = vmatprep.subr.mxu0 0.0
  %563 = vmatpush1.msra.mxu0 0.0
  %564 = vmatprep.subr.mxu0 0.0
  %565 = vmatpush1.msra.mxu0 0.0
  %566 = vmatprep.subr.mxu0 0.0
  %567 = vmatpush1.msra.mxu0 0.0
  %568 = vmatprep.subr.mxu0 0.0
  %569 = vmatpush1.msra.mxu0 0.0
  %570 = vmatprep.subr.mxu0 0.0
  %571 = vmatpush1.msra.mxu0 0.0
  %572 = vmatprep.subr.mxu0 0.0
  %573 = vmatpush1.msra.mxu0 0.0
  %574 = vmatprep.subr.mxu0 0.0
  %575 = vmatpush1.msra.mxu0 0.0
  %576 = vmatprep.subr.mxu0 0.0
  %577 = vmatpush1.msra.mxu0 0.0
  %578 = vmatprep.subr.mxu0 0.0
  %579 = vmatpush1.msra.mxu0 0.0
  %580 = vmatprep.subr.mxu0 0.0
  %581 = vmatpush1.msra.mxu0 0.0
  %582 = vmatprep.subr.mxu0 0.0
  %583 = vmatpush1.msra.mxu0 0.0
  %584 = vmatprep.subr.mxu0 0.0
  %585 = vmatpush1.msra.mxu0 0.0
  %586 = vmatprep.subr.mxu0 0.0
  %587 = vmatpush1.msra.mxu0 0.0
  %588 = vmatprep.subr.mxu0 0.0
  %589 = vmatpush1.msra.mxu0 0.0
  %590 = vmatprep.subr.mxu0 0.0
  %591 = vmatpush1.msra.mxu0 0.0
  %592 = vmatprep.subr.mxu0 0.0
  %593 = vmatpush1.msra.mxu0 0.0
  %594 = vmatprep.subr.mxu0 0.0
  %595 = vmatpush1.msra.mxu0 0.0
  %596 = vmatprep.subr.mxu0 0.0
  %597 = vmatpush1.msra.mxu0 0.0
  %598 = vmatprep.subr.mxu0 0.0
  %599 = vmatpush1.msra.mxu0 0.0
  %600 = vmatprep.subr.mxu0 0.0
  %601 = vmatpush1.msra.mxu0 0.0
  %602 = vmatprep.mubr.f32.mxu0 0.0
  %603 = vmatmul.mubr.f32.gmra.mrb[0].mxu0 %v536
  %v604 = vpop.f32.mrb[0].mxu0
  %v605 = vadd.f32 0.0, %v604
  %v606 = vpop.f32.mrb[0].mxu0
  %607 = vdwg.mxu0
  %v609 = vsel %vm534, %v345, 0
  %611 = vmatprep.subr.mxu0 0.0
  %612 = vmatpush1.msra.mxu0 %v526
  %613 = vmatprep.subr.mxu0 0.0
  %614 = vmatpush1.msra.mxu0 %v527
  %615 = vmatprep.subr.mxu0 0.0
  %616 = vmatpush1.msra.mxu0 %v528
  %617 = vmatprep.subr.mxu0 0.0
  %618 = vmatpush1.msra.mxu0 %v529
  %619 = vmatprep.subr.mxu0 0.0
  %620 = vmatpush1.msra.mxu0 0.0
  %621 = vmatprep.subr.mxu0 0.0
  %622 = vmatpush1.msra.mxu0 0.0
  %623 = vmatprep.subr.mxu0 0.0
  %624 = vmatpush1.msra.mxu0 0.0
  %625 = vmatprep.subr.mxu0 0.0
  %626 = vmatpush1.msra.mxu0 0.0
  %627 = vmatprep.subr.mxu0 0.0
  %628 = vmatpush1.msra.mxu0 0.0
  %629 = vmatprep.subr.mxu0 0.0
  %630 = vmatpush1.msra.mxu0 0.0
  %631 = vmatprep.subr.mxu0 0.0
  %632 = vmatpush1.msra.mxu0 0.0
  %633 = vmatprep.subr.mxu0 0.0
  %634 = vmatpush1.msra.mxu0 0.0
  %635 = vmatprep.subr.mxu0 0.0
  %636 = vmatpush1.msra.mxu0 0.0
  %637 = vmatprep.subr.mxu0 0.0
  %638 = vmatpush1.msra.mxu0 0.0
  %639 = vmatprep.subr.mxu0 0.0
  %640 = vmatpush1.msra.mxu0 0.0
  %641 = vmatprep.subr.mxu0 0.0
  %642 = vmatpush1.msra.mxu0 0.0
  %643 = vmatprep.subr.mxu0 0.0
  %644 = vmatpush1.msra.mxu0 0.0
  %645 = vmatprep.subr.mxu0 0.0
  %646 = vmatpush1.msra.mxu0 0.0
  %647 = vmatprep.subr.mxu0 0.0
  %648 = vmatpush1.msra.mxu0 0.0
  %649 = vmatprep.subr.mxu0 0.0
  %650 = vmatpush1.msra.mxu0 0.0
  %651 = vmatprep.subr.mxu0 0.0
  %652 = vmatpush1.msra.mxu0 0.0
  %653 = vmatprep.subr.mxu0 0.0
  %654 = vmatpush1.msra.mxu0 0.0
  %655 = vmatprep.subr.mxu0 0.0
  %656 = vmatpush1.msra.mxu0 0.0
  %657 = vmatprep.subr.mxu0 0.0
  %658 = vmatpush1.msra.mxu0 0.0
  %659 = vmatprep.subr.mxu0 0.0
  %660 = vmatpush1.msra.mxu0 0.0
  %661 = vmatprep.subr.mxu0 0.0
  %662 = vmatpush1.msra.mxu0 0.0
  %663 = vmatprep.subr.mxu0 0.0
  %664 = vmatpush1.msra.mxu0 0.0
  %665 = vmatprep.subr.mxu0 0.0
  %666 = vmatpush1.msra.mxu0 0.0
  %667 = vmatprep.subr.mxu0 0.0
  %668 = vmatpush1.msra.mxu0 0.0
  %669 = vmatprep.subr.mxu0 0.0
  %670 = vmatpush1.msra.mxu0 0.0
  %671 = vmatprep.subr.mxu0 0.0
  %672 = vmatpush1.msra.mxu0 0.0
  %673 = vmatprep.subr.mxu0 0.0
  %674 = vmatpush1.msra.mxu0 0.0
  %675 = vmatprep.mubr.f32.mxu0 0.0
  %676 = vmatmul.mubr.f32.gmra.mrb[0].mxu0 %v609
  %v677 = vpop.f32.mrb[0].mxu0
  %v678 = vadd.f32 %v605, %v677
  %v679 = vpop.f32.mrb[0].mxu0
  %680 = vdwg.mxu0
  %v681 = vlaneseq
  %v682 = vshrl.u32 %v681, 7
  %v683 = vsub.s32 3, %v682
  %v684 = vrot.slane %v41, %v683
  %v685 = vadd.f32 %v678, %v684
  %v686 = vxor.u32 %v685, 2147483648
  %v687 = vmul.f32 %v686, 1.442695
  %v688 = vpow.pop %v687
  %v689 = vadd.f32 %v688, 1.0
  %v690 = vrcp.pop %v689
  %v691 = vmul.f32 1.0, %v690
  %693 = vrot.lane.b32.xlu0 %v691, 96
  %v694 = vpop.permute.xlu0 %693
  %v696 = vmul.f32 %v685, %v694
  %v697 = vld [vmem:[%s2] sm:$0xff]
  %v698 = vld [vmem:[%s2 + $0x8] sm:$0xff]
  %v699 = vld [vmem:[%s2 + $0x10] sm:$0xff]
  %v700 = vld [vmem:[%s2 + $0x18] sm:$0xff]
  %v701 = vld [vmem:[%s5 + $0x1d8] sm:$0xff]
  %v702 = vld [vmem:[%s5 + $0x1e0] sm:$0xff]
  %v703 = vld [vmem:[%s5 + $0x1e8] sm:$0xff]
  %v704 = vld [vmem:[%s5 + $0x1f0] sm:$0xff]
  %v705 = vld [vmem:[%s5 + $0x1f8] sm:$0xff]
  %v706 = vld [vmem:[%s5 + $0x200] sm:$0xff]
  %v707 = vlaneseq
  %v708 = vshrl.u32 %v707, 7
  %v709 = vsub.s32 4, %v708
  %v710 = vrot.slane %v41, %v709
  %vm711 = vcmask 392192
  %v713 = vsel %vm711, %v697, 0
  %v716 = vsel %vm711, %v698, 0
  %v719 = vsel %vm711, %v699, 0
  %v722 = vsel %vm711, %v700, 0
  %724 = vmatprep.subr.mxu0 0.0
  %725 = vmatpush1.msra.mxu0 %v701
  %726 = vmatprep.subr.mxu0 0.0
  %727 = vmatpush1.msra.mxu0 %v702
  %728 = vmatprep.subr.mxu0 0.0
  %729 = vmatpush1.msra.mxu0 %v703
  %730 = vmatprep.subr.mxu0 0.0
  %731 = vmatpush1.msra.mxu0 %v704
  %732 = vmatprep.subr.mxu0 0.0
  %733 = vmatpush1.msra.mxu0 %v705
  %734 = vmatprep.subr.mxu0 0.0
  %735 = vmatpush1.msra.mxu0 %v706
  %736 = vmatprep.subr.mxu0 0.0
  %737 = vmatpush1.msra.mxu0 0.0
  %738 = vmatprep.subr.mxu0 0.0
  %739 = vmatpush1.msra.mxu0 0.0
  %740 = vmatprep.subr.mxu0 0.0
  %741 = vmatpush1.msra.mxu0 0.0
  %742 = vmatprep.subr.mxu0 0.0
  %743 = vmatpush1.msra.mxu0 0.0
  %744 = vmatprep.subr.mxu0 0.0
  %745 = vmatpush1.msra.mxu0 0.0
  %746 = vmatprep.subr.mxu0 0.0
  %747 = vmatpush1.msra.mxu0 0.0
  %748 = vmatprep.subr.mxu0 0.0
  %749 = vmatpush1.msra.mxu0 0.0
  %750 = vmatprep.subr.mxu0 0.0
  %751 = vmatpush1.msra.mxu0 0.0
  %752 = vmatprep.subr.mxu0 0.0
  %753 = vmatpush1.msra.mxu0 0.0
  %754 = vmatprep.subr.mxu0 0.0
  %755 = vmatpush1.msra.mxu0 0.0
  %756 = vmatprep.subr.mxu0 0.0
  %757 = vmatpush1.msra.mxu0 0.0
  %758 = vmatprep.subr.mxu0 0.0
  %759 = vmatpush1.msra.mxu0 0.0
  %760 = vmatprep.subr.mxu0 0.0
  %761 = vmatpush1.msra.mxu0 0.0
  %762 = vmatprep.subr.mxu0 0.0
  %763 = vmatpush1.msra.mxu0 0.0
  %764 = vmatprep.subr.mxu0 0.0
  %765 = vmatpush1.msra.mxu0 0.0
  %766 = vmatprep.subr.mxu0 0.0
  %767 = vmatpush1.msra.mxu0 0.0
  %768 = vmatprep.subr.mxu0 0.0
  %769 = vmatpush1.msra.mxu0 0.0
  %770 = vmatprep.subr.mxu0 0.0
  %771 = vmatpush1.msra.mxu0 0.0
  %772 = vmatprep.subr.mxu0 0.0
  %773 = vmatpush1.msra.mxu0 0.0
  %774 = vmatprep.subr.mxu0 0.0
  %775 = vmatpush1.msra.mxu0 0.0
  %776 = vmatprep.subr.mxu0 0.0
  %777 = vmatpush1.msra.mxu0 0.0
  %778 = vmatprep.subr.mxu0 0.0
  %779 = vmatpush1.msra.mxu0 0.0
  %780 = vmatprep.subr.mxu0 0.0
  %781 = vmatpush1.msra.mxu0 0.0
  %782 = vmatprep.subr.mxu0 0.0
  %783 = vmatpush1.msra.mxu0 0.0
  %784 = vmatprep.subr.mxu0 0.0
  %785 = vmatpush1.msra.mxu0 0.0
  %786 = vmatprep.subr.mxu0 0.0
  %787 = vmatpush1.msra.mxu0 0.0
  %788 = vmatprep.mubr.f32.mxu0 0.0
  %789 = vmatmul.mubr.f32.gmra.mrb[0].mxu0 %v713
  %v790 = vpop.f32.mrb[0].mxu0
  %v791 = vadd.f32 %v710, %v790
  %v792 = vpop.f32.mrb[0].mxu0
  %793 = vmatprep.mubr.f32.mxu0 0.0
  %794 = vmatmul.mubr.f32.gmra.mrb[0].mxu0 %v716
  %v795 = vpop.f32.mrb[0].mxu0
  %v796 = vadd.f32 %v710, %v795
  %v797 = vpop.f32.mrb[0].mxu0
  %798 = vmatprep.mubr.f32.mxu0 0.0
  %799 = vmatmul.mubr.f32.gmra.mrb[0].mxu0 %v719
  %v800 = vpop.f32.mrb[0].mxu0
  %v801 = vadd.f32 %v710, %v800
  %v802 = vpop.f32.mrb[0].mxu0
  %803 = vmatprep.mubr.f32.mxu0 0.0
  %804 = vmatmul.mubr.f32.gmra.mrb[0].mxu0 %v722
  %v805 = vpop.f32.mrb[0].mxu0
  %v806 = vadd.f32 %v710, %v805
  %v807 = vpop.f32.mrb[0].mxu0
  %808 = vdwg.mxu0
  %v809 = vld [vmem:[%s3] sm:$0xff]
  %v810 = vld [vmem:[%s5 + $0x208] sm:$0xff]
  %v811 = vld [vmem:[%s5 + $0x210] sm:$0xff]
  %v812 = vld [vmem:[%s5 + $0x218] sm:$0xff]
  %v813 = vlaneseq
  %v814 = vshrl.u32 %v813, 7
  %v815 = vsub.s32 5, %v814
  %v816 = vrot.slane %v41, %v815
  %vm817 = vcmask 195584
  %v819 = vsel %vm817, %v809, 0
  %821 = vmatprep.subr.mxu0 0.0
  %822 = vmatpush1.msra.mxu0 %v810
  %823 = vmatprep.subr.mxu0 0.0
  %824 = vmatpush1.msra.mxu0 %v811
  %825 = vmatprep.subr.mxu0 0.0
  %826 = vmatpush1.msra.mxu0 %v812
  %827 = vmatprep.subr.mxu0 0.0
  %828 = vmatpush1.msra.mxu0 0.0
  %829 = vmatprep.subr.mxu0 0.0
  %830 = vmatpush1.msra.mxu0 0.0
  %831 = vmatprep.subr.mxu0 0.0
  %832 = vmatpush1.msra.mxu0 0.0
  %833 = vmatprep.subr.mxu0 0.0
  %834 = vmatpush1.msra.mxu0 0.0
  %835 = vmatprep.subr.mxu0 0.0
  %836 = vmatpush1.msra.mxu0 0.0
  %837 = vmatprep.subr.mxu0 0.0
  %838 = vmatpush1.msra.mxu0 0.0
  %839 = vmatprep.subr.mxu0 0.0
  %840 = vmatpush1.msra.mxu0 0.0
  %841 = vmatprep.subr.mxu0 0.0
  %842 = vmatpush1.msra.mxu0 0.0
  %843 = vmatprep.subr.mxu0 0.0
  %844 = vmatpush1.msra.mxu0 0.0
  %845 = vmatprep.subr.mxu0 0.0
  %846 = vmatpush1.msra.mxu0 0.0
  %847 = vmatprep.subr.mxu0 0.0
  %848 = vmatpush1.msra.mxu0 0.0
  %849 = vmatprep.subr.mxu0 0.0
  %850 = vmatpush1.msra.mxu0 0.0
  %851 = vmatprep.subr.mxu0 0.0
  %852 = vmatpush1.msra.mxu0 0.0
  %853 = vmatprep.subr.mxu0 0.0
  %854 = vmatpush1.msra.mxu0 0.0
  %855 = vmatprep.subr.mxu0 0.0
  %856 = vmatpush1.msra.mxu0 0.0
  %857 = vmatprep.subr.mxu0 0.0
  %858 = vmatpush1.msra.mxu0 0.0
  %859 = vmatprep.subr.mxu0 0.0
  %860 = vmatpush1.msra.mxu0 0.0
  %861 = vmatprep.subr.mxu0 0.0
  %862 = vmatpush1.msra.mxu0 0.0
  %863 = vmatprep.subr.mxu0 0.0
  %864 = vmatpush1.msra.mxu0 0.0
  %865 = vmatprep.subr.mxu0 0.0
  %866 = vmatpush1.msra.mxu0 0.0
  %867 = vmatprep.subr.mxu0 0.0
  %868 = vmatpush1.msra.mxu0 0.0
  %869 = vmatprep.subr.mxu0 0.0
  %870 = vmatpush1.msra.mxu0 0.0
  %871 = vmatprep.subr.mxu0 0.0
  %872 = vmatpush1.msra.mxu0 0.0
  %873 = vmatprep.subr.mxu0 0.0
  %874 = vmatpush1.msra.mxu0 0.0
  %875 = vmatprep.subr.mxu0 0.0
  %876 = vmatpush1.msra.mxu0 0.0
  %877 = vmatprep.subr.mxu0 0.0
  %878 = vmatpush1.msra.mxu0 0.0
  %879 = vmatprep.subr.mxu0 0.0
  %880 = vmatpush1.msra.mxu0 0.0
  %881 = vmatprep.subr.mxu0 0.0
  %882 = vmatpush1.msra.mxu0 0.0
  %883 = vmatprep.subr.mxu0 0.0
  %884 = vmatpush1.msra.mxu0 0.0
  %885 = vmatprep.mubr.f32.mxu0 0.0
  %886 = vmatmul.mubr.f32.gmra.mrb[0].mxu0 %v819
  %v887 = vpop.f32.mrb[0].mxu0
  %v888 = vadd.f32 %v816, %v887
  %v889 = vpop.f32.mrb[0].mxu0
  %890 = vdwg.mxu0
  %v891 = vld [vmem:[%s8] sm:$0xff]
  %v892 = vld [vmem:[%s8 + $0x8] sm:$0xff]
  %v893 = vld [vmem:[%s8 + $0x10] sm:$0xff]
  %v894 = vld [vmem:[%s8 + $0x18] sm:$0xff]
  %v895 = vld [vmem:[%s8 + $0x20] sm:$0xff]
  %v896 = vld [vmem:[%s8 + $0x28] sm:$0xff]
  %v897 = vld [vmem:[%s8 + $0x30] sm:$0xff]
  %v898 = vld [vmem:[%s8 + $0x38] sm:$0xff]
  %v899 = vld [vmem:[%s8 + $0x40] sm:$0xff]
  %v900 = vld [vmem:[%s8 + $0x48] sm:$0xff]
  %v901 = vld [vmem:[%s8 + $0x50] sm:$0xff]
  %v902 = vld [vmem:[%s8 + $0x58] sm:$0xff]
  %v903 = vld [vmem:[%s8 + $0x60] sm:$0xff]
  %v904 = vld [vmem:[%s8 + $0x68] sm:$0xff]
  %v905 = vld [vmem:[%s8 + $0x70] sm:$0xff]
  %v906 = vld [vmem:[%s8 + $0x78] sm:$0xff]
  %v907 = vld [vmem:[%s8 + $0x80] sm:$0xff]
  %v908 = vld [vmem:[%s8 + $0x88] sm:$0xff]
  %v909 = vld [vmem:[%s8 + $0x90] sm:$0xff]
  %v910 = vld [vmem:[%s8 + $0x98] sm:$0xff]
  %v911 = vld [vmem:[%s8 + $0xa0] sm:$0xff]
  %v912 = vld [vmem:[%s8 + $0xa8] sm:$0xff]
  %v913 = vld [vmem:[%s8 + $0xb0] sm:$0xff]
  %v914 = vld [vmem:[%s8 + $0xb8] sm:$0xff]
  %v915 = vld [vmem:[%s8 + $0xc0] sm:$0xff]
  %v916 = vld [vmem:[%s8 + $0xc8] sm:$0xff]
  %v917 = vld [vmem:[%s8 + $0xd0] sm:$0xff]
  %v918 = vld [vmem:[%s8 + $0xd8] sm:$0xff]
  %v919 = vld [vmem:[%s8 + $0xe0] sm:$0xff]
  %v920 = vld [vmem:[%s8 + $0xe8] sm:$0xff]
  %v921 = vld [vmem:[%s8 + $0xf0] sm:$0xff]
  %v922 = vld [vmem:[%s8 + $0xf8] sm:$0xff]
  %v924 = vsel %vm534, %v891, 0
  %v927 = vsel %vm534, %v892, 0
  %v930 = vsel %vm534, %v893, 0
  %v933 = vsel %vm534, %v894, 0
  %v936 = vsel %vm534, %v895, 0
  %v939 = vsel %vm534, %v896, 0
  %v942 = vsel %vm534, %v897, 0
  %v945 = vsel %vm534, %v898, 0
  %v948 = vsel %vm534, %v899, 0
  %v951 = vsel %vm534, %v900, 0
  %v954 = vsel %vm534, %v901, 0
  %v957 = vsel %vm534, %v902, 0
  %v960 = vsel %vm534, %v903, 0
  %v963 = vsel %vm534, %v904, 0
  %v966 = vsel %vm534, %v905, 0
  %v969 = vsel %vm534, %v906, 0
  %v972 = vsel %vm534, %v907, 0
  %v975 = vsel %vm534, %v908, 0
  %v978 = vsel %vm534, %v909, 0
  %v981 = vsel %vm534, %v910, 0
  %v984 = vsel %vm534, %v911, 0
  %v987 = vsel %vm534, %v912, 0
  %v990 = vsel %vm534, %v913, 0
  %v993 = vsel %vm534, %v914, 0
  %v996 = vsel %vm534, %v915, 0
  %v999 = vsel %vm534, %v916, 0
  %v1002 = vsel %vm534, %v917, 0
  %v1005 = vsel %vm534, %v918, 0
  %v1008 = vsel %vm534, %v919, 0
  %v1011 = vsel %vm534, %v920, 0
  %v1014 = vsel %vm534, %v921, 0
  %v1017 = vsel %vm534, %v922, 0
  %1019 = vmatprep.subr.mxu0 0.0
  %1020 = vmatpush1.msra.mxu0 %v791
  %1021 = vmatprep.subr.mxu0 0.0
  %1022 = vmatpush1.msra.mxu0 %v796
  %1023 = vmatprep.subr.mxu0 0.0
  %1024 = vmatpush1.msra.mxu0 %v801
  %1025 = vmatprep.subr.mxu0 0.0
  %1026 = vmatpush1.msra.mxu0 %v806
  %1027 = vmatprep.subr.mxu0 0.0
  %1028 = vmatpush1.msra.mxu0 0.0
  %1029 = vmatprep.subr.mxu0 0.0
  %1030 = vmatpush1.msra.mxu0 0.0
  %1031 = vmatprep.subr.mxu0 0.0
  %1032 = vmatpush1.msra.mxu0 0.0
  %1033 = vmatprep.subr.mxu0 0.0
  %1034 = vmatpush1.msra.mxu0 0.0
  %1035 = vmatprep.subr.mxu0 0.0
  %1036 = vmatpush1.msra.mxu0 0.0
  %1037 = vmatprep.subr.mxu0 0.0
  %1038 = vmatpush1.msra.mxu0 0.0
  %1039 = vmatprep.subr.mxu0 0.0
  %1040 = vmatpush1.msra.mxu0 0.0
  %1041 = vmatprep.subr.mxu0 0.0
  %1042 = vmatpush1.msra.mxu0 0.0
  %1043 = vmatprep.subr.mxu0 0.0
  %1044 = vmatpush1.msra.mxu0 0.0
  %1045 = vmatprep.subr.mxu0 0.0
  %1046 = vmatpush1.msra.mxu0 0.0
  %1047 = vmatprep.subr.mxu0 0.0
  %1048 = vmatpush1.msra.mxu0 0.0
  %1049 = vmatprep.subr.mxu0 0.0
  %1050 = vmatpush1.msra.mxu0 0.0
  %1051 = vmatprep.subr.mxu0 0.0
  %1052 = vmatpush1.msra.mxu0 0.0
  %1053 = vmatprep.subr.mxu0 0.0
  %1054 = vmatpush1.msra.mxu0 0.0
  %1055 = vmatprep.subr.mxu0 0.0
  %1056 = vmatpush1.msra.mxu0 0.0
  %1057 = vmatprep.subr.mxu0 0.0
  %1058 = vmatpush1.msra.mxu0 0.0
  %1059 = vmatprep.subr.mxu0 0.0
  %1060 = vmatpush1.msra.mxu0 0.0
  %1061 = vmatprep.subr.mxu0 0.0
  %1062 = vmatpush1.msra.mxu0 0.0
  %1063 = vmatprep.subr.mxu0 0.0
  %1064 = vmatpush1.msra.mxu0 0.0
  %1065 = vmatprep.subr.mxu0 0.0
  %1066 = vmatpush1.msra.mxu0 0.0
  %1067 = vmatprep.subr.mxu0 0.0
  %1068 = vmatpush1.msra.mxu0 0.0
  %1069 = vmatprep.subr.mxu0 0.0
  %1070 = vmatpush1.msra.mxu0 0.0
  %1071 = vmatprep.subr.mxu0 0.0
  %1072 = vmatpush1.msra.mxu0 0.0
  %1073 = vmatprep.subr.mxu0 0.0
  %1074 = vmatpush1.msra.mxu0 0.0
  %1075 = vmatprep.subr.mxu0 0.0
  %1076 = vmatpush1.msra.mxu0 0.0
  %1077 = vmatprep.subr.mxu0 0.0
  %1078 = vmatpush1.msra.mxu0 0.0
  %1079 = vmatprep.subr.mxu0 0.0
  %1080 = vmatpush1.msra.mxu0 0.0
  %1081 = vmatprep.subr.mxu0 0.0
  %1082 = vmatpush1.msra.mxu0 0.0
  %1083 = vmatprep.mubr.f32.mxu0 0.0
  %1084 = vmatmul.mubr.f32.gmra.mrb[0].mxu0 %v924
  %v1085 = vpop.f32.mrb[0].mxu0
  %v1086 = vadd.f32 0.0, %v1085
  %v1087 = vpop.f32.mrb[0].mxu0
  %1088 = vmatprep.mubr.f32.mxu0 0.0
  %1089 = vmatmul.mubr.f32.gmra.mrb[0].mxu0 %v927
  %v1090 = vpop.f32.mrb[0].mxu0
  %v1091 = vadd.f32 0.0, %v1090
  %v1092 = vpop.f32.mrb[0].mxu0
  %1093 = vmatprep.mubr.f32.mxu0 0.0
  %1094 = vmatmul.mubr.f32.gmra.mrb[0].mxu0 %v930
  %v1095 = vpop.f32.mrb[0].mxu0
  %v1096 = vadd.f32 0.0, %v1095
  %v1097 = vpop.f32.mrb[0].mxu0
  %1098 = vmatprep.mubr.f32.mxu0 0.0
  %1099 = vmatmul.mubr.f32.gmra.mrb[0].mxu0 %v933
  %v1100 = vpop.f32.mrb[0].mxu0
  %v1101 = vadd.f32 0.0, %v1100
  %v1102 = vpop.f32.mrb[0].mxu0
  %1103 = vmatprep.mubr.f32.mxu0 0.0
  %1104 = vmatmul.mubr.f32.gmra.mrb[0].mxu0 %v936
  %v1105 = vpop.f32.mrb[0].mxu0
  %v1106 = vadd.f32 0.0, %v1105
  %v1107 = vpop.f32.mrb[0].mxu0
  %1108 = vmatprep.mubr.f32.mxu0 0.0
  %1109 = vmatmul.mubr.f32.gmra.mrb[0].mxu0 %v939
  %v1110 = vpop.f32.mrb[0].mxu0
  %v1111 = vadd.f32 0.0, %v1110
  %v1112 = vpop.f32.mrb[0].mxu0
  %1113 = vmatprep.mubr.f32.mxu0 0.0
  %1114 = vmatmul.mubr.f32.gmra.mrb[0].mxu0 %v942
  %v1115 = vpop.f32.mrb[0].mxu0
  %v1116 = vadd.f32 0.0, %v1115
  %v1117 = vpop.f32.mrb[0].mxu0
  %1118 = vmatprep.mubr.f32.mxu0 0.0
  %1119 = vmatmul.mubr.f32.gmra.mrb[0].mxu0 %v945
  %v1120 = vpop.f32.mrb[0].mxu0
  %v1121 = vadd.f32 0.0, %v1120
  %v1122 = vpop.f32.mrb[0].mxu0
  %1123 = vmatprep.mubr.f32.mxu0 0.0
  %1124 = vmatmul.mubr.f32.gmra.mrb[0].mxu0 %v948
  %v1125 = vpop.f32.mrb[0].mxu0
  %v1126 = vadd.f32 0.0, %v1125
  %v1127 = vpop.f32.mrb[0].mxu0
  %1128 = vmatprep.mubr.f32.mxu0 0.0
  %1129 = vmatmul.mubr.f32.gmra.mrb[0].mxu0 %v951
  %v1130 = vpop.f32.mrb[0].mxu0
  %v1131 = vadd.f32 0.0, %v1130
  %v1132 = vpop.f32.mrb[0].mxu0
  %1133 = vmatprep.mubr.f32.mxu0 0.0
  %1134 = vmatmul.mubr.f32.gmra.mrb[0].mxu0 %v954
  %v1135 = vpop.f32.mrb[0].mxu0
  %v1136 = vadd.f32 0.0, %v1135
  %v1137 = vpop.f32.mrb[0].mxu0
  %1138 = vmatprep.mubr.f32.mxu0 0.0
  %1139 = vmatmul.mubr.f32.gmra.mrb[0].mxu0 %v957
  %v1140 = vpop.f32.mrb[0].mxu0
  %v1141 = vadd.f32 0.0, %v1140
  %v1142 = vpop.f32.mrb[0].mxu0
  %1143 = vmatprep.mubr.f32.mxu0 0.0
  %1144 = vmatmul.mubr.f32.gmra.mrb[0].mxu0 %v960
  %v1145 = vpop.f32.mrb[0].mxu0
  %v1146 = vadd.f32 0.0, %v1145
  %v1147 = vpop.f32.mrb[0].mxu0
  %1148 = vmatprep.mubr.f32.mxu0 0.0
  %1149 = vmatmul.mubr.f32.gmra.mrb[0].mxu0 %v963
  %v1150 = vpop.f32.mrb[0].mxu0
  %v1151 = vadd.f32 0.0, %v1150
  %v1152 = vpop.f32.mrb[0].mxu0
  %1153 = vmatprep.mubr.f32.mxu0 0.0
  %1154 = vmatmul.mubr.f32.gmra.mrb[0].mxu0 %v966
  %v1155 = vpop.f32.mrb[0].mxu0
  %v1156 = vadd.f32 0.0, %v1155
  %v1157 = vpop.f32.mrb[0].mxu0
  %1158 = vmatprep.mubr.f32.mxu0 0.0
  %1159 = vmatmul.mubr.f32.gmra.mrb[0].mxu0 %v969
  %v1160 = vpop.f32.mrb[0].mxu0
  %v1161 = vadd.f32 0.0, %v1160
  %v1162 = vpop.f32.mrb[0].mxu0
  %1163 = vmatprep.mubr.f32.mxu0 0.0
  %1164 = vmatmul.mubr.f32.gmra.mrb[0].mxu0 %v972
  %v1165 = vpop.f32.mrb[0].mxu0
  %v1166 = vadd.f32 0.0, %v1165
  %v1167 = vpop.f32.mrb[0].mxu0
  %1168 = vmatprep.mubr.f32.mxu0 0.0
  %1169 = vmatmul.mubr.f32.gmra.mrb[0].mxu0 %v975
  %v1170 = vpop.f32.mrb[0].mxu0
  %v1171 = vadd.f32 0.0, %v1170
  %v1172 = vpop.f32.mrb[0].mxu0
  %1173 = vmatprep.mubr.f32.mxu0 0.0
  %1174 = vmatmul.mubr.f32.gmra.mrb[0].mxu0 %v978
  %v1175 = vpop.f32.mrb[0].mxu0
  %v1176 = vadd.f32 0.0, %v1175
  %v1177 = vpop.f32.mrb[0].mxu0
  %1178 = vmatprep.mubr.f32.mxu0 0.0
  %1179 = vmatmul.mubr.f32.gmra.mrb[0].mxu0 %v981
  %v1180 = vpop.f32.mrb[0].mxu0
  %v1181 = vadd.f32 0.0, %v1180
  %v1182 = vpop.f32.mrb[0].mxu0
  %1183 = vmatprep.mubr.f32.mxu0 0.0
  %1184 = vmatmul.mubr.f32.gmra.mrb[0].mxu0 %v984
  %v1185 = vpop.f32.mrb[0].mxu0
  %v1186 = vadd.f32 0.0, %v1185
  %v1187 = vpop.f32.mrb[0].mxu0
  %1188 = vmatprep.mubr.f32.mxu0 0.0
  %1189 = vmatmul.mubr.f32.gmra.mrb[0].mxu0 %v987
  %v1190 = vpop.f32.mrb[0].mxu0
  %v1191 = vadd.f32 0.0, %v1190
  %v1192 = vpop.f32.mrb[0].mxu0
  %1193 = vmatprep.mubr.f32.mxu0 0.0
  %1194 = vmatmul.mubr.f32.gmra.mrb[0].mxu0 %v990
  %v1195 = vpop.f32.mrb[0].mxu0
  %v1196 = vadd.f32 0.0, %v1195
  %v1197 = vpop.f32.mrb[0].mxu0
  %1198 = vmatprep.mubr.f32.mxu0 0.0
  %1199 = vmatmul.mubr.f32.gmra.mrb[0].mxu0 %v993
  %v1200 = vpop.f32.mrb[0].mxu0
  %v1201 = vadd.f32 0.0, %v1200
  %v1202 = vpop.f32.mrb[0].mxu0
  %1203 = vmatprep.mubr.f32.mxu0 0.0
  %1204 = vmatmul.mubr.f32.gmra.mrb[0].mxu0 %v996
  %v1205 = vpop.f32.mrb[0].mxu0
  %v1206 = vadd.f32 0.0, %v1205
  %v1207 = vpop.f32.mrb[0].mxu0
  %1208 = vmatprep.mubr.f32.mxu0 0.0
  %1209 = vmatmul.mubr.f32.gmra.mrb[0].mxu0 %v999
  %v1210 = vpop.f32.mrb[0].mxu0
  %v1211 = vadd.f32 0.0, %v1210
  %v1212 = vpop.f32.mrb[0].mxu0
  %1213 = vmatprep.mubr.f32.mxu0 0.0
  %1214 = vmatmul.mubr.f32.gmra.mrb[0].mxu0 %v1002
  %v1215 = vpop.f32.mrb[0].mxu0
  %v1216 = vadd.f32 0.0, %v1215
  %v1217 = vpop.f32.mrb[0].mxu0
  %1218 = vmatprep.mubr.f32.mxu0 0.0
  %1219 = vmatmul.mubr.f32.gmra.mrb[0].mxu0 %v1005
  %v1220 = vpop.f32.mrb[0].mxu0
  %v1221 = vadd.f32 0.0, %v1220
  %v1222 = vpop.f32.mrb[0].mxu0
  %1223 = vmatprep.mubr.f32.mxu0 0.0
  %1224 = vmatmul.mubr.f32.gmra.mrb[0].mxu0 %v1008
  %v1225 = vpop.f32.mrb[0].mxu0
  %v1226 = vadd.f32 0.0, %v1225
  %v1227 = vpop.f32.mrb[0].mxu0
  %1228 = vmatprep.mubr.f32.mxu0 0.0
  %1229 = vmatmul.mubr.f32.gmra.mrb[0].mxu0 %v1011
  %v1230 = vpop.f32.mrb[0].mxu0
  %v1231 = vadd.f32 0.0, %v1230
  %v1232 = vpop.f32.mrb[0].mxu0
  %1233 = vmatprep.mubr.f32.mxu0 0.0
  %1234 = vmatmul.mubr.f32.gmra.mrb[0].mxu0 %v1014
  %v1235 = vpop.f32.mrb[0].mxu0
  %v1236 = vadd.f32 0.0, %v1235
  %v1237 = vpop.f32.mrb[0].mxu0
  %1238 = vmatprep.mubr.f32.mxu0 0.0
  %1239 = vmatmul.mubr.f32.gmra.mrb[0].mxu0 %v1017
  %v1240 = vpop.f32.mrb[0].mxu0
  %v1241 = vadd.f32 0.0, %v1240
  %v1242 = vpop.f32.mrb[0].mxu0
  %1243 = vdwg.mxu0
  %v1244 = vld [vmem:[%s9] sm:$0xff]
  %v1245 = vld [vmem:[%s9 + $0x8] sm:$0xff]
  %v1246 = vld [vmem:[%s9 + $0x10] sm:$0xff]
  %v1247 = vld [vmem:[%s9 + $0x18] sm:$0xff]
  %v1248 = vld [vmem:[%s9 + $0x20] sm:$0xff]
  %v1249 = vld [vmem:[%s9 + $0x28] sm:$0xff]
  %v1250 = vld [vmem:[%s9 + $0x30] sm:$0xff]
  %v1251 = vld [vmem:[%s9 + $0x38] sm:$0xff]
  %v1252 = vld [vmem:[%s9 + $0x40] sm:$0xff]
  %v1253 = vld [vmem:[%s9 + $0x48] sm:$0xff]
  %v1254 = vld [vmem:[%s9 + $0x50] sm:$0xff]
  %v1255 = vld [vmem:[%s9 + $0x58] sm:$0xff]
  %v1256 = vld [vmem:[%s9 + $0x60] sm:$0xff]
  %v1257 = vld [vmem:[%s9 + $0x68] sm:$0xff]
  %v1258 = vld [vmem:[%s9 + $0x70] sm:$0xff]
  %v1259 = vld [vmem:[%s9 + $0x78] sm:$0xff]
  %v1260 = vld [vmem:[%s9 + $0x80] sm:$0xff]
  %v1261 = vld [vmem:[%s9 + $0x88] sm:$0xff]
  %v1262 = vld [vmem:[%s9 + $0x90] sm:$0xff]
  %v1263 = vld [vmem:[%s9 + $0x98] sm:$0xff]
  %v1264 = vld [vmem:[%s9 + $0xa0] sm:$0xff]
  %v1265 = vld [vmem:[%s9 + $0xa8] sm:$0xff]
  %v1266 = vld [vmem:[%s9 + $0xb0] sm:$0xff]
  %v1267 = vld [vmem:[%s9 + $0xb8] sm:$0xff]
  %v1268 = vld [vmem:[%s9 + $0xc0] sm:$0xff]
  %v1269 = vld [vmem:[%s9 + $0xc8] sm:$0xff]
  %v1270 = vld [vmem:[%s9 + $0xd0] sm:$0xff]
  %v1271 = vld [vmem:[%s9 + $0xd8] sm:$0xff]
  %v1272 = vld [vmem:[%s9 + $0xe0] sm:$0xff]
  %v1273 = vld [vmem:[%s9 + $0xe8] sm:$0xff]
  %v1274 = vld [vmem:[%s9 + $0xf0] sm:$0xff]
  %v1275 = vld [vmem:[%s9 + $0xf8] sm:$0xff]
  %v1277 = vsel %vm370, %v1244, 0
  %v1280 = vsel %vm370, %v1245, 0
  %v1283 = vsel %vm370, %v1246, 0
  %v1286 = vsel %vm370, %v1247, 0
  %v1289 = vsel %vm370, %v1248, 0
  %v1292 = vsel %vm370, %v1249, 0
  %v1295 = vsel %vm370, %v1250, 0
  %v1298 = vsel %vm370, %v1251, 0
  %v1301 = vsel %vm370, %v1252, 0
  %v1304 = vsel %vm370, %v1253, 0
  %v1307 = vsel %vm370, %v1254, 0
  %v1310 = vsel %vm370, %v1255, 0
  %v1313 = vsel %vm370, %v1256, 0
  %v1316 = vsel %vm370, %v1257, 0
  %v1319 = vsel %vm370, %v1258, 0
  %v1322 = vsel %vm370, %v1259, 0
  %v1325 = vsel %vm370, %v1260, 0
  %v1328 = vsel %vm370, %v1261, 0
  %v1331 = vsel %vm370, %v1262, 0
  %v1334 = vsel %vm370, %v1263, 0
  %v1337 = vsel %vm370, %v1264, 0
  %v1340 = vsel %vm370, %v1265, 0
  %v1343 = vsel %vm370, %v1266, 0
  %v1346 = vsel %vm370, %v1267, 0
  %v1349 = vsel %vm370, %v1268, 0
  %v1352 = vsel %vm370, %v1269, 0
  %v1355 = vsel %vm370, %v1270, 0
  %v1358 = vsel %vm370, %v1271, 0
  %v1361 = vsel %vm370, %v1272, 0
  %v1364 = vsel %vm370, %v1273, 0
  %v1367 = vsel %vm370, %v1274, 0
  %v1370 = vsel %vm370, %v1275, 0
  %1372 = vmatprep.subr.mxu0 0.0
  %1373 = vmatpush1.msra.mxu0 %v444
  %1374 = vmatprep.subr.mxu0 0.0
  %1375 = vmatpush1.msra.mxu0 %v449
  %1376 = vmatprep.subr.mxu0 0.0
  %1377 = vmatpush1.msra.mxu0 0.0
  %1378 = vmatprep.subr.mxu0 0.0
  %1379 = vmatpush1.msra.mxu0 0.0
  %1380 = vmatprep.subr.mxu0 0.0
  %1381 = vmatpush1.msra.mxu0 0.0
  %1382 = vmatprep.subr.mxu0 0.0
  %1383 = vmatpush1.msra.mxu0 0.0
  %1384 = vmatprep.subr.mxu0 0.0
  %1385 = vmatpush1.msra.mxu0 0.0
  %1386 = vmatprep.subr.mxu0 0.0
  %1387 = vmatpush1.msra.mxu0 0.0
  %1388 = vmatprep.subr.mxu0 0.0
  %1389 = vmatpush1.msra.mxu0 0.0
  %1390 = vmatprep.subr.mxu0 0.0
  %1391 = vmatpush1.msra.mxu0 0.0
  %1392 = vmatprep.subr.mxu0 0.0
  %1393 = vmatpush1.msra.mxu0 0.0
  %1394 = vmatprep.subr.mxu0 0.0
  %1395 = vmatpush1.msra.mxu0 0.0
  %1396 = vmatprep.subr.mxu0 0.0
  %1397 = vmatpush1.msra.mxu0 0.0
  %1398 = vmatprep.subr.mxu0 0.0
  %1399 = vmatpush1.msra.mxu0 0.0
  %1400 = vmatprep.subr.mxu0 0.0
  %1401 = vmatpush1.msra.mxu0 0.0
  %1402 = vmatprep.subr.mxu0 0.0
  %1403 = vmatpush1.msra.mxu0 0.0
  %1404 = vmatprep.subr.mxu0 0.0
  %1405 = vmatpush1.msra.mxu0 0.0
  %1406 = vmatprep.subr.mxu0 0.0
  %1407 = vmatpush1.msra.mxu0 0.0
  %1408 = vmatprep.subr.mxu0 0.0
  %1409 = vmatpush1.msra.mxu0 0.0
  %1410 = vmatprep.subr.mxu0 0.0
  %1411 = vmatpush1.msra.mxu0 0.0
  %1412 = vmatprep.subr.mxu0 0.0
  %1413 = vmatpush1.msra.mxu0 0.0
  %1414 = vmatprep.subr.mxu0 0.0
  %1415 = vmatpush1.msra.mxu0 0.0
  %1416 = vmatprep.subr.mxu0 0.0
  %1417 = vmatpush1.msra.mxu0 0.0
  %1418 = vmatprep.subr.mxu0 0.0
  %1419 = vmatpush1.msra.mxu0 0.0
  %1420 = vmatprep.subr.mxu0 0.0
  %1421 = vmatpush1.msra.mxu0 0.0
  %1422 = vmatprep.subr.mxu0 0.0
  %1423 = vmatpush1.msra.mxu0 0.0
  %1424 = vmatprep.subr.mxu0 0.0
  %1425 = vmatpush1.msra.mxu0 0.0
  %1426 = vmatprep.subr.mxu0 0.0
  %1427 = vmatpush1.msra.mxu0 0.0
  %1428 = vmatprep.subr.mxu0 0.0
  %1429 = vmatpush1.msra.mxu0 0.0
  %1430 = vmatprep.subr.mxu0 0.0
  %1431 = vmatpush1.msra.mxu0 0.0
  %1432 = vmatprep.subr.mxu0 0.0
  %1433 = vmatpush1.msra.mxu0 0.0
  %1434 = vmatprep.subr.mxu0 0.0
  %1435 = vmatpush1.msra.mxu0 0.0
  %1436 = vmatprep.mubr.f32.mxu0 0.0
  %1437 = vmatmul.mubr.f32.gmra.mrb[0].mxu0 %v1277
  %v1438 = vpop.f32.mrb[0].mxu0
  %v1439 = vadd.f32 0.0, %v1438
  %v1440 = vpop.f32.mrb[0].mxu0
  %1441 = vmatprep.mubr.f32.mxu0 0.0
  %1442 = vmatmul.mubr.f32.gmra.mrb[0].mxu0 %v1280
  %v1443 = vpop.f32.mrb[0].mxu0
  %v1444 = vadd.f32 0.0, %v1443
  %v1445 = vpop.f32.mrb[0].mxu0
  %1446 = vmatprep.mubr.f32.mxu0 0.0
  %1447 = vmatmul.mubr.f32.gmra.mrb[0].mxu0 %v1283
  %v1448 = vpop.f32.mrb[0].mxu0
  %v1449 = vadd.f32 0.0, %v1448
  %v1450 = vpop.f32.mrb[0].mxu0
  %1451 = vmatprep.mubr.f32.mxu0 0.0
  %1452 = vmatmul.mubr.f32.gmra.mrb[0].mxu0 %v1286
  %v1453 = vpop.f32.mrb[0].mxu0
  %v1454 = vadd.f32 0.0, %v1453
  %v1455 = vpop.f32.mrb[0].mxu0
  %1456 = vmatprep.mubr.f32.mxu0 0.0
  %1457 = vmatmul.mubr.f32.gmra.mrb[0].mxu0 %v1289
  %v1458 = vpop.f32.mrb[0].mxu0
  %v1459 = vadd.f32 0.0, %v1458
  %v1460 = vpop.f32.mrb[0].mxu0
  %1461 = vmatprep.mubr.f32.mxu0 0.0
  %1462 = vmatmul.mubr.f32.gmra.mrb[0].mxu0 %v1292
  %v1463 = vpop.f32.mrb[0].mxu0
  %v1464 = vadd.f32 0.0, %v1463
  %v1465 = vpop.f32.mrb[0].mxu0
  %1466 = vmatprep.mubr.f32.mxu0 0.0
  %1467 = vmatmul.mubr.f32.gmra.mrb[0].mxu0 %v1295
  %v1468 = vpop.f32.mrb[0].mxu0
  %v1469 = vadd.f32 0.0, %v1468
  %v1470 = vpop.f32.mrb[0].mxu0
  %1471 = vmatprep.mubr.f32.mxu0 0.0
  %1472 = vmatmul.mubr.f32.gmra.mrb[0].mxu0 %v1298
  %v1473 = vpop.f32.mrb[0].mxu0
  %v1474 = vadd.f32 0.0, %v1473
  %v1475 = vpop.f32.mrb[0].mxu0
  %1476 = vmatprep.mubr.f32.mxu0 0.0
  %1477 = vmatmul.mubr.f32.gmra.mrb[0].mxu0 %v1301
  %v1478 = vpop.f32.mrb[0].mxu0
  %v1479 = vadd.f32 0.0, %v1478
  %v1480 = vpop.f32.mrb[0].mxu0
  %1481 = vmatprep.mubr.f32.mxu0 0.0
  %1482 = vmatmul.mubr.f32.gmra.mrb[0].mxu0 %v1304
  %v1483 = vpop.f32.mrb[0].mxu0
  %v1484 = vadd.f32 0.0, %v1483
  %v1485 = vpop.f32.mrb[0].mxu0
  %1486 = vmatprep.mubr.f32.mxu0 0.0
  %1487 = vmatmul.mubr.f32.gmra.mrb[0].mxu0 %v1307
  %v1488 = vpop.f32.mrb[0].mxu0
  %v1489 = vadd.f32 0.0, %v1488
  %v1490 = vpop.f32.mrb[0].mxu0
  %1491 = vmatprep.mubr.f32.mxu0 0.0
  %1492 = vmatmul.mubr.f32.gmra.mrb[0].mxu0 %v1310
  %v1493 = vpop.f32.mrb[0].mxu0
  %v1494 = vadd.f32 0.0, %v1493
  %v1495 = vpop.f32.mrb[0].mxu0
  %1496 = vmatprep.mubr.f32.mxu0 0.0
  %1497 = vmatmul.mubr.f32.gmra.mrb[0].mxu0 %v1313
  %v1498 = vpop.f32.mrb[0].mxu0
  %v1499 = vadd.f32 0.0, %v1498
  %v1500 = vpop.f32.mrb[0].mxu0
  %1501 = vmatprep.mubr.f32.mxu0 0.0
  %1502 = vmatmul.mubr.f32.gmra.mrb[0].mxu0 %v1316
  %v1503 = vpop.f32.mrb[0].mxu0
  %v1504 = vadd.f32 0.0, %v1503
  %v1505 = vpop.f32.mrb[0].mxu0
  %1506 = vmatprep.mubr.f32.mxu0 0.0
  %1507 = vmatmul.mubr.f32.gmra.mrb[0].mxu0 %v1319
  %v1508 = vpop.f32.mrb[0].mxu0
  %v1509 = vadd.f32 0.0, %v1508
  %v1510 = vpop.f32.mrb[0].mxu0
  %1511 = vmatprep.mubr.f32.mxu0 0.0
  %1512 = vmatmul.mubr.f32.gmra.mrb[0].mxu0 %v1322
  %v1513 = vpop.f32.mrb[0].mxu0
  %v1514 = vadd.f32 0.0, %v1513
  %v1515 = vpop.f32.mrb[0].mxu0
  %1516 = vmatprep.mubr.f32.mxu0 0.0
  %1517 = vmatmul.mubr.f32.gmra.mrb[0].mxu0 %v1325
  %v1518 = vpop.f32.mrb[0].mxu0
  %v1519 = vadd.f32 0.0, %v1518
  %v1520 = vpop.f32.mrb[0].mxu0
  %1521 = vmatprep.mubr.f32.mxu0 0.0
  %1522 = vmatmul.mubr.f32.gmra.mrb[0].mxu0 %v1328
  %v1523 = vpop.f32.mrb[0].mxu0
  %v1524 = vadd.f32 0.0, %v1523
  %v1525 = vpop.f32.mrb[0].mxu0
  %1526 = vmatprep.mubr.f32.mxu0 0.0
  %1527 = vmatmul.mubr.f32.gmra.mrb[0].mxu0 %v1331
  %v1528 = vpop.f32.mrb[0].mxu0
  %v1529 = vadd.f32 0.0, %v1528
  %v1530 = vpop.f32.mrb[0].mxu0
  %1531 = vmatprep.mubr.f32.mxu0 0.0
  %1532 = vmatmul.mubr.f32.gmra.mrb[0].mxu0 %v1334
  %v1533 = vpop.f32.mrb[0].mxu0
  %v1534 = vadd.f32 0.0, %v1533
  %v1535 = vpop.f32.mrb[0].mxu0
  %1536 = vmatprep.mubr.f32.mxu0 0.0
  %1537 = vmatmul.mubr.f32.gmra.mrb[0].mxu0 %v1337
  %v1538 = vpop.f32.mrb[0].mxu0
  %v1539 = vadd.f32 0.0, %v1538
  %v1540 = vpop.f32.mrb[0].mxu0
  %1541 = vmatprep.mubr.f32.mxu0 0.0
  %1542 = vmatmul.mubr.f32.gmra.mrb[0].mxu0 %v1340
  %v1543 = vpop.f32.mrb[0].mxu0
  %v1544 = vadd.f32 0.0, %v1543
  %v1545 = vpop.f32.mrb[0].mxu0
  %1546 = vmatprep.mubr.f32.mxu0 0.0
  %1547 = vmatmul.mubr.f32.gmra.mrb[0].mxu0 %v1343
  %v1548 = vpop.f32.mrb[0].mxu0
  %v1549 = vadd.f32 0.0, %v1548
  %v1550 = vpop.f32.mrb[0].mxu0
  %1551 = vmatprep.mubr.f32.mxu0 0.0
  %1552 = vmatmul.mubr.f32.gmra.mrb[0].mxu0 %v1346
  %v1553 = vpop.f32.mrb[0].mxu0
  %v1554 = vadd.f32 0.0, %v1553
  %v1555 = vpop.f32.mrb[0].mxu0
  %1556 = vmatprep.mubr.f32.mxu0 0.0
  %1557 = vmatmul.mubr.f32.gmra.mrb[0].mxu0 %v1349
  %v1558 = vpop.f32.mrb[0].mxu0
  %v1559 = vadd.f32 0.0, %v1558
  %v1560 = vpop.f32.mrb[0].mxu0
  %1561 = vmatprep.mubr.f32.mxu0 0.0
  %1562 = vmatmul.mubr.f32.gmra.mrb[0].mxu0 %v1352
  %v1563 = vpop.f32.mrb[0].mxu0
  %v1564 = vadd.f32 0.0, %v1563
  %v1565 = vpop.f32.mrb[0].mxu0
  %1566 = vmatprep.mubr.f32.mxu0 0.0
  %1567 = vmatmul.mubr.f32.gmra.mrb[0].mxu0 %v1355
  %v1568 = vpop.f32.mrb[0].mxu0
  %v1569 = vadd.f32 0.0, %v1568
  %v1570 = vpop.f32.mrb[0].mxu0
  %1571 = vmatprep.mubr.f32.mxu0 0.0
  %1572 = vmatmul.mubr.f32.gmra.mrb[0].mxu0 %v1358
  %v1573 = vpop.f32.mrb[0].mxu0
  %v1574 = vadd.f32 0.0, %v1573
  %v1575 = vpop.f32.mrb[0].mxu0
  %1576 = vmatprep.mubr.f32.mxu0 0.0
  %1577 = vmatmul.mubr.f32.gmra.mrb[0].mxu0 %v1361
  %v1578 = vpop.f32.mrb[0].mxu0
  %v1579 = vadd.f32 0.0, %v1578
  %v1580 = vpop.f32.mrb[0].mxu0
  %1581 = vmatprep.mubr.f32.mxu0 0.0
  %1582 = vmatmul.mubr.f32.gmra.mrb[0].mxu0 %v1364
  %v1583 = vpop.f32.mrb[0].mxu0
  %v1584 = vadd.f32 0.0, %v1583
  %v1585 = vpop.f32.mrb[0].mxu0
  %1586 = vmatprep.mubr.f32.mxu0 0.0
  %1587 = vmatmul.mubr.f32.gmra.mrb[0].mxu0 %v1367
  %v1588 = vpop.f32.mrb[0].mxu0
  %v1589 = vadd.f32 0.0, %v1588
  %v1590 = vpop.f32.mrb[0].mxu0
  %1591 = vmatprep.mubr.f32.mxu0 0.0
  %1592 = vmatmul.mubr.f32.gmra.mrb[0].mxu0 %v1370
  %v1593 = vpop.f32.mrb[0].mxu0
  %v1594 = vadd.f32 0.0, %v1593
  %v1595 = vpop.f32.mrb[0].mxu0
  %1596 = vdwg.mxu0
  %v1597 = vmul.f32 %v1086, %v1439
  %v1598 = vmul.f32 %v1091, %v1444
  %v1599 = vmul.f32 %v1096, %v1449
  %v1600 = vmul.f32 %v1101, %v1454
  %v1601 = vmul.f32 %v1106, %v1459
  %v1602 = vmul.f32 %v1111, %v1464
  %v1603 = vmul.f32 %v1116, %v1469
  %v1604 = vmul.f32 %v1121, %v1474
  %v1605 = vmul.f32 %v1126, %v1479
  %v1606 = vmul.f32 %v1131, %v1484
  %v1607 = vmul.f32 %v1136, %v1489
  %v1608 = vmul.f32 %v1141, %v1494
  %v1609 = vmul.f32 %v1146, %v1499
  %v1610 = vmul.f32 %v1151, %v1504
  %v1611 = vmul.f32 %v1156, %v1509
  %v1612 = vmul.f32 %v1161, %v1514
  %v1613 = vmul.f32 %v1166, %v1519
  %v1614 = vmul.f32 %v1171, %v1524
  %v1615 = vmul.f32 %v1176, %v1529
  %v1616 = vmul.f32 %v1181, %v1534
  %v1617 = vmul.f32 %v1186, %v1539
  %v1618 = vmul.f32 %v1191, %v1544
  %v1619 = vmul.f32 %v1196, %v1549
  %v1620 = vmul.f32 %v1201, %v1554
  %v1621 = vmul.f32 %v1206, %v1559
  %v1622 = vmul.f32 %v1211, %v1564
  %v1623 = vmul.f32 %v1216, %v1569
  %v1624 = vmul.f32 %v1221, %v1574
  %v1625 = vmul.f32 %v1226, %v1579
  %v1626 = vmul.f32 %v1231, %v1584
  %v1627 = vmul.f32 %v1236, %v1589
  %v1628 = vmul.f32 %v1241, %v1594
  %v1629 = vld [vmem:[%s5 + $0x260] sm:$0xff]
  %v1630 = vld [vmem:[%s5 + $0x268] sm:$0xff]
  %v1631 = vld [vmem:[%s5 + $0x270] sm:$0xff]
  %v1632 = vld [vmem:[%s5 + $0x278] sm:$0xff]
  %v1633 = vlaneseq
  %v1634 = vshrl.u32 %v1633, 7
  %v1635 = vsub.s32 7, %v1634
  %v1636 = vrot.slane %v41, %v1635
  %v1638 = vsel %vm534, %v1597, 0
  %v1641 = vsel %vm534, %v1598, 0
  %v1644 = vsel %vm534, %v1599, 0
  %v1647 = vsel %vm534, %v1600, 0
  %v1650 = vsel %vm534, %v1601, 0
  %v1653 = vsel %vm534, %v1602, 0
  %v1656 = vsel %vm534, %v1603, 0
  %v1659 = vsel %vm534, %v1604, 0
  %v1662 = vsel %vm534, %v1605, 0
  %v1665 = vsel %vm534, %v1606, 0
  %v1668 = vsel %vm534, %v1607, 0
  %v1671 = vsel %vm534, %v1608, 0
  %v1674 = vsel %vm534, %v1609, 0
  %v1677 = vsel %vm534, %v1610, 0
  %v1680 = vsel %vm534, %v1611, 0
  %v1683 = vsel %vm534, %v1612, 0
  %v1686 = vsel %vm534, %v1613, 0
  %v1689 = vsel %vm534, %v1614, 0
  %v1692 = vsel %vm534, %v1615, 0
  %v1695 = vsel %vm534, %v1616, 0
  %v1698 = vsel %vm534, %v1617, 0
  %v1701 = vsel %vm534, %v1618, 0
  %v1704 = vsel %vm534, %v1619, 0
  %v1707 = vsel %vm534, %v1620, 0
  %v1710 = vsel %vm534, %v1621, 0
  %v1713 = vsel %vm534, %v1622, 0
  %v1716 = vsel %vm534, %v1623, 0
  %v1719 = vsel %vm534, %v1624, 0
  %v1722 = vsel %vm534, %v1625, 0
  %v1725 = vsel %vm534, %v1626, 0
  %v1728 = vsel %vm534, %v1627, 0
  %v1731 = vsel %vm534, %v1628, 0
  %1733 = vmatprep.subr.mxu0 0.0
  %1734 = vmatpush1.msra.mxu0 %v1629
  %1735 = vmatprep.subr.mxu0 0.0
  %1736 = vmatpush1.msra.mxu0 %v1630
  %1737 = vmatprep.subr.mxu0 0.0
  %1738 = vmatpush1.msra.mxu0 %v1631
  %1739 = vmatprep.subr.mxu0 0.0
  %1740 = vmatpush1.msra.mxu0 %v1632
  %1741 = vmatprep.subr.mxu0 0.0
  %1742 = vmatpush1.msra.mxu0 0.0
  %1743 = vmatprep.subr.mxu0 0.0
  %1744 = vmatpush1.msra.mxu0 0.0
  %1745 = vmatprep.subr.mxu0 0.0
  %1746 = vmatpush1.msra.mxu0 0.0
  %1747 = vmatprep.subr.mxu0 0.0
  %1748 = vmatpush1.msra.mxu0 0.0
  %1749 = vmatprep.subr.mxu0 0.0
  %1750 = vmatpush1.msra.mxu0 0.0
  %1751 = vmatprep.subr.mxu0 0.0
  %1752 = vmatpush1.msra.mxu0 0.0
  %1753 = vmatprep.subr.mxu0 0.0
  %1754 = vmatpush1.msra.mxu0 0.0
  %1755 = vmatprep.subr.mxu0 0.0
  %1756 = vmatpush1.msra.mxu0 0.0
  %1757 = vmatprep.subr.mxu0 0.0
  %1758 = vmatpush1.msra.mxu0 0.0
  %1759 = vmatprep.subr.mxu0 0.0
  %1760 = vmatpush1.msra.mxu0 0.0
  %1761 = vmatprep.subr.mxu0 0.0
  %1762 = vmatpush1.msra.mxu0 0.0
  %1763 = vmatprep.subr.mxu0 0.0
  %1764 = vmatpush1.msra.mxu0 0.0
  %1765 = vmatprep.subr.mxu0 0.0
  %1766 = vmatpush1.msra.mxu0 0.0
  %1767 = vmatprep.subr.mxu0 0.0
  %1768 = vmatpush1.msra.mxu0 0.0
  %1769 = vmatprep.subr.mxu0 0.0
  %1770 = vmatpush1.msra.mxu0 0.0
  %1771 = vmatprep.subr.mxu0 0.0
  %1772 = vmatpush1.msra.mxu0 0.0
  %1773 = vmatprep.subr.mxu0 0.0
  %1774 = vmatpush1.msra.mxu0 0.0
  %1775 = vmatprep.subr.mxu0 0.0
  %1776 = vmatpush1.msra.mxu0 0.0
  %1777 = vmatprep.subr.mxu0 0.0
  %1778 = vmatpush1.msra.mxu0 0.0
  %1779 = vmatprep.subr.mxu0 0.0
  %1780 = vmatpush1.msra.mxu0 0.0
  %1781 = vmatprep.subr.mxu0 0.0
  %1782 = vmatpush1.msra.mxu0 0.0
  %1783 = vmatprep.subr.mxu0 0.0
  %1784 = vmatpush1.msra.mxu0 0.0
  %1785 = vmatprep.subr.mxu0 0.0
  %1786 = vmatpush1.msra.mxu0 0.0
  %1787 = vmatprep.subr.mxu0 0.0
  %1788 = vmatpush1.msra.mxu0 0.0
  %1789 = vmatprep.subr.mxu0 0.0
  %1790 = vmatpush1.msra.mxu0 0.0
  %1791 = vmatprep.subr.mxu0 0.0
  %1792 = vmatpush1.msra.mxu0 0.0
  %1793 = vmatprep.subr.mxu0 0.0
  %1794 = vmatpush1.msra.mxu0 0.0
  %1795 = vmatprep.subr.mxu0 0.0
  %1796 = vmatpush1.msra.mxu0 0.0
  %1797 = vmatprep.mubr.f32.mxu0 0.0
  %1798 = vmatmul.mubr.f32.gmra.mrb[0].mxu0 %v1638
  %v1799 = vpop.f32.mrb[0].mxu0
  %v1800 = vadd.f32 %v1636, %v1799
  %v1801 = vpop.f32.mrb[0].mxu0
  %1802 = vmatprep.mubr.f32.mxu0 0.0
  %1803 = vmatmul.mubr.f32.gmra.mrb[0].mxu0 %v1641
  %v1804 = vpop.f32.mrb[0].mxu0
  %v1805 = vadd.f32 %v1636, %v1804
  %v1806 = vpop.f32.mrb[0].mxu0
  %1807 = vmatprep.mubr.f32.mxu0 0.0
  %1808 = vmatmul.mubr.f32.gmra.mrb[0].mxu0 %v1644
  %v1809 = vpop.f32.mrb[0].mxu0
  %v1810 = vadd.f32 %v1636, %v1809
  %v1811 = vpop.f32.mrb[0].mxu0
  %1812 = vmatprep.mubr.f32.mxu0 0.0
  %1813 = vmatmul.mubr.f32.gmra.mrb[0].mxu0 %v1647
  %v1814 = vpop.f32.mrb[0].mxu0
  %v1815 = vadd.f32 %v1636, %v1814
  %v1816 = vpop.f32.mrb[0].mxu0
  %1817 = vmatprep.mubr.f32.mxu0 0.0
  %1818 = vmatmul.mubr.f32.gmra.mrb[0].mxu0 %v1650
  %v1819 = vpop.f32.mrb[0].mxu0
  %v1820 = vadd.f32 %v1636, %v1819
  %v1821 = vpop.f32.mrb[0].mxu0
  %1822 = vmatprep.mubr.f32.mxu0 0.0
  %1823 = vmatmul.mubr.f32.gmra.mrb[0].mxu0 %v1653
  %v1824 = vpop.f32.mrb[0].mxu0
  %v1825 = vadd.f32 %v1636, %v1824
  %v1826 = vpop.f32.mrb[0].mxu0
  %1827 = vmatprep.mubr.f32.mxu0 0.0
  %1828 = vmatmul.mubr.f32.gmra.mrb[0].mxu0 %v1656
  %v1829 = vpop.f32.mrb[0].mxu0
  %v1830 = vadd.f32 %v1636, %v1829
  %v1831 = vpop.f32.mrb[0].mxu0
  %1832 = vmatprep.mubr.f32.mxu0 0.0
  %1833 = vmatmul.mubr.f32.gmra.mrb[0].mxu0 %v1659
  %v1834 = vpop.f32.mrb[0].mxu0
  %v1835 = vadd.f32 %v1636, %v1834
  %v1836 = vpop.f32.mrb[0].mxu0
  %1837 = vmatprep.mubr.f32.mxu0 0.0
  %1838 = vmatmul.mubr.f32.gmra.mrb[0].mxu0 %v1662
  %v1839 = vpop.f32.mrb[0].mxu0
  %v1840 = vadd.f32 %v1636, %v1839
  %v1841 = vpop.f32.mrb[0].mxu0
  %1842 = vmatprep.mubr.f32.mxu0 0.0
  %1843 = vmatmul.mubr.f32.gmra.mrb[0].mxu0 %v1665
  %v1844 = vpop.f32.mrb[0].mxu0
  %v1845 = vadd.f32 %v1636, %v1844
  %v1846 = vpop.f32.mrb[0].mxu0
  %1847 = vmatprep.mubr.f32.mxu0 0.0
  %1848 = vmatmul.mubr.f32.gmra.mrb[0].mxu0 %v1668
  %v1849 = vpop.f32.mrb[0].mxu0
  %v1850 = vadd.f32 %v1636, %v1849
  %v1851 = vpop.f32.mrb[0].mxu0
  %1852 = vmatprep.mubr.f32.mxu0 0.0
  %1853 = vmatmul.mubr.f32.gmra.mrb[0].mxu0 %v1671
  %v1854 = vpop.f32.mrb[0].mxu0
  %v1855 = vadd.f32 %v1636, %v1854
  %v1856 = vpop.f32.mrb[0].mxu0
  %1857 = vmatprep.mubr.f32.mxu0 0.0
  %1858 = vmatmul.mubr.f32.gmra.mrb[0].mxu0 %v1674
  %v1859 = vpop.f32.mrb[0].mxu0
  %v1860 = vadd.f32 %v1636, %v1859
  %v1861 = vpop.f32.mrb[0].mxu0
  %1862 = vmatprep.mubr.f32.mxu0 0.0
  %1863 = vmatmul.mubr.f32.gmra.mrb[0].mxu0 %v1677
  %v1864 = vpop.f32.mrb[0].mxu0
  %v1865 = vadd.f32 %v1636, %v1864
  %v1866 = vpop.f32.mrb[0].mxu0
  %1867 = vmatprep.mubr.f32.mxu0 0.0
  %1868 = vmatmul.mubr.f32.gmra.mrb[0].mxu0 %v1680
  %v1869 = vpop.f32.mrb[0].mxu0
  %v1870 = vadd.f32 %v1636, %v1869
  %v1871 = vpop.f32.mrb[0].mxu0
  %1872 = vmatprep.mubr.f32.mxu0 0.0
  %1873 = vmatmul.mubr.f32.gmra.mrb[0].mxu0 %v1683
  %v1874 = vpop.f32.mrb[0].mxu0
  %v1875 = vadd.f32 %v1636, %v1874
  %v1876 = vpop.f32.mrb[0].mxu0
  %1877 = vmatprep.mubr.f32.mxu0 0.0
  %1878 = vmatmul.mubr.f32.gmra.mrb[0].mxu0 %v1686
  %v1879 = vpop.f32.mrb[0].mxu0
  %v1880 = vadd.f32 %v1636, %v1879
  %v1881 = vpop.f32.mrb[0].mxu0
  %1882 = vmatprep.mubr.f32.mxu0 0.0
  %1883 = vmatmul.mubr.f32.gmra.mrb[0].mxu0 %v1689
  %v1884 = vpop.f32.mrb[0].mxu0
  %v1885 = vadd.f32 %v1636, %v1884
  %v1886 = vpop.f32.mrb[0].mxu0
  %1887 = vmatprep.mubr.f32.mxu0 0.0
  %1888 = vmatmul.mubr.f32.gmra.mrb[0].mxu0 %v1692
  %v1889 = vpop.f32.mrb[0].mxu0
  %v1890 = vadd.f32 %v1636, %v1889
  %v1891 = vpop.f32.mrb[0].mxu0
  %1892 = vmatprep.mubr.f32.mxu0 0.0
  %1893 = vmatmul.mubr.f32.gmra.mrb[0].mxu0 %v1695
  %v1894 = vpop.f32.mrb[0].mxu0
  %v1895 = vadd.f32 %v1636, %v1894
  %v1896 = vpop.f32.mrb[0].mxu0
  %1897 = vmatprep.mubr.f32.mxu0 0.0
  %1898 = vmatmul.mubr.f32.gmra.mrb[0].mxu0 %v1698
  %v1899 = vpop.f32.mrb[0].mxu0
  %v1900 = vadd.f32 %v1636, %v1899
  %v1901 = vpop.f32.mrb[0].mxu0
  %1902 = vmatprep.mubr.f32.mxu0 0.0
  %1903 = vmatmul.mubr.f32.gmra.mrb[0].mxu0 %v1701
  %v1904 = vpop.f32.mrb[0].mxu0
  %v1905 = vadd.f32 %v1636, %v1904
  %v1906 = vpop.f32.mrb[0].mxu0
  %1907 = vmatprep.mubr.f32.mxu0 0.0
  %1908 = vmatmul.mubr.f32.gmra.mrb[0].mxu0 %v1704
  %v1909 = vpop.f32.mrb[0].mxu0
  %v1910 = vadd.f32 %v1636, %v1909
  %v1911 = vpop.f32.mrb[0].mxu0
  %1912 = vmatprep.mubr.f32.mxu0 0.0
  %1913 = vmatmul.mubr.f32.gmra.mrb[0].mxu0 %v1707
  %v1914 = vpop.f32.mrb[0].mxu0
  %v1915 = vadd.f32 %v1636, %v1914
  %v1916 = vpop.f32.mrb[0].mxu0
  %1917 = vmatprep.mubr.f32.mxu0 0.0
  %1918 = vmatmul.mubr.f32.gmra.mrb[0].mxu0 %v1710
  %v1919 = vpop.f32.mrb[0].mxu0
  %v1920 = vadd.f32 %v1636, %v1919
  %v1921 = vpop.f32.mrb[0].mxu0
  %1922 = vmatprep.mubr.f32.mxu0 0.0
  %1923 = vmatmul.mubr.f32.gmra.mrb[0].mxu0 %v1713
  %v1924 = vpop.f32.mrb[0].mxu0
  %v1925 = vadd.f32 %v1636, %v1924
  %v1926 = vpop.f32.mrb[0].mxu0
  %1927 = vmatprep.mubr.f32.mxu0 0.0
  %1928 = vmatmul.mubr.f32.gmra.mrb[0].mxu0 %v1716
  %v1929 = vpop.f32.mrb[0].mxu0
  %v1930 = vadd.f32 %v1636, %v1929
  %v1931 = vpop.f32.mrb[0].mxu0
  %1932 = vmatprep.mubr.f32.mxu0 0.0
  %1933 = vmatmul.mubr.f32.gmra.mrb[0].mxu0 %v1719
  %v1934 = vpop.f32.mrb[0].mxu0
  %v1935 = vadd.f32 %v1636, %v1934
  %v1936 = vpop.f32.mrb[0].mxu0
  %1937 = vmatprep.mubr.f32.mxu0 0.0
  %1938 = vmatmul.mubr.f32.gmra.mrb[0].mxu0 %v1722
  %v1939 = vpop.f32.mrb[0].mxu0
  %v1940 = vadd.f32 %v1636, %v1939
  %v1941 = vpop.f32.mrb[0].mxu0
  %1942 = vmatprep.mubr.f32.mxu0 0.0
  %1943 = vmatmul.mubr.f32.gmra.mrb[0].mxu0 %v1725
  %v1944 = vpop.f32.mrb[0].mxu0
  %v1945 = vadd.f32 %v1636, %v1944
  %v1946 = vpop.f32.mrb[0].mxu0
  %1947 = vmatprep.mubr.f32.mxu0 0.0
  %1948 = vmatmul.mubr.f32.gmra.mrb[0].mxu0 %v1728
  %v1949 = vpop.f32.mrb[0].mxu0
  %v1950 = vadd.f32 %v1636, %v1949
  %v1951 = vpop.f32.mrb[0].mxu0
  %1952 = vmatprep.mubr.f32.mxu0 0.0
  %1953 = vmatmul.mubr.f32.gmra.mrb[0].mxu0 %v1731
  %v1954 = vpop.f32.mrb[0].mxu0
  %v1955 = vadd.f32 %v1636, %v1954
  %v1956 = vpop.f32.mrb[0].mxu0
  %1957 = vdwg.mxu0
  %vm1958 = vcmp.gt.f32.partialorder %v1800, 0.0
  %vm1959 = vcmp.gt.f32.partialorder %v1805, 0.0
  %vm1960 = vcmp.gt.f32.partialorder %v1810, 0.0
  %vm1961 = vcmp.gt.f32.partialorder %v1815, 0.0
  %vm1962 = vcmp.gt.f32.partialorder %v1820, 0.0
  %vm1963 = vcmp.gt.f32.partialorder %v1825, 0.0
  %vm1964 = vcmp.gt.f32.partialorder %v1830, 0.0
  %vm1965 = vcmp.gt.f32.partialorder %v1835, 0.0
  %vm1966 = vcmp.gt.f32.partialorder %v1840, 0.0
  %vm1967 = vcmp.gt.f32.partialorder %v1845, 0.0
  %vm1968 = vcmp.gt.f32.partialorder %v1850, 0.0
  %vm1969 = vcmp.gt.f32.partialorder %v1855, 0.0
  %vm1970 = vcmp.gt.f32.partialorder %v1860, 0.0
  %vm1971 = vcmp.gt.f32.partialorder %v1865, 0.0
  %vm1972 = vcmp.gt.f32.partialorder %v1870, 0.0
  %vm1973 = vcmp.gt.f32.partialorder %v1875, 0.0
  %vm1974 = vcmp.gt.f32.partialorder %v1880, 0.0
  %vm1975 = vcmp.gt.f32.partialorder %v1885, 0.0
  %vm1976 = vcmp.gt.f32.partialorder %v1890, 0.0
  %vm1977 = vcmp.gt.f32.partialorder %v1895, 0.0
  %vm1978 = vcmp.gt.f32.partialorder %v1900, 0.0
  %vm1979 = vcmp.gt.f32.partialorder %v1905, 0.0
  %vm1980 = vcmp.gt.f32.partialorder %v1910, 0.0
  %vm1981 = vcmp.gt.f32.partialorder %v1915, 0.0
  %vm1982 = vcmp.gt.f32.partialorder %v1920, 0.0
  %vm1983 = vcmp.gt.f32.partialorder %v1925, 0.0
  %vm1984 = vcmp.gt.f32.partialorder %v1930, 0.0
  %vm1985 = vcmp.gt.f32.partialorder %v1935, 0.0
  %vm1986 = vcmp.gt.f32.partialorder %v1940, 0.0
  %vm1987 = vcmp.gt.f32.partialorder %v1945, 0.0
  %vm1988 = vcmp.gt.f32.partialorder %v1950, 0.0
  %vm1989 = vcmp.gt.f32.partialorder %v1955, 0.0
  %v1990 = vmul.f32 %v1800, 0.01
  %v1991 = vmul.f32 %v1805, 0.01
  %v1992 = vmul.f32 %v1810, 0.01
  %v1993 = vmul.f32 %v1815, 0.01
  %v1994 = vmul.f32 %v1820, 0.01
  %v1995 = vmul.f32 %v1825, 0.01
  %v1996 = vmul.f32 %v1830, 0.01
  %v1997 = vmul.f32 %v1835, 0.01
  %v1998 = vmul.f32 %v1840, 0.01
  %v1999 = vmul.f32 %v1845, 0.01
  %v2000 = vmul.f32 %v1850, 0.01
  %v2001 = vmul.f32 %v1855, 0.01
  %v2002 = vmul.f32 %v1860, 0.01
  %v2003 = vmul.f32 %v1865, 0.01
  %v2004 = vmul.f32 %v1870, 0.01
  %v2005 = vmul.f32 %v1875, 0.01
  %v2006 = vmul.f32 %v1880, 0.01
  %v2007 = vmul.f32 %v1885, 0.01
  %v2008 = vmul.f32 %v1890, 0.01
  %v2009 = vmul.f32 %v1895, 0.01
  %v2010 = vmul.f32 %v1900, 0.01
  %v2011 = vmul.f32 %v1905, 0.01
  %v2012 = vmul.f32 %v1910, 0.01
  %v2013 = vmul.f32 %v1915, 0.01
  %v2014 = vmul.f32 %v1920, 0.01
  %v2015 = vmul.f32 %v1925, 0.01
  %v2016 = vmul.f32 %v1930, 0.01
  %v2017 = vmul.f32 %v1935, 0.01
  %v2018 = vmul.f32 %v1940, 0.01
  %v2019 = vmul.f32 %v1945, 0.01
  %v2020 = vmul.f32 %v1950, 0.01
  %v2021 = vmul.f32 %v1955, 0.01
  %v2022 = vsel %vm1958, %v1800, %v1990
  %v2023 = vsel %vm1959, %v1805, %v1991
  %v2024 = vsel %vm1960, %v1810, %v1992
  %v2025 = vsel %vm1961, %v1815, %v1993
  %v2026 = vsel %vm1962, %v1820, %v1994
  %v2027 = vsel %vm1963, %v1825, %v1995
  %v2028 = vsel %vm1964, %v1830, %v1996
  %v2029 = vsel %vm1965, %v1835, %v1997
  %v2030 = vsel %vm1966, %v1840, %v1998
  %v2031 = vsel %vm1967, %v1845, %v1999
  %v2032 = vsel %vm1968, %v1850, %v2000
  %v2033 = vsel %vm1969, %v1855, %v2001
  %v2034 = vsel %vm1970, %v1860, %v2002
  %v2035 = vsel %vm1971, %v1865, %v2003
  %v2036 = vsel %vm1972, %v1870, %v2004
  %v2037 = vsel %vm1973, %v1875, %v2005
  %v2038 = vsel %vm1974, %v1880, %v2006
  %v2039 = vsel %vm1975, %v1885, %v2007
  %v2040 = vsel %vm1976, %v1890, %v2008
  %v2041 = vsel %vm1977, %v1895, %v2009
  %v2042 = vsel %vm1978, %v1900, %v2010
  %v2043 = vsel %vm1979, %v1905, %v2011
  %v2044 = vsel %vm1980, %v1910, %v2012
  %v2045 = vsel %vm1981, %v1915, %v2013
  %v2046 = vsel %vm1982, %v1920, %v2014
  %v2047 = vsel %vm1983, %v1925, %v2015
  %v2048 = vsel %vm1984, %v1930, %v2016
  %v2049 = vsel %vm1985, %v1935, %v2017
  %v2050 = vsel %vm1986, %v1940, %v2018
  %v2051 = vsel %vm1987, %v1945, %v2019
  %v2052 = vsel %vm1988, %v1950, %v2020
  %v2053 = vsel %vm1989, %v1955, %v2021
  %v2054 = vld [vmem:[%s5 + $0x280] sm:$0xff]
  %v2055 = vld [vmem:[%s5 + $0x288] sm:$0xff]
  %v2056 = vld [vmem:[%s5 + $0x290] sm:$0xff]
  %v2057 = vld [vmem:[%s5 + $0x298] sm:$0xff]
  %v2058 = vlaneseq
  %v2059 = vshrl.u32 %v2058, 7
  %v2060 = vsub.s32 0, %v2059
  %v2061 = vrot.slane %v42, %v2060
  %v2063 = vsel %vm534, %v2022, 0
  %v2066 = vsel %vm534, %v2023, 0
  %v2069 = vsel %vm534, %v2024, 0
  %v2072 = vsel %vm534, %v2025, 0
  %v2075 = vsel %vm534, %v2026, 0
  %v2078 = vsel %vm534, %v2027, 0
  %v2081 = vsel %vm534, %v2028, 0
  %v2084 = vsel %vm534, %v2029, 0
  %v2087 = vsel %vm534, %v2030, 0
  %v2090 = vsel %vm534, %v2031, 0
  %v2093 = vsel %vm534, %v2032, 0
  %v2096 = vsel %vm534, %v2033, 0
  %v2099 = vsel %vm534, %v2034, 0
  %v2102 = vsel %vm534, %v2035, 0
  %v2105 = vsel %vm534, %v2036, 0
  %v2108 = vsel %vm534, %v2037, 0
  %v2111 = vsel %vm534, %v2038, 0
  %v2114 = vsel %vm534, %v2039, 0
  %v2117 = vsel %vm534, %v2040, 0
  %v2120 = vsel %vm534, %v2041, 0
  %v2123 = vsel %vm534, %v2042, 0
  %v2126 = vsel %vm534, %v2043, 0
  %v2129 = vsel %vm534, %v2044, 0
  %v2132 = vsel %vm534, %v2045, 0
  %v2135 = vsel %vm534, %v2046, 0
  %v2138 = vsel %vm534, %v2047, 0
  %v2141 = vsel %vm534, %v2048, 0
  %v2144 = vsel %vm534, %v2049, 0
  %v2147 = vsel %vm534, %v2050, 0
  %v2150 = vsel %vm534, %v2051, 0
  %v2153 = vsel %vm534, %v2052, 0
  %v2156 = vsel %vm534, %v2053, 0
  %2158 = vmatprep.subr.mxu0 0.0
  %2159 = vmatpush1.msra.mxu0 %v2054
  %2160 = vmatprep.subr.mxu0 0.0
  %2161 = vmatpush1.msra.mxu0 %v2055
  %2162 = vmatprep.subr.mxu0 0.0
  %2163 = vmatpush1.msra.mxu0 %v2056
  %2164 = vmatprep.subr.mxu0 0.0
  %2165 = vmatpush1.msra.mxu0 %v2057
  %2166 = vmatprep.subr.mxu0 0.0
  %2167 = vmatpush1.msra.mxu0 0.0
  %2168 = vmatprep.subr.mxu0 0.0
  %2169 = vmatpush1.msra.mxu0 0.0
  %2170 = vmatprep.subr.mxu0 0.0
  %2171 = vmatpush1.msra.mxu0 0.0
  %2172 = vmatprep.subr.mxu0 0.0
  %2173 = vmatpush1.msra.mxu0 0.0
  %2174 = vmatprep.subr.mxu0 0.0
  %2175 = vmatpush1.msra.mxu0 0.0
  %2176 = vmatprep.subr.mxu0 0.0
  %2177 = vmatpush1.msra.mxu0 0.0
  %2178 = vmatprep.subr.mxu0 0.0
  %2179 = vmatpush1.msra.mxu0 0.0
  %2180 = vmatprep.subr.mxu0 0.0
  %2181 = vmatpush1.msra.mxu0 0.0
  %2182 = vmatprep.subr.mxu0 0.0
  %2183 = vmatpush1.msra.mxu0 0.0
  %2184 = vmatprep.subr.mxu0 0.0
  %2185 = vmatpush1.msra.mxu0 0.0
  %2186 = vmatprep.subr.mxu0 0.0
  %2187 = vmatpush1.msra.mxu0 0.0
  %2188 = vmatprep.subr.mxu0 0.0
  %2189 = vmatpush1.msra.mxu0 0.0
  %2190 = vmatprep.subr.mxu0 0.0
  %2191 = vmatpush1.msra.mxu0 0.0
  %2192 = vmatprep.subr.mxu0 0.0
  %2193 = vmatpush1.msra.mxu0 0.0
  %2194 = vmatprep.subr.mxu0 0.0
  %2195 = vmatpush1.msra.mxu0 0.0
  %2196 = vmatprep.subr.mxu0 0.0
  %2197 = vmatpush1.msra.mxu0 0.0
  %2198 = vmatprep.subr.mxu0 0.0
  %2199 = vmatpush1.msra.mxu0 0.0
  %2200 = vmatprep.subr.mxu0 0.0
  %2201 = vmatpush1.msra.mxu0 0.0
  %2202 = vmatprep.subr.mxu0 0.0
  %2203 = vmatpush1.msra.mxu0 0.0
  %2204 = vmatprep.subr.mxu0 0.0
  %2205 = vmatpush1.msra.mxu0 0.0
  %2206 = vmatprep.subr.mxu0 0.0
  %2207 = vmatpush1.msra.mxu0 0.0
  %2208 = vmatprep.subr.mxu0 0.0
  %2209 = vmatpush1.msra.mxu0 0.0
  %2210 = vmatprep.subr.mxu0 0.0
  %2211 = vmatpush1.msra.mxu0 0.0
  %2212 = vmatprep.subr.mxu0 0.0
  %2213 = vmatpush1.msra.mxu0 0.0
  %2214 = vmatprep.subr.mxu0 0.0
  %2215 = vmatpush1.msra.mxu0 0.0
  %2216 = vmatprep.subr.mxu0 0.0
  %2217 = vmatpush1.msra.mxu0 0.0
  %2218 = vmatprep.subr.mxu0 0.0
  %2219 = vmatpush1.msra.mxu0 0.0
  %2220 = vmatprep.subr.mxu0 0.0
  %2221 = vmatpush1.msra.mxu0 0.0
  %2222 = vmatprep.mubr.f32.mxu0 0.0
  %2223 = vmatmul.mubr.f32.gmra.mrb[0].mxu0 %v2063
  %v2224 = vpop.f32.mrb[0].mxu0
  %v2225 = vadd.f32 %v2061, %v2224
  %v2226 = vpop.f32.mrb[0].mxu0
  %2227 = vmatprep.mubr.f32.mxu0 0.0
  %2228 = vmatmul.mubr.f32.gmra.mrb[0].mxu0 %v2066
  %v2229 = vpop.f32.mrb[0].mxu0
  %v2230 = vadd.f32 %v2061, %v2229
  %v2231 = vpop.f32.mrb[0].mxu0
  %2232 = vmatprep.mubr.f32.mxu0 0.0
  %2233 = vmatmul.mubr.f32.gmra.mrb[0].mxu0 %v2069
  %v2234 = vpop.f32.mrb[0].mxu0
  %v2235 = vadd.f32 %v2061, %v2234
  %v2236 = vpop.f32.mrb[0].mxu0
  %2237 = vmatprep.mubr.f32.mxu0 0.0
  %2238 = vmatmul.mubr.f32.gmra.mrb[0].mxu0 %v2072
  %v2239 = vpop.f32.mrb[0].mxu0
  %v2240 = vadd.f32 %v2061, %v2239
  %v2241 = vpop.f32.mrb[0].mxu0
  %2242 = vmatprep.mubr.f32.mxu0 0.0
  %2243 = vmatmul.mubr.f32.gmra.mrb[0].mxu0 %v2075
  %v2244 = vpop.f32.mrb[0].mxu0
  %v2245 = vadd.f32 %v2061, %v2244
  %v2246 = vpop.f32.mrb[0].mxu0
  %2247 = vmatprep.mubr.f32.mxu0 0.0
  %2248 = vmatmul.mubr.f32.gmra.mrb[0].mxu0 %v2078
  %v2249 = vpop.f32.mrb[0].mxu0
  %v2250 = vadd.f32 %v2061, %v2249
  %v2251 = vpop.f32.mrb[0].mxu0
  %2252 = vmatprep.mubr.f32.mxu0 0.0
  %2253 = vmatmul.mubr.f32.gmra.mrb[0].mxu0 %v2081
  %v2254 = vpop.f32.mrb[0].mxu0
  %v2255 = vadd.f32 %v2061, %v2254
  %v2256 = vpop.f32.mrb[0].mxu0
  %2257 = vmatprep.mubr.f32.mxu0 0.0
  %2258 = vmatmul.mubr.f32.gmra.mrb[0].mxu0 %v2084
  %v2259 = vpop.f32.mrb[0].mxu0
  %v2260 = vadd.f32 %v2061, %v2259
  %v2261 = vpop.f32.mrb[0].mxu0
  %2262 = vmatprep.mubr.f32.mxu0 0.0
  %2263 = vmatmul.mubr.f32.gmra.mrb[0].mxu0 %v2087
  %v2264 = vpop.f32.mrb[0].mxu0
  %v2265 = vadd.f32 %v2061, %v2264
  %v2266 = vpop.f32.mrb[0].mxu0
  %2267 = vmatprep.mubr.f32.mxu0 0.0
  %2268 = vmatmul.mubr.f32.gmra.mrb[0].mxu0 %v2090
  %v2269 = vpop.f32.mrb[0].mxu0
  %v2270 = vadd.f32 %v2061, %v2269
  %v2271 = vpop.f32.mrb[0].mxu0
  %2272 = vmatprep.mubr.f32.mxu0 0.0
  %2273 = vmatmul.mubr.f32.gmra.mrb[0].mxu0 %v2093
  %v2274 = vpop.f32.mrb[0].mxu0
  %v2275 = vadd.f32 %v2061, %v2274
  %v2276 = vpop.f32.mrb[0].mxu0
  %2277 = vmatprep.mubr.f32.mxu0 0.0
  %2278 = vmatmul.mubr.f32.gmra.mrb[0].mxu0 %v2096
  %v2279 = vpop.f32.mrb[0].mxu0
  %v2280 = vadd.f32 %v2061, %v2279
  %v2281 = vpop.f32.mrb[0].mxu0
  %2282 = vmatprep.mubr.f32.mxu0 0.0
  %2283 = vmatmul.mubr.f32.gmra.mrb[0].mxu0 %v2099
  %v2284 = vpop.f32.mrb[0].mxu0
  %v2285 = vadd.f32 %v2061, %v2284
  %v2286 = vpop.f32.mrb[0].mxu0
  %2287 = vmatprep.mubr.f32.mxu0 0.0
  %2288 = vmatmul.mubr.f32.gmra.mrb[0].mxu0 %v2102
  %v2289 = vpop.f32.mrb[0].mxu0
  %v2290 = vadd.f32 %v2061, %v2289
  %v2291 = vpop.f32.mrb[0].mxu0
  %2292 = vmatprep.mubr.f32.mxu0 0.0
  %2293 = vmatmul.mubr.f32.gmra.mrb[0].mxu0 %v2105
  %v2294 = vpop.f32.mrb[0].mxu0
  %v2295 = vadd.f32 %v2061, %v2294
  %v2296 = vpop.f32.mrb[0].mxu0
  %2297 = vmatprep.mubr.f32.mxu0 0.0
  %2298 = vmatmul.mubr.f32.gmra.mrb[0].mxu0 %v2108
  %v2299 = vpop.f32.mrb[0].mxu0
  %v2300 = vadd.f32 %v2061, %v2299
  %v2301 = vpop.f32.mrb[0].mxu0
  %2302 = vmatprep.mubr.f32.mxu0 0.0
  %2303 = vmatmul.mubr.f32.gmra.mrb[0].mxu0 %v2111
  %v2304 = vpop.f32.mrb[0].mxu0
  %v2305 = vadd.f32 %v2061, %v2304
  %v2306 = vpop.f32.mrb[0].mxu0
  %2307 = vmatprep.mubr.f32.mxu0 0.0
  %2308 = vmatmul.mubr.f32.gmra.mrb[0].mxu0 %v2114
  %v2309 = vpop.f32.mrb[0].mxu0
  %v2310 = vadd.f32 %v2061, %v2309
  %v2311 = vpop.f32.mrb[0].mxu0
  %2312 = vmatprep.mubr.f32.mxu0 0.0
  %2313 = vmatmul.mubr.f32.gmra.mrb[0].mxu0 %v2117
  %v2314 = vpop.f32.mrb[0].mxu0
  %v2315 = vadd.f32 %v2061, %v2314
  %v2316 = vpop.f32.mrb[0].mxu0
  %2317 = vmatprep.mubr.f32.mxu0 0.0
  %2318 = vmatmul.mubr.f32.gmra.mrb[0].mxu0 %v2120
  %v2319 = vpop.f32.mrb[0].mxu0
  %v2320 = vadd.f32 %v2061, %v2319
  %v2321 = vpop.f32.mrb[0].mxu0
  %2322 = vmatprep.mubr.f32.mxu0 0.0
  %2323 = vmatmul.mubr.f32.gmra.mrb[0].mxu0 %v2123
  %v2324 = vpop.f32.mrb[0].mxu0
  %v2325 = vadd.f32 %v2061, %v2324
  %v2326 = vpop.f32.mrb[0].mxu0
  %2327 = vmatprep.mubr.f32.mxu0 0.0
  %2328 = vmatmul.mubr.f32.gmra.mrb[0].mxu0 %v2126
  %v2329 = vpop.f32.mrb[0].mxu0
  %v2330 = vadd.f32 %v2061, %v2329
  %v2331 = vpop.f32.mrb[0].mxu0
  %2332 = vmatprep.mubr.f32.mxu0 0.0
  %2333 = vmatmul.mubr.f32.gmra.mrb[0].mxu0 %v2129
  %v2334 = vpop.f32.mrb[0].mxu0
  %v2335 = vadd.f32 %v2061, %v2334
  %v2336 = vpop.f32.mrb[0].mxu0
  %2337 = vmatprep.mubr.f32.mxu0 0.0
  %2338 = vmatmul.mubr.f32.gmra.mrb[0].mxu0 %v2132
  %v2339 = vpop.f32.mrb[0].mxu0
  %v2340 = vadd.f32 %v2061, %v2339
  %v2341 = vpop.f32.mrb[0].mxu0
  %2342 = vmatprep.mubr.f32.mxu0 0.0
  %2343 = vmatmul.mubr.f32.gmra.mrb[0].mxu0 %v2135
  %v2344 = vpop.f32.mrb[0].mxu0
  %v2345 = vadd.f32 %v2061, %v2344
  %v2346 = vpop.f32.mrb[0].mxu0
  %2347 = vmatprep.mubr.f32.mxu0 0.0
  %2348 = vmatmul.mubr.f32.gmra.mrb[0].mxu0 %v2138
  %v2349 = vpop.f32.mrb[0].mxu0
  %v2350 = vadd.f32 %v2061, %v2349
  %v2351 = vpop.f32.mrb[0].mxu0
  %2352 = vmatprep.mubr.f32.mxu0 0.0
  %2353 = vmatmul.mubr.f32.gmra.mrb[0].mxu0 %v2141
  %v2354 = vpop.f32.mrb[0].mxu0
  %v2355 = vadd.f32 %v2061, %v2354
  %v2356 = vpop.f32.mrb[0].mxu0
  %2357 = vmatprep.mubr.f32.mxu0 0.0
  %2358 = vmatmul.mubr.f32.gmra.mrb[0].mxu0 %v2144
  %v2359 = vpop.f32.mrb[0].mxu0
  %v2360 = vadd.f32 %v2061, %v2359
  %v2361 = vpop.f32.mrb[0].mxu0
  %2362 = vmatprep.mubr.f32.mxu0 0.0
  %2363 = vmatmul.mubr.f32.gmra.mrb[0].mxu0 %v2147
  %v2364 = vpop.f32.mrb[0].mxu0
  %v2365 = vadd.f32 %v2061, %v2364
  %v2366 = vpop.f32.mrb[0].mxu0
  %2367 = vmatprep.mubr.f32.mxu0 0.0
  %2368 = vmatmul.mubr.f32.gmra.mrb[0].mxu0 %v2150
  %v2369 = vpop.f32.mrb[0].mxu0
  %v2370 = vadd.f32 %v2061, %v2369
  %v2371 = vpop.f32.mrb[0].mxu0
  %2372 = vmatprep.mubr.f32.mxu0 0.0
  %2373 = vmatmul.mubr.f32.gmra.mrb[0].mxu0 %v2153
  %v2374 = vpop.f32.mrb[0].mxu0
  %v2375 = vadd.f32 %v2061, %v2374
  %v2376 = vpop.f32.mrb[0].mxu0
  %2377 = vmatprep.mubr.f32.mxu0 0.0
  %2378 = vmatmul.mubr.f32.gmra.mrb[0].mxu0 %v2156
  %v2379 = vpop.f32.mrb[0].mxu0
  %v2380 = vadd.f32 %v2061, %v2379
  %v2381 = vpop.f32.mrb[0].mxu0
  %2382 = vdwg.mxu0
  %v2383 = vxor.u32 %v2225, 2147483648
  %v2384 = vxor.u32 %v2230, 2147483648
  %v2385 = vxor.u32 %v2235, 2147483648
  %v2386 = vxor.u32 %v2240, 2147483648
  %v2387 = vxor.u32 %v2245, 2147483648
  %v2388 = vxor.u32 %v2250, 2147483648
  %v2389 = vxor.u32 %v2255, 2147483648
  %v2390 = vxor.u32 %v2260, 2147483648
  %v2391 = vxor.u32 %v2265, 2147483648
  %v2392 = vxor.u32 %v2270, 2147483648
  %v2393 = vxor.u32 %v2275, 2147483648
  %v2394 = vxor.u32 %v2280, 2147483648
  %v2395 = vxor.u32 %v2285, 2147483648
  %v2396 = vxor.u32 %v2290, 2147483648
  %v2397 = vxor.u32 %v2295, 2147483648
  %v2398 = vxor.u32 %v2300, 2147483648
  %v2399 = vxor.u32 %v2305, 2147483648
  %v2400 = vxor.u32 %v2310, 2147483648
  %v2401 = vxor.u32 %v2315, 2147483648
  %v2402 = vxor.u32 %v2320, 2147483648
  %v2403 = vxor.u32 %v2325, 2147483648
  %v2404 = vxor.u32 %v2330, 2147483648
  %v2405 = vxor.u32 %v2335, 2147483648
  %v2406 = vxor.u32 %v2340, 2147483648
  %v2407 = vxor.u32 %v2345, 2147483648
  %v2408 = vxor.u32 %v2350, 2147483648
  %v2409 = vxor.u32 %v2355, 2147483648
  %v2410 = vxor.u32 %v2360, 2147483648
  %v2411 = vxor.u32 %v2365, 2147483648
  %v2412 = vxor.u32 %v2370, 2147483648
  %v2413 = vxor.u32 %v2375, 2147483648
  %v2414 = vxor.u32 %v2380, 2147483648
  %v2415 = vmul.f32 %v2383, 1.442695
  %v2416 = vpow.pop %v2415
  %v2417 = vmul.f32 %v2384, 1.442695
  %v2418 = vpow.pop %v2417
  %v2419 = vmul.f32 %v2385, 1.442695
  %v2420 = vpow.pop %v2419
  %v2421 = vmul.f32 %v2386, 1.442695
  %v2422 = vpow.pop %v2421
  %v2423 = vmul.f32 %v2387, 1.442695
  %v2424 = vpow.pop %v2423
  %v2425 = vmul.f32 %v2388, 1.442695
  %v2426 = vpow.pop %v2425
  %v2427 = vmul.f32 %v2389, 1.442695
  %v2428 = vpow.pop %v2427
  %v2429 = vmul.f32 %v2390, 1.442695
  %v2430 = vpow.pop %v2429
  %v2431 = vmul.f32 %v2391, 1.442695
  %v2432 = vpow.pop %v2431
  %v2433 = vmul.f32 %v2392, 1.442695
  %v2434 = vpow.pop %v2433
  %v2435 = vmul.f32 %v2393, 1.442695
  %v2436 = vpow.pop %v2435
  %v2437 = vmul.f32 %v2394, 1.442695
  %v2438 = vpow.pop %v2437
  %v2439 = vmul.f32 %v2395, 1.442695
  %v2440 = vpow.pop %v2439
  %v2441 = vmul.f32 %v2396, 1.442695
  %v2442 = vpow.pop %v2441
  %v2443 = vmul.f32 %v2397, 1.442695
  %v2444 = vpow.pop %v2443
  %v2445 = vmul.f32 %v2398, 1.442695
  %v2446 = vpow.pop %v2445
  %v2447 = vmul.f32 %v2399, 1.442695
  %v2448 = vpow.pop %v2447
  %v2449 = vmul.f32 %v2400, 1.442695
  %v2450 = vpow.pop %v2449
  %v2451 = vmul.f32 %v2401, 1.442695
  %v2452 = vpow.pop %v2451
  %v2453 = vmul.f32 %v2402, 1.442695
  %v2454 = vpow.pop %v2453
  %v2455 = vmul.f32 %v2403, 1.442695
  %v2456 = vpow.pop %v2455
  %v2457 = vmul.f32 %v2404, 1.442695
  %v2458 = vpow.pop %v2457
  %v2459 = vmul.f32 %v2405, 1.442695
  %v2460 = vpow.pop %v2459
  %v2461 = vmul.f32 %v2406, 1.442695
  %v2462 = vpow.pop %v2461
  %v2463 = vmul.f32 %v2407, 1.442695
  %v2464 = vpow.pop %v2463
  %v2465 = vmul.f32 %v2408, 1.442695
  %v2466 = vpow.pop %v2465
  %v2467 = vmul.f32 %v2409, 1.442695
  %v2468 = vpow.pop %v2467
  %v2469 = vmul.f32 %v2410, 1.442695
  %v2470 = vpow.pop %v2469
  %v2471 = vmul.f32 %v2411, 1.442695
  %v2472 = vpow.pop %v2471
  %v2473 = vmul.f32 %v2412, 1.442695
  %v2474 = vpow.pop %v2473
  %v2475 = vmul.f32 %v2413, 1.442695
  %v2476 = vpow.pop %v2475
  %v2477 = vmul.f32 %v2414, 1.442695
  %v2478 = vpow.pop %v2477
  %v2479 = vadd.f32 %v2416, 1.0
  %v2480 = vadd.f32 %v2418, 1.0
  %v2481 = vadd.f32 %v2420, 1.0
  %v2482 = vadd.f32 %v2422, 1.0
  %v2483 = vadd.f32 %v2424, 1.0
  %v2484 = vadd.f32 %v2426, 1.0
  %v2485 = vadd.f32 %v2428, 1.0
  %v2486 = vadd.f32 %v2430, 1.0
  %v2487 = vadd.f32 %v2432, 1.0
  %v2488 = vadd.f32 %v2434, 1.0
  %v2489 = vadd.f32 %v2436, 1.0
  %v2490 = vadd.f32 %v2438, 1.0
  %v2491 = vadd.f32 %v2440, 1.0
  %v2492 = vadd.f32 %v2442, 1.0
  %v2493 = vadd.f32 %v2444, 1.0
  %v2494 = vadd.f32 %v2446, 1.0
  %v2495 = vadd.f32 %v2448, 1.0
  %v2496 = vadd.f32 %v2450, 1.0
  %v2497 = vadd.f32 %v2452, 1.0
  %v2498 = vadd.f32 %v2454, 1.0
  %v2499 = vadd.f32 %v2456, 1.0
  %v2500 = vadd.f32 %v2458, 1.0
  %v2501 = vadd.f32 %v2460, 1.0
  %v2502 = vadd.f32 %v2462, 1.0
  %v2503 = vadd.f32 %v2464, 1.0
  %v2504 = vadd.f32 %v2466, 1.0
  %v2505 = vadd.f32 %v2468, 1.0
  %v2506 = vadd.f32 %v2470, 1.0
  %v2507 = vadd.f32 %v2472, 1.0
  %v2508 = vadd.f32 %v2474, 1.0
  %v2509 = vadd.f32 %v2476, 1.0
  %v2510 = vadd.f32 %v2478, 1.0
  %v2511 = vrcp.pop %v2479
  %v2512 = vmul.f32 1.0, %v2511
  %v2513 = vrcp.pop %v2480
  %v2514 = vmul.f32 1.0, %v2513
  %v2515 = vrcp.pop %v2481
  %v2516 = vmul.f32 1.0, %v2515
  %v2517 = vrcp.pop %v2482
  %v2518 = vmul.f32 1.0, %v2517
  %v2519 = vrcp.pop %v2483
  %v2520 = vmul.f32 1.0, %v2519
  %v2521 = vrcp.pop %v2484
  %v2522 = vmul.f32 1.0, %v2521
  %v2523 = vrcp.pop %v2485
  %v2524 = vmul.f32 1.0, %v2523
  %v2525 = vrcp.pop %v2486
  %v2526 = vmul.f32 1.0, %v2525
  %v2527 = vrcp.pop %v2487
  %v2528 = vmul.f32 1.0, %v2527
  %v2529 = vrcp.pop %v2488
  %v2530 = vmul.f32 1.0, %v2529
  %v2531 = vrcp.pop %v2489
  %v2532 = vmul.f32 1.0, %v2531
  %v2533 = vrcp.pop %v2490
  %v2534 = vmul.f32 1.0, %v2533
  %v2535 = vrcp.pop %v2491
  %v2536 = vmul.f32 1.0, %v2535
  %v2537 = vrcp.pop %v2492
  %v2538 = vmul.f32 1.0, %v2537
  %v2539 = vrcp.pop %v2493
  %v2540 = vmul.f32 1.0, %v2539
  %v2541 = vrcp.pop %v2494
  %v2542 = vmul.f32 1.0, %v2541
  %v2543 = vrcp.pop %v2495
  %v2544 = vmul.f32 1.0, %v2543
  %v2545 = vrcp.pop %v2496
  %v2546 = vmul.f32 1.0, %v2545
  %v2547 = vrcp.pop %v2497
  %v2548 = vmul.f32 1.0, %v2547
  %v2549 = vrcp.pop %v2498
  %v2550 = vmul.f32 1.0, %v2549
  %v2551 = vrcp.pop %v2499
  %v2552 = vmul.f32 1.0, %v2551
  %v2553 = vrcp.pop %v2500
  %v2554 = vmul.f32 1.0, %v2553
  %v2555 = vrcp.pop %v2501
  %v2556 = vmul.f32 1.0, %v2555
  %v2557 = vrcp.pop %v2502
  %v2558 = vmul.f32 1.0, %v2557
  %v2559 = vrcp.pop %v2503
  %v2560 = vmul.f32 1.0, %v2559
  %v2561 = vrcp.pop %v2504
  %v2562 = vmul.f32 1.0, %v2561
  %v2563 = vrcp.pop %v2505
  %v2564 = vmul.f32 1.0, %v2563
  %v2565 = vrcp.pop %v2506
  %v2566 = vmul.f32 1.0, %v2565
  %v2567 = vrcp.pop %v2507
  %v2568 = vmul.f32 1.0, %v2567
  %v2569 = vrcp.pop %v2508
  %v2570 = vmul.f32 1.0, %v2569
  %v2571 = vrcp.pop %v2509
  %v2572 = vmul.f32 1.0, %v2571
  %v2573 = vrcp.pop %v2510
  %v2574 = vmul.f32 1.0, %v2573
  %2607 = vrot.lane.b32.xlu0 %v2512, 127
  %v2608 = vpop.permute.xlu0 %2607
  %2609 = vrot.lane.b32.xlu0 %v2514, 127
  %v2610 = vpop.permute.xlu0 %2609
  %2611 = vrot.lane.b32.xlu0 %v2516, 127
  %v2612 = vpop.permute.xlu0 %2611
  %2613 = vrot.lane.b32.xlu0 %v2518, 127
  %v2614 = vpop.permute.xlu0 %2613
  %2615 = vrot.lane.b32.xlu0 %v2520, 127
  %v2616 = vpop.permute.xlu0 %2615
  %2617 = vrot.lane.b32.xlu0 %v2522, 127
  %v2618 = vpop.permute.xlu0 %2617
  %2619 = vrot.lane.b32.xlu0 %v2524, 127
  %v2620 = vpop.permute.xlu0 %2619
  %2621 = vrot.lane.b32.xlu0 %v2526, 127
  %v2622 = vpop.permute.xlu0 %2621
  %2623 = vrot.lane.b32.xlu0 %v2528, 127
  %v2624 = vpop.permute.xlu0 %2623
  %2625 = vrot.lane.b32.xlu0 %v2530, 127
  %v2626 = vpop.permute.xlu0 %2625
  %2627 = vrot.lane.b32.xlu0 %v2532, 127
  %v2628 = vpop.permute.xlu0 %2627
  %2629 = vrot.lane.b32.xlu0 %v2534, 127
  %v2630 = vpop.permute.xlu0 %2629
  %2631 = vrot.lane.b32.xlu0 %v2536, 127
  %v2632 = vpop.permute.xlu0 %2631
  %2633 = vrot.lane.b32.xlu0 %v2538, 127
  %v2634 = vpop.permute.xlu0 %2633
  %2635 = vrot.lane.b32.xlu0 %v2540, 127
  %v2636 = vpop.permute.xlu0 %2635
  %2637 = vrot.lane.b32.xlu0 %v2542, 127
  %v2638 = vpop.permute.xlu0 %2637
  %2639 = vrot.lane.b32.xlu0 %v2544, 127
  %v2640 = vpop.permute.xlu0 %2639
  %2641 = vrot.lane.b32.xlu0 %v2546, 127
  %v2642 = vpop.permute.xlu0 %2641
  %2643 = vrot.lane.b32.xlu0 %v2548, 127
  %v2644 = vpop.permute.xlu0 %2643
  %2645 = vrot.lane.b32.xlu0 %v2550, 127
  %v2646 = vpop.permute.xlu0 %2645
  %2647 = vrot.lane.b32.xlu0 %v2552, 127
  %v2648 = vpop.permute.xlu0 %2647
  %2649 = vrot.lane.b32.xlu0 %v2554, 127
  %v2650 = vpop.permute.xlu0 %2649
  %2651 = vrot.lane.b32.xlu0 %v2556, 127
  %v2652 = vpop.permute.xlu0 %2651
  %2653 = vrot.lane.b32.xlu0 %v2558, 127
  %v2654 = vpop.permute.xlu0 %2653
  %2655 = vrot.lane.b32.xlu0 %v2560, 127
  %v2656 = vpop.permute.xlu0 %2655
  %2657 = vrot.lane.b32.xlu0 %v2562, 127
  %v2658 = vpop.permute.xlu0 %2657
  %2659 = vrot.lane.b32.xlu0 %v2564, 127
  %v2660 = vpop.permute.xlu0 %2659
  %2661 = vrot.lane.b32.xlu0 %v2566, 127
  %v2662 = vpop.permute.xlu0 %2661
  %2663 = vrot.lane.b32.xlu0 %v2568, 127
  %v2664 = vpop.permute.xlu0 %2663
  %2665 = vrot.lane.b32.xlu0 %v2570, 127
  %v2666 = vpop.permute.xlu0 %2665
  %2667 = vrot.lane.b32.xlu0 %v2572, 127
  %v2668 = vpop.permute.xlu0 %2667
  %2669 = vrot.lane.b32.xlu0 %v2574, 127
  %v2670 = vpop.permute.xlu0 %2669
  %v2703 = vmul.f32 %v2225, %v2608
  %v2704 = vmul.f32 %v2230, %v2610
  %v2705 = vmul.f32 %v2235, %v2612
  %v2706 = vmul.f32 %v2240, %v2614
  %v2707 = vmul.f32 %v2245, %v2616
  %v2708 = vmul.f32 %v2250, %v2618
  %v2709 = vmul.f32 %v2255, %v2620
  %v2710 = vmul.f32 %v2260, %v2622
  %v2711 = vmul.f32 %v2265, %v2624
  %v2712 = vmul.f32 %v2270, %v2626
  %v2713 = vmul.f32 %v2275, %v2628
  %v2714 = vmul.f32 %v2280, %v2630
  %v2715 = vmul.f32 %v2285, %v2632
  %v2716 = vmul.f32 %v2290, %v2634
  %v2717 = vmul.f32 %v2295, %v2636
  %v2718 = vmul.f32 %v2300, %v2638
  %v2719 = vmul.f32 %v2305, %v2640
  %v2720 = vmul.f32 %v2310, %v2642
  %v2721 = vmul.f32 %v2315, %v2644
  %v2722 = vmul.f32 %v2320, %v2646
  %v2723 = vmul.f32 %v2325, %v2648
  %v2724 = vmul.f32 %v2330, %v2650
  %v2725 = vmul.f32 %v2335, %v2652
  %v2726 = vmul.f32 %v2340, %v2654
  %v2727 = vmul.f32 %v2345, %v2656
  %v2728 = vmul.f32 %v2350, %v2658
  %v2729 = vmul.f32 %v2355, %v2660
  %v2730 = vmul.f32 %v2360, %v2662
  %v2731 = vmul.f32 %v2365, %v2664
  %v2732 = vmul.f32 %v2370, %v2666
  %v2733 = vmul.f32 %v2375, %v2668
  %v2734 = vmul.f32 %v2380, %v2670
  %v2735 = vld [vmem:[%s10] sm:$0xff]
  %v2736 = vld [vmem:[%s10 + $0x8] sm:$0xff]
  %v2737 = vld [vmem:[%s10 + $0x10] sm:$0xff]
  %v2738 = vld [vmem:[%s10 + $0x18] sm:$0xff]
  %v2739 = vld [vmem:[%s10 + $0x20] sm:$0xff]
  %v2740 = vld [vmem:[%s10 + $0x28] sm:$0xff]
  %v2741 = vld [vmem:[%s10 + $0x30] sm:$0xff]
  %v2742 = vld [vmem:[%s10 + $0x38] sm:$0xff]
  %2743 = vmatprep.subr.mxu0 0.0
  %2744 = vmatpush1.msra.mxu0 %v2703
  %2745 = vmatprep.subr.mxu0 0.0
  %2746 = vmatpush1.msra.mxu0 %v2704
  %2747 = vmatprep.subr.mxu0 0.0
  %2748 = vmatpush1.msra.mxu0 %v2705
  %2749 = vmatprep.subr.mxu0 0.0
  %2750 = vmatpush1.msra.mxu0 %v2706
  %2751 = vmatprep.subr.mxu0 0.0
  %2752 = vmatpush1.msra.mxu0 %v2707
  %2753 = vmatprep.subr.mxu0 0.0
  %2754 = vmatpush1.msra.mxu0 %v2708
  %2755 = vmatprep.subr.mxu0 0.0
  %2756 = vmatpush1.msra.mxu0 %v2709
  %2757 = vmatprep.subr.mxu0 0.0
  %2758 = vmatpush1.msra.mxu0 %v2710
  %2759 = vmatprep.subr.mxu0 0.0
  %2760 = vmatpush1.msra.mxu0 %v2711
  %2761 = vmatprep.subr.mxu0 0.0
  %2762 = vmatpush1.msra.mxu0 %v2712
  %2763 = vmatprep.subr.mxu0 0.0
  %2764 = vmatpush1.msra.mxu0 %v2713
  %2765 = vmatprep.subr.mxu0 0.0
  %2766 = vmatpush1.msra.mxu0 %v2714
  %2767 = vmatprep.subr.mxu0 0.0
  %2768 = vmatpush1.msra.mxu0 %v2715
  %2769 = vmatprep.subr.mxu0 0.0
  %2770 = vmatpush1.msra.mxu0 %v2716
  %2771 = vmatprep.subr.mxu0 0.0
  %2772 = vmatpush1.msra.mxu0 %v2717
  %2773 = vmatprep.subr.mxu0 0.0
  %2774 = vmatpush1.msra.mxu0 %v2718
  %2775 = vmatprep.subr.mxu0 0.0
  %2776 = vmatpush1.msra.mxu0 %v2719
  %2777 = vmatprep.subr.mxu0 0.0
  %2778 = vmatpush1.msra.mxu0 %v2720
  %2779 = vmatprep.subr.mxu0 0.0
  %2780 = vmatpush1.msra.mxu0 %v2721
  %2781 = vmatprep.subr.mxu0 0.0
  %2782 = vmatpush1.msra.mxu0 %v2722
  %2783 = vmatprep.subr.mxu0 0.0
  %2784 = vmatpush1.msra.mxu0 %v2723
  %2785 = vmatprep.subr.mxu0 0.0
  %2786 = vmatpush1.msra.mxu0 %v2724
  %2787 = vmatprep.subr.mxu0 0.0
  %2788 = vmatpush1.msra.mxu0 %v2725
  %2789 = vmatprep.subr.mxu0 0.0
  %2790 = vmatpush1.msra.mxu0 %v2726
  %2791 = vmatprep.subr.mxu0 0.0
  %2792 = vmatpush1.msra.mxu0 %v2727
  %2793 = vmatprep.subr.mxu0 0.0
  %2794 = vmatpush1.msra.mxu0 %v2728
  %2795 = vmatprep.subr.mxu0 0.0
  %2796 = vmatpush1.msra.mxu0 %v2729
  %2797 = vmatprep.subr.mxu0 0.0
  %2798 = vmatpush1.msra.mxu0 %v2730
  %2799 = vmatprep.subr.mxu0 0.0
  %2800 = vmatpush1.msra.mxu0 %v2731
  %2801 = vmatprep.subr.mxu0 0.0
  %2802 = vmatpush1.msra.mxu0 %v2732
  %2803 = vmatprep.subr.mxu0 0.0
  %2804 = vmatpush1.msra.mxu0 %v2733
  %2805 = vmatprep.subr.mxu0 0.0
  %2806 = vmatpush1.msra.mxu0 %v2734
  %2807 = vmatprep.mubr.f32.mxu0 %v2736
  %2808 = vmatmul.mubr.f32.gmra.mrb[0].mxu0 %v2735
  %v2809 = vpop.f32.mrb[0].mxu0
  %v2810 = vadd.f32 0.0, %v2809
  %v2811 = vpop.f32.mrb[0].mxu0
  %2812 = vmatprep.mubr.f32.mxu0 %v2738
  %2813 = vmatmul.mubr.f32.gmra.mrb[0].mxu0 %v2737
  %v2814 = vpop.f32.mrb[0].mxu0
  %v2815 = vadd.f32 0.0, %v2814
  %v2816 = vpop.f32.mrb[0].mxu0
  %2817 = vmatprep.mubr.f32.mxu0 %v2740
  %2818 = vmatmul.mubr.f32.gmra.mrb[0].mxu0 %v2739
  %v2819 = vpop.f32.mrb[0].mxu0
  %v2820 = vadd.f32 0.0, %v2819
  %v2821 = vpop.f32.mrb[0].mxu0
  %2822 = vmatprep.mubr.f32.mxu0 %v2742
  %2823 = vmatmul.mubr.f32.gmra.mrb[0].mxu0 %v2741
  %v2824 = vpop.f32.mrb[0].mxu0
  %v2825 = vadd.f32 0.0, %v2824
  %v2826 = vpop.f32.mrb[0].mxu0
  %2827 = vdwg.mxu0
  %v2828 = vld [vmem:[%s4] sm:$0xff]
  %v2829 = vld [vmem:[%s11] sm:$0xff]
  %vm2830 = vcmask 15360
  %v2832 = vsel %vm2830, %v2829, 0
  %vm2834 = vcmask 1041408
  %v2836 = vsel %vm2834, %v696, 0
  %2838 = vmatprep.subr.mxu0 0.0
  %2839 = vmatpush1.msra.mxu0 %v2836
  %2840 = vmatprep.subr.mxu0 0.0
  %2841 = vmatpush1.msra.mxu0 0.0
  %2842 = vmatprep.subr.mxu0 0.0
  %2843 = vmatpush1.msra.mxu0 0.0
  %2844 = vmatprep.subr.mxu0 0.0
  %2845 = vmatpush1.msra.mxu0 0.0
  %2846 = vmatprep.subr.mxu0 0.0
  %2847 = vmatpush1.msra.mxu0 0.0
  %2848 = vmatprep.subr.mxu0 0.0
  %2849 = vmatpush1.msra.mxu0 0.0
  %2850 = vmatprep.subr.mxu0 0.0
  %2851 = vmatpush1.msra.mxu0 0.0
  %2852 = vmatprep.subr.mxu0 0.0
  %2853 = vmatpush1.msra.mxu0 0.0
  %2854 = vmatprep.subr.mxu0 0.0
  %2855 = vmatpush1.msra.mxu0 0.0
  %2856 = vmatprep.subr.mxu0 0.0
  %2857 = vmatpush1.msra.mxu0 0.0
  %2858 = vmatprep.subr.mxu0 0.0
  %2859 = vmatpush1.msra.mxu0 0.0
  %2860 = vmatprep.subr.mxu0 0.0
  %2861 = vmatpush1.msra.mxu0 0.0
  %2862 = vmatprep.subr.mxu0 0.0
  %2863 = vmatpush1.msra.mxu0 0.0
  %2864 = vmatprep.subr.mxu0 0.0
  %2865 = vmatpush1.msra.mxu0 0.0
  %2866 = vmatprep.subr.mxu0 0.0
  %2867 = vmatpush1.msra.mxu0 0.0
  %2868 = vmatprep.subr.mxu0 0.0
  %2869 = vmatpush1.msra.mxu0 0.0
  %2870 = vmatprep.subr.mxu0 0.0
  %2871 = vmatpush1.msra.mxu0 0.0
  %2872 = vmatprep.subr.mxu0 0.0
  %2873 = vmatpush1.msra.mxu0 0.0
  %2874 = vmatprep.subr.mxu0 0.0
  %2875 = vmatpush1.msra.mxu0 0.0
  %2876 = vmatprep.subr.mxu0 0.0
  %2877 = vmatpush1.msra.mxu0 0.0
  %2878 = vmatprep.subr.mxu0 0.0
  %2879 = vmatpush1.msra.mxu0 0.0
  %2880 = vmatprep.subr.mxu0 0.0
  %2881 = vmatpush1.msra.mxu0 0.0
  %2882 = vmatprep.subr.mxu0 0.0
  %2883 = vmatpush1.msra.mxu0 0.0
  %2884 = vmatprep.subr.mxu0 0.0
  %2885 = vmatpush1.msra.mxu0 0.0
  %2886 = vmatprep.subr.mxu0 0.0
  %2887 = vmatpush1.msra.mxu0 0.0
  %2888 = vmatprep.subr.mxu0 0.0
  %2889 = vmatpush1.msra.mxu0 0.0
  %2890 = vmatprep.subr.mxu0 0.0
  %2891 = vmatpush1.msra.mxu0 0.0
  %2892 = vmatprep.subr.mxu0 0.0
  %2893 = vmatpush1.msra.mxu0 0.0
  %2894 = vmatprep.subr.mxu0 0.0
  %2895 = vmatpush1.msra.mxu0 0.0
  %2896 = vmatprep.subr.mxu0 0.0
  %2897 = vmatpush1.msra.mxu0 0.0
  %2898 = vmatprep.subr.mxu0 0.0
  %2899 = vmatpush1.msra.mxu0 0.0
  %2900 = vmatprep.subr.mxu0 0.0
  %2901 = vmatpush1.msra.mxu0 0.0
  %2902 = vmatprep.mubr.f32.mxu0 0.0
  %2903 = vmatmul.mubr.f32.gmra.mrb[0].mxu0 %v2832
  %v2904 = vpop.f32.mrb[0].mxu0
  %v2905 = vadd.f32 0.0, %v2904
  %v2906 = vpop.f32.mrb[0].mxu0
  %2907 = vdwg.mxu0
  %v2908 = vld [vmem:[%s5 + $0x220] sm:$0xff]
  %v2909 = vld [vmem:[%s5 + $0x228] sm:$0xff]
  %v2910 = vld [vmem:[%s5 + $0x230] sm:$0xff]
  %v2911 = vld [vmem:[%s5 + $0x238] sm:$0xff]
  %v2912 = vld [vmem:[%s5 + $0x240] sm:$0xff]
  %v2913 = vld [vmem:[%s5 + $0x248] sm:$0xff]
  %v2914 = vld [vmem:[%s5 + $0x250] sm:$0xff]
  %v2915 = vld [vmem:[%s5 + $0x258] sm:$0xff]
  %v2917 = vsel %vm534, %v888, 0
  %2919 = vmatprep.subr.mxu0 0.0
  %2920 = vmatpush1.msra.mxu0 %v2912
  %2921 = vmatprep.subr.mxu0 0.0
  %2922 = vmatpush1.msra.mxu0 %v2913
  %2923 = vmatprep.subr.mxu0 0.0
  %2924 = vmatpush1.msra.mxu0 %v2914
  %2925 = vmatprep.subr.mxu0 0.0
  %2926 = vmatpush1.msra.mxu0 %v2915
  %2927 = vmatprep.subr.mxu0 0.0
  %2928 = vmatpush1.msra.mxu0 0.0
  %2929 = vmatprep.subr.mxu0 0.0
  %2930 = vmatpush1.msra.mxu0 0.0
  %2931 = vmatprep.subr.mxu0 0.0
  %2932 = vmatpush1.msra.mxu0 0.0
  %2933 = vmatprep.subr.mxu0 0.0
  %2934 = vmatpush1.msra.mxu0 0.0
  %2935 = vmatprep.subr.mxu0 0.0
  %2936 = vmatpush1.msra.mxu0 0.0
  %2937 = vmatprep.subr.mxu0 0.0
  %2938 = vmatpush1.msra.mxu0 0.0
  %2939 = vmatprep.subr.mxu0 0.0
  %2940 = vmatpush1.msra.mxu0 0.0
  %2941 = vmatprep.subr.mxu0 0.0
  %2942 = vmatpush1.msra.mxu0 0.0
  %2943 = vmatprep.subr.mxu0 0.0
  %2944 = vmatpush1.msra.mxu0 0.0
  %2945 = vmatprep.subr.mxu0 0.0
  %2946 = vmatpush1.msra.mxu0 0.0
  %2947 = vmatprep.subr.mxu0 0.0
  %2948 = vmatpush1.msra.mxu0 0.0
  %2949 = vmatprep.subr.mxu0 0.0
  %2950 = vmatpush1.msra.mxu0 0.0
  %2951 = vmatprep.subr.mxu0 0.0
  %2952 = vmatpush1.msra.mxu0 0.0
  %2953 = vmatprep.subr.mxu0 0.0
  %2954 = vmatpush1.msra.mxu0 0.0
  %2955 = vmatprep.subr.mxu0 0.0
  %2956 = vmatpush1.msra.mxu0 0.0
  %2957 = vmatprep.subr.mxu0 0.0
  %2958 = vmatpush1.msra.mxu0 0.0
  %2959 = vmatprep.subr.mxu0 0.0
  %2960 = vmatpush1.msra.mxu0 0.0
  %2961 = vmatprep.subr.mxu0 0.0
  %2962 = vmatpush1.msra.mxu0 0.0
  %2963 = vmatprep.subr.mxu0 0.0
  %2964 = vmatpush1.msra.mxu0 0.0
  %2965 = vmatprep.subr.mxu0 0.0
  %2966 = vmatpush1.msra.mxu0 0.0
  %2967 = vmatprep.subr.mxu0 0.0
  %2968 = vmatpush1.msra.mxu0 0.0
  %2969 = vmatprep.subr.mxu0 0.0
  %2970 = vmatpush1.msra.mxu0 0.0
  %2971 = vmatprep.subr.mxu0 0.0
  %2972 = vmatpush1.msra.mxu0 0.0
  %2973 = vmatprep.subr.mxu0 0.0
  %2974 = vmatpush1.msra.mxu0 0.0
  %2975 = vmatprep.subr.mxu0 0.0
  %2976 = vmatpush1.msra.mxu0 0.0
  %2977 = vmatprep.subr.mxu0 0.0
  %2978 = vmatpush1.msra.mxu0 0.0
  %2979 = vmatprep.subr.mxu0 0.0
  %2980 = vmatpush1.msra.mxu0 0.0
  %2981 = vmatprep.subr.mxu0 0.0
  %2982 = vmatpush1.msra.mxu0 0.0
  %2983 = vmatprep.mubr.f32.mxu0 0.0
  %2984 = vmatmul.mubr.f32.gmra.mrb[0].mxu0 %v2917
  %v2985 = vpop.f32.mrb[0].mxu0
  %v2986 = vadd.f32 0.0, %v2985
  %v2987 = vpop.f32.mrb[0].mxu0
  %2988 = vdwg.mxu0
  %v2990 = vsel %vm534, %v2905, 0
  %2992 = vmatprep.subr.mxu0 0.0
  %2993 = vmatpush1.msra.mxu0 %v2908
  %2994 = vmatprep.subr.mxu0 0.0
  %2995 = vmatpush1.msra.mxu0 %v2909
  %2996 = vmatprep.subr.mxu0 0.0
  %2997 = vmatpush1.msra.mxu0 %v2910
  %2998 = vmatprep.subr.mxu0 0.0
  %2999 = vmatpush1.msra.mxu0 %v2911
  %3000 = vmatprep.subr.mxu0 0.0
  %3001 = vmatpush1.msra.mxu0 0.0
  %3002 = vmatprep.subr.mxu0 0.0
  %3003 = vmatpush1.msra.mxu0 0.0
  %3004 = vmatprep.subr.mxu0 0.0
  %3005 = vmatpush1.msra.mxu0 0.0
  %3006 = vmatprep.subr.mxu0 0.0
  %3007 = vmatpush1.msra.mxu0 0.0
  %3008 = vmatprep.subr.mxu0 0.0
  %3009 = vmatpush1.msra.mxu0 0.0
  %3010 = vmatprep.subr.mxu0 0.0
  %3011 = vmatpush1.msra.mxu0 0.0
  %3012 = vmatprep.subr.mxu0 0.0
  %3013 = vmatpush1.msra.mxu0 0.0
  %3014 = vmatprep.subr.mxu0 0.0
  %3015 = vmatpush1.msra.mxu0 0.0
  %3016 = vmatprep.subr.mxu0 0.0
  %3017 = vmatpush1.msra.mxu0 0.0
  %3018 = vmatprep.subr.mxu0 0.0
  %3019 = vmatpush1.msra.mxu0 0.0
  %3020 = vmatprep.subr.mxu0 0.0
  %3021 = vmatpush1.msra.mxu0 0.0
  %3022 = vmatprep.subr.mxu0 0.0
  %3023 = vmatpush1.msra.mxu0 0.0
  %3024 = vmatprep.subr.mxu0 0.0
  %3025 = vmatpush1.msra.mxu0 0.0
  %3026 = vmatprep.subr.mxu0 0.0
  %3027 = vmatpush1.msra.mxu0 0.0
  %3028 = vmatprep.subr.mxu0 0.0
  %3029 = vmatpush1.msra.mxu0 0.0
  %3030 = vmatprep.subr.mxu0 0.0
  %3031 = vmatpush1.msra.mxu0 0.0
  %3032 = vmatprep.subr.mxu0 0.0
  %3033 = vmatpush1.msra.mxu0 0.0
  %3034 = vmatprep.subr.mxu0 0.0
  %3035 = vmatpush1.msra.mxu0 0.0
  %3036 = vmatprep.subr.mxu0 0.0
  %3037 = vmatpush1.msra.mxu0 0.0
  %3038 = vmatprep.subr.mxu0 0.0
  %3039 = vmatpush1.msra.mxu0 0.0
  %3040 = vmatprep.subr.mxu0 0.0
  %3041 = vmatpush1.msra.mxu0 0.0
  %3042 = vmatprep.subr.mxu0 0.0
  %3043 = vmatpush1.msra.mxu0 0.0
  %3044 = vmatprep.subr.mxu0 0.0
  %3045 = vmatpush1.msra.mxu0 0.0
  %3046 = vmatprep.subr.mxu0 0.0
  %3047 = vmatpush1.msra.mxu0 0.0
  %3048 = vmatprep.subr.mxu0 0.0
  %3049 = vmatpush1.msra.mxu0 0.0
  %3050 = vmatprep.subr.mxu0 0.0
  %3051 = vmatpush1.msra.mxu0 0.0
  %3052 = vmatprep.subr.mxu0 0.0
  %3053 = vmatpush1.msra.mxu0 0.0
  %3054 = vmatprep.subr.mxu0 0.0
  %3055 = vmatpush1.msra.mxu0 0.0
  %3056 = vmatprep.mubr.f32.mxu0 0.0
  %3057 = vmatmul.mubr.f32.gmra.mrb[0].mxu0 %v2990
  %v3058 = vpop.f32.mrb[0].mxu0
  %v3059 = vadd.f32 %v2986, %v3058
  %v3060 = vpop.f32.mrb[0].mxu0
  %3061 = vdwg.mxu0
  %v3062 = vlaneseq
  %v3063 = vshrl.u32 %v3062, 7
  %v3064 = vsub.s32 6, %v3063
  %v3065 = vrot.slane %v41, %v3064
  %v3066 = vadd.f32 %v3059, %v3065
  %vm3067 = vcmp.gt.f32.partialorder %v3066, 0.0
  %v3068 = vmul.f32 %v3066, 0.01
  %v3069 = vsel %vm3067, %v3066, %v3068
  %v3070 = vlaneseq
  %v3071 = vshrl.u32 %v3070, 7
  %v3072 = vsub.s32 1, %v3071
  %v3073 = vrot.slane %v42, %v3072
  %3078 = vrot.lane.b32.xlu0 %v2054, 126
  %v3079 = vpop.permute.xlu0 %3078
  %3080 = vrot.lane.b32.xlu0 %v2055, 126
  %v3081 = vpop.permute.xlu0 %3080
  %3082 = vrot.lane.b32.xlu0 %v2056, 126
  %v3083 = vpop.permute.xlu0 %3082
  %3084 = vrot.lane.b32.xlu0 %v2057, 126
  %v3085 = vpop.permute.xlu0 %3084
  %v3091 = vsel %vm534, %v3069, 0
  %3093 = vmatprep.subr.mxu0 0.0
  %3094 = vmatpush1.msra.mxu0 %v3079
  %3095 = vmatprep.subr.mxu0 0.0
  %3096 = vmatpush1.msra.mxu0 %v3081
  %3097 = vmatprep.subr.mxu0 0.0
  %3098 = vmatpush1.msra.mxu0 %v3083
  %3099 = vmatprep.subr.mxu0 0.0
  %3100 = vmatpush1.msra.mxu0 %v3085
  %3101 = vmatprep.subr.mxu0 0.0
  %3102 = vmatpush1.msra.mxu0 0.0
  %3103 = vmatprep.subr.mxu0 0.0
  %3104 = vmatpush1.msra.mxu0 0.0
  %3105 = vmatprep.subr.mxu0 0.0
  %3106 = vmatpush1.msra.mxu0 0.0
  %3107 = vmatprep.subr.mxu0 0.0
  %3108 = vmatpush1.msra.mxu0 0.0
  %3109 = vmatprep.subr.mxu0 0.0
  %3110 = vmatpush1.msra.mxu0 0.0
  %3111 = vmatprep.subr.mxu0 0.0
  %3112 = vmatpush1.msra.mxu0 0.0
  %3113 = vmatprep.subr.mxu0 0.0
  %3114 = vmatpush1.msra.mxu0 0.0
  %3115 = vmatprep.subr.mxu0 0.0
  %3116 = vmatpush1.msra.mxu0 0.0
  %3117 = vmatprep.subr.mxu0 0.0
  %3118 = vmatpush1.msra.mxu0 0.0
  %3119 = vmatprep.subr.mxu0 0.0
  %3120 = vmatpush1.msra.mxu0 0.0
  %3121 = vmatprep.subr.mxu0 0.0
  %3122 = vmatpush1.msra.mxu0 0.0
  %3123 = vmatprep.subr.mxu0 0.0
  %3124 = vmatpush1.msra.mxu0 0.0
  %3125 = vmatprep.subr.mxu0 0.0
  %3126 = vmatpush1.msra.mxu0 0.0
  %3127 = vmatprep.subr.mxu0 0.0
  %3128 = vmatpush1.msra.mxu0 0.0
  %3129 = vmatprep.subr.mxu0 0.0
  %3130 = vmatpush1.msra.mxu0 0.0
  %3131 = vmatprep.subr.mxu0 0.0
  %3132 = vmatpush1.msra.mxu0 0.0
  %3133 = vmatprep.subr.mxu0 0.0
  %3134 = vmatpush1.msra.mxu0 0.0
  %3135 = vmatprep.subr.mxu0 0.0
  %3136 = vmatpush1.msra.mxu0 0.0
  %3137 = vmatprep.subr.mxu0 0.0
  %3138 = vmatpush1.msra.mxu0 0.0
  %3139 = vmatprep.subr.mxu0 0.0
  %3140 = vmatpush1.msra.mxu0 0.0
  %3141 = vmatprep.subr.mxu0 0.0
  %3142 = vmatpush1.msra.mxu0 0.0
  %3143 = vmatprep.subr.mxu0 0.0
  %3144 = vmatpush1.msra.mxu0 0.0
  %3145 = vmatprep.subr.mxu0 0.0
  %3146 = vmatpush1.msra.mxu0 0.0
  %3147 = vmatprep.subr.mxu0 0.0
  %3148 = vmatpush1.msra.mxu0 0.0
  %3149 = vmatprep.subr.mxu0 0.0
  %3150 = vmatpush1.msra.mxu0 0.0
  %3151 = vmatprep.subr.mxu0 0.0
  %3152 = vmatpush1.msra.mxu0 0.0
  %3153 = vmatprep.subr.mxu0 0.0
  %3154 = vmatpush1.msra.mxu0 0.0
  %3155 = vmatprep.subr.mxu0 0.0
  %3156 = vmatpush1.msra.mxu0 0.0
  %3157 = vmatprep.mubr.f32.mxu0 0.0
  %3158 = vmatmul.mubr.f32.gmra.mrb[0].mxu0 %v3091
  %v3159 = vpop.f32.mrb[0].mxu0
  %v3160 = vadd.f32 %v3073, %v3159
  %v3161 = vpop.f32.mrb[0].mxu0
  %3162 = vdwg.mxu0
  %v3164 = vsel %vm534, %v2828, 0
  %3166 = vmatprep.subr.mxu0 0.0
  %3167 = vmatpush1.msra.mxu0 %v2810
  %3168 = vmatprep.subr.mxu0 0.0
  %3169 = vmatpush1.msra.mxu0 %v2815
  %3170 = vmatprep.subr.mxu0 0.0
  %3171 = vmatpush1.msra.mxu0 %v2820
  %3172 = vmatprep.subr.mxu0 0.0
  %3173 = vmatpush1.msra.mxu0 %v2825
  %3174 = vmatprep.subr.mxu0 0.0
  %3175 = vmatpush1.msra.mxu0 0.0
  %3176 = vmatprep.subr.mxu0 0.0
  %3177 = vmatpush1.msra.mxu0 0.0
  %3178 = vmatprep.subr.mxu0 0.0
  %3179 = vmatpush1.msra.mxu0 0.0
  %3180 = vmatprep.subr.mxu0 0.0
  %3181 = vmatpush1.msra.mxu0 0.0
  %3182 = vmatprep.subr.mxu0 0.0
  %3183 = vmatpush1.msra.mxu0 0.0
  %3184 = vmatprep.subr.mxu0 0.0
  %3185 = vmatpush1.msra.mxu0 0.0
  %3186 = vmatprep.subr.mxu0 0.0
  %3187 = vmatpush1.msra.mxu0 0.0
  %3188 = vmatprep.subr.mxu0 0.0
  %3189 = vmatpush1.msra.mxu0 0.0
  %3190 = vmatprep.subr.mxu0 0.0
  %3191 = vmatpush1.msra.mxu0 0.0
  %3192 = vmatprep.subr.mxu0 0.0
  %3193 = vmatpush1.msra.mxu0 0.0
  %3194 = vmatprep.subr.mxu0 0.0
  %3195 = vmatpush1.msra.mxu0 0.0
  %3196 = vmatprep.subr.mxu0 0.0
  %3197 = vmatpush1.msra.mxu0 0.0
  %3198 = vmatprep.subr.mxu0 0.0
  %3199 = vmatpush1.msra.mxu0 0.0
  %3200 = vmatprep.subr.mxu0 0.0
  %3201 = vmatpush1.msra.mxu0 0.0
  %3202 = vmatprep.subr.mxu0 0.0
  %3203 = vmatpush1.msra.mxu0 0.0
  %3204 = vmatprep.subr.mxu0 0.0
  %3205 = vmatpush1.msra.mxu0 0.0
  %3206 = vmatprep.subr.mxu0 0.0
  %3207 = vmatpush1.msra.mxu0 0.0
  %3208 = vmatprep.subr.mxu0 0.0
  %3209 = vmatpush1.msra.mxu0 0.0
  %3210 = vmatprep.subr.mxu0 0.0
  %3211 = vmatpush1.msra.mxu0 0.0
  %3212 = vmatprep.subr.mxu0 0.0
  %3213 = vmatpush1.msra.mxu0 0.0
  %3214 = vmatprep.subr.mxu0 0.0
  %3215 = vmatpush1.msra.mxu0 0.0
  %3216 = vmatprep.subr.mxu0 0.0
  %3217 = vmatpush1.msra.mxu0 0.0
  %3218 = vmatprep.subr.mxu0 0.0
  %3219 = vmatpush1.msra.mxu0 0.0
  %3220 = vmatprep.subr.mxu0 0.0
  %3221 = vmatpush1.msra.mxu0 0.0
  %3222 = vmatprep.subr.mxu0 0.0
  %3223 = vmatpush1.msra.mxu0 0.0
  %3224 = vmatprep.subr.mxu0 0.0
  %3225 = vmatpush1.msra.mxu0 0.0
  %3226 = vmatprep.subr.mxu0 0.0
  %3227 = vmatpush1.msra.mxu0 0.0
  %3228 = vmatprep.subr.mxu0 0.0
  %3229 = vmatpush1.msra.mxu0 0.0
  %3230 = vmatprep.mubr.f32.mxu0 0.0
  %3231 = vmatmul.mubr.f32.gmra.mrb[0].mxu0 %v3164
  %v3232 = vpop.f32.mrb[0].mxu0
  %v3233 = vadd.f32 %v3160, %v3232
  %v3234 = vpop.f32.mrb[0].mxu0
  %3235 = vdwg.mxu0
  %vm3236 = vcmask 7168
  %3237 = vst.msk [vmem:[%s12] sm:$0xff] %vm3236, %v3233
  // Predicated region
  $region50: #{affinity_head_forward.1} parent=0 // pred_check
    _
  $region51: #{affinity_head_forward.1} parent=0 // pred_check_branch
    %3239 = sbr.rel (0) target = $region53
  $region52: #{affinity_head_forward.1} parent=0 // pred_region
    _
  $region53: #{affinity_head_forward.1} parent=0 // pred_fallthru
    _
  // Predicated region
  $region54: #{affinity_head_forward.1} parent=0 // pred_check
    _
  $region55: #{affinity_head_forward.1} parent=0 // pred_check_branch
    %3241 = sbr.rel (0) target = $region57
  $region56: #{affinity_head_forward.1} parent=0 // pred_region
    _
  $region57: #{affinity_head_forward.1} parent=0 // pred_fallthru
    _

</llo_original>
